<compile_context>
chip_gen: v7x
topology: tpu7x:2x2x1
jax: 0.10.0
libtpu: 0.0.40
codegen_flags: <defaults>
</compile_context>

<pallas_src>
import math

import jax
import jax.numpy as jnp
from jax import lax
from jax.experimental import pallas as pl
from jax.experimental.pallas import tpu as pltpu


def _grid_steps_for_device(batch):
    """Number of grid steps: `batch` on 2-TensorCore chips (megacore), else 1."""
    try:
        kind = jax.devices()[0].device_kind.lower()
    except Exception:
        return 1
    if any(tag in kind for tag in ("v7", "v5p", "v4")):
        return batch
    return 1


# ------------------------- fused Pallas kernel -------------------------

def multi_headed_attention(query, key, value, params, h):
    """Full MultiHeadedAttention.forward. query/key/value: (B, S, D) float32."""
    B, S, D = query.shape
    assert D % h == 0
    d_k = D // h
    scale = 1.0 / math.sqrt(d_k)
    f32 = jnp.float32

    # ---- one-time wrapper-side operand packing (tiny weights; free) ----
    # Fold 1/sqrt(d_k) into Wq / bq so no per-step scale multiply is needed.
    wq = jnp.asarray(params["wq"], f32) * scale
    bq = jnp.asarray(params["bq"], f32) * scale
    wk = jnp.asarray(params["wk"], f32)
    bk = jnp.asarray(params["bk"], f32)
    wv = jnp.asarray(params["wv"], f32)
    bv = jnp.asarray(params["bv"], f32)
    wo = jnp.asarray(params["wo"], f32)
    bo = jnp.asarray(params["bo"], f32)

    # Per-head weight slabs (torch layout W is (out_features, in_features)):
    #   w_qkv[j, i] = rows [i*d_k, (i+1)*d_k) of W_{q,k,v}         -> (d_k, D)
    #   w_out[i]    = columns [i*d_k, (i+1)*d_k) of W_o            -> (D, d_k)
    w_qkv = jnp.stack([wq.reshape(h, d_k, D),
                       wk.reshape(h, d_k, D),
                       wv.reshape(h, d_k, D)])            # (3, h, d_k, D)
    b_qkv = jnp.stack([bq.reshape(h, 1, d_k),
                       bk.reshape(h, 1, d_k),
                       bv.reshape(h, 1, d_k)])            # (3, h, 1, d_k)
    w_out = wo.reshape(D, h, d_k).transpose(1, 0, 2)      # (h, D, d_k)
    b_out = bo.reshape(1, D)

    # Flatten batch into sublanes (row-major metadata reshape, free).
    xq = query.reshape(B * S, D)
    xk = key.reshape(B * S, D)
    xv = value.reshape(B * S, D)

    n_steps = _grid_steps_for_device(B)
    bb = B // n_steps          # batches handled per grid step

    def kernel(xq_ref, xk_ref, xv_ref, wqkv_ref, bqkv_ref, wo_ref, bo_ref, out_ref):
        xq_t = xq_ref[...]     # (bb*S, D)
        xk_t = xk_ref[...]
        xv_t = xv_ref[...]

        # torch .tril(): zero (NOT -inf) the strictly-upper scores before softmax.
        row = lax.broadcasted_iota(jnp.int32, (S, S), 0)
        col = lax.broadcasted_iota(jnp.int32, (S, S), 1)
        keep = row >= col

        def proj(x, j, i):
            # torch nn.Linear restricted to head i: x @ W[j,i].T + b[j,i]
            # (contract on the weight's in_features axis -> no transpose anywhere).
            y = lax.dot_general(
                x, wqkv_ref[j, i],
                dimension_numbers=(((1,), (1,)), ((), ())),
                preferred_element_type=jnp.float32,
            )
            return y + bqkv_ref[j, i]

        # Head projections over the whole flattened batch block: one matmul per
        # head per projection (batch collapse halves the matmul count vs per-batch).
        q_h = [proj(xq_t, 0, i) for i in range(h)]   # each (bb*S, d_k)
        k_h = [proj(xk_t, 1, i) for i in range(h)]
        v_h = [proj(xv_t, 2, i) for i in range(h)]

        bias_o = bo_ref[...]                          # (1, D)

        for b in range(bb):                           # static; sublane-aligned slices
            lo, hi = b * S, (b + 1) * S
            acc = jnp.zeros((S, D), jnp.float32)
            for i in range(h):
                qi = q_h[i][lo:hi]                    # (S, d_k)
                ki = k_h[i][lo:hi]
                vi = v_h[i][lo:hi]
                # scores = qi @ ki^T (scale already folded into Wq/bq).
                s = lax.dot_general(
                    qi, ki,
                    dimension_numbers=(((1,), (1,)), ((), ())),
                    preferred_element_type=jnp.float32,
                )
                s = jnp.where(keep, s, 0.0)
                m = jnp.max(s, axis=-1, keepdims=True)
                e = jnp.exp(s - m)
                # TODO(synk): approx=True (EUP vrcp) is a free-slot win but loosens
                # numerics beyond the 1e-4 parity target; kept exact.
                p = e * pl.reciprocal(jnp.sum(e, axis=-1, keepdims=True), approx=False)
                ctx = jnp.dot(p, vi, preferred_element_type=jnp.float32)  # (S, d_k)
                # Head-i slice of the output projection, accumulated directly
                # (no lane-dimension concat of context heads).
                acc = acc + lax.dot_general(
                    ctx, wo_ref[i],
                    dimension_numbers=(((1,), (1,)), ((), ())),
                    preferred_element_type=jnp.float32,
                )
            out_ref[lo:hi, :] = acc + bias_o

    x_spec = pl.BlockSpec((bb * S, D), lambda b: (b, 0))
    # Grid-invariant operands: constant index_map -> fetched once, not re-DMA'd
    # between consecutive steps on the multi-step (megacore) path.
    wqkv_spec = pl.BlockSpec((3, h, d_k, D), lambda b: (0, 0, 0, 0))
    bqkv_spec = pl.BlockSpec((3, h, 1, d_k), lambda b: (0, 0, 0, 0))
    wo_spec = pl.BlockSpec((h, D, d_k), lambda b: (0, 0, 0))
    bo_spec = pl.BlockSpec((1, D), lambda b: (0, 0))

    out_flat = pl.pallas_call(
        kernel,
        out_shape=jax.ShapeDtypeStruct((B * S, D), jnp.float32),
        grid=(n_steps,),
        in_specs=[x_spec, x_spec, x_spec, wqkv_spec, bqkv_spec, wo_spec, bo_spec],
        out_specs=pl.BlockSpec((bb * S, D), lambda b: (b, 0)),
        compiler_params=pltpu.CompilerParams(
            dimension_semantics=("parallel",),
        ),
    )(xq, xk, xv, w_qkv, b_qkv, w_out, b_out)

    return out_flat.reshape(B, S, D)


# ------------------------- reference (pure JAX) -------------------------

def reference_mha(query, key, value, params, h):
    B, S, D = query.shape
    d_k = D // h

    def lin(x, w, b):
        return x @ w.T + b

    def split(x, w, b):
        return lin(x, w, b).reshape(B, S, h, d_k).transpose(0, 2, 1, 3)

    q = split(query, params["wq"], params["bq"])
    k = split(key, params["wk"], params["bk"])
    v = split(value, params["wv"], params["bv"])

    scores = jnp.einsum("bhqd,bhkd->bhqk", q, k) / math.sqrt(d_k)
    mask = jnp.tril(jnp.ones((S, S), dtype=bool))
    scores = jnp.where(mask, scores, 0.0)
    p = jax.nn.softmax(scores, axis=-1)
    ctx = jnp.einsum("bhqk,bhkd->bhqd", p, v)
    x = ctx.transpose(0, 2, 1, 3).reshape(B, S, D)
    return lin(x, params["wo"], params["bo"]), p


# ------------------------- main -------------------------

def init_params(key, d_model):
    # Deterministic init (torch nn.Linear-style uniform bound).
    bound = 1.0 / math.sqrt(d_model)
    keys = jax.random.split(key, 8)
    names = ["wq", "bq", "wk", "bk", "wv", "bv", "wo", "bo"]
    params = {}
    for i, name in enumerate(names):
        shape = (d_model, d_model) if name.startswith("w") else (d_model,)
        params[name] = jax.random.uniform(
            keys[i], shape, jnp.float32, minval=-bound, maxval=bound
        )
    return params


if __name__ == "__main__":
    B, S, D, H = 2, 8, 32, 4  # batch, seq, d_model, heads (d_k = 8)

    root = jax.random.PRNGKey(0)
    kq, kk, kv, kp = jax.random.split(root, 4)
    query = jax.random.normal(kq, (B, S, D), jnp.float32)
    key = jax.random.normal(kk, (B, S, D), jnp.float32)
    value = jax.random.normal(kv, (B, S, D), jnp.float32)
    params = init_params(kp, D)

    out = multi_headed_attention(query, key, value, params, H)
    out = jax.block_until_ready(out)

    ref_out, _ = reference_mha(query, key, value, params, H)
    assert out.shape == (B, S, D)
    assert jnp.allclose(out, ref_out, atol=1e-4, rtol=1e-4)

    print("KERNEL_OK")
</pallas_src>

<mosaic_0001>
module attributes {stable_mosaic.version = 11 : i64} {
  func.func @kernel(%arg0: i32, %arg1: memref<16x32xf32, #tpu.memory_space<vmem>>, %arg2: memref<16x32xf32, #tpu.memory_space<vmem>>, %arg3: memref<16x32xf32, #tpu.memory_space<vmem>>, %arg4: memref<3x4x8x32xf32, #tpu.memory_space<vmem>>, %arg5: memref<3x4x1x8xf32, #tpu.memory_space<vmem>>, %arg6: memref<4x32x8xf32, #tpu.memory_space<vmem>>, %arg7: memref<1x32xf32, #tpu.memory_space<vmem>>, %arg8: memref<16x32xf32, #tpu.memory_space<vmem>>) attributes {dimension_semantics = [#tpu.dimension_semantics<parallel>], iteration_bounds = array<i64: 1>, scalar_prefetch = 0 : i64, scratch_operands = 0 : i64, tpu.core_type = #tpu.core_type<tc>, window_params = [{transform_indices = @transform_0, window_bounds = array<i64: 16, 32>}, {transform_indices = @transform_1, window_bounds = array<i64: 16, 32>}, {transform_indices = @transform_2, window_bounds = array<i64: 16, 32>}, {pipeline_mode = #tpu.pipeline_mode<synchronous>, transform_indices = @transform_3, window_bounds = array<i64: 3, 4, 8, 32>}, {pipeline_mode = #tpu.pipeline_mode<synchronous>, transform_indices = @transform_4, window_bounds = array<i64: 3, 4, 1, 8>}, {pipeline_mode = #tpu.pipeline_mode<synchronous>, transform_indices = @transform_5, window_bounds = array<i64: 4, 32, 8>}, {pipeline_mode = #tpu.pipeline_mode<synchronous>, transform_indices = @transform_6, window_bounds = array<i64: 1, 32>}, {transform_indices = @transform_7, window_bounds = array<i64: 16, 32>}]} {
    %c0 = arith.constant 0 : index
    %c0_0 = arith.constant 0 : index
    %0 = vector.load %arg1[%c0, %c0_0] : memref<16x32xf32, #tpu.memory_space<vmem>>, vector<16x32xf32>
    %c0_1 = arith.constant 0 : index
    %c0_2 = arith.constant 0 : index
    %1 = vector.load %arg2[%c0_1, %c0_2] : memref<16x32xf32, #tpu.memory_space<vmem>>, vector<16x32xf32>
    %c0_3 = arith.constant 0 : index
    %c0_4 = arith.constant 0 : index
    %2 = vector.load %arg3[%c0_3, %c0_4] : memref<16x32xf32, #tpu.memory_space<vmem>>, vector<16x32xf32>
    %3 = tpu.iota {dimensions = array<i32: 0>} : vector<8x8xi32>
    %4 = tpu.iota {dimensions = array<i32: 1>} : vector<8x8xi32>
    %5 = arith.cmpi sge, %3, %4 : vector<8x8xi32>
    %c0_5 = arith.constant 0 : index
    %c0_6 = arith.constant 0 : index
    %c0_7 = arith.constant 0 : index
    %c0_8 = arith.constant 0 : index
    %6 = vector.load %arg4[%c0_5, %c0_6, %c0_7, %c0_8] : memref<3x4x8x32xf32, #tpu.memory_space<vmem>>, vector<1x1x8x32xf32>
    %7 = vector.shape_cast %6 : vector<1x1x8x32xf32> to vector<8x32xf32>
    %cst = arith.constant dense<0.000000e+00> : vector<16x8xf32>
    %8 = tpu.matmul %0, %7, %cst {dimension_numbers = #tpu.dot_dimension_numbers<[1], [1], [0], [0], [0, 0, 1, 0], [], []>} : vector<16x32xf32>, vector<8x32xf32>, vector<16x8xf32> -> vector<16x8xf32>
    %c0_9 = arith.constant 0 : index
    %c0_10 = arith.constant 0 : index
    %c0_11 = arith.constant 0 : index
    %c0_12 = arith.constant 0 : index
    %9 = vector.load %arg5[%c0_9, %c0_10, %c0_11, %c0_12] : memref<3x4x1x8xf32, #tpu.memory_space<vmem>>, vector<1x1x1x8xf32>
    %10 = vector.shape_cast %9 : vector<1x1x1x8xf32> to vector<1x8xf32>
    %11 = vector.broadcast %10 : vector<1x8xf32> to vector<16x8xf32>
    %12 = arith.addf %8, %11 : vector<16x8xf32>
    %c0_13 = arith.constant 0 : index
    %c1 = arith.constant 1 : index
    %c0_14 = arith.constant 0 : index
    %c0_15 = arith.constant 0 : index
    %13 = vector.load %arg4[%c0_13, %c1, %c0_14, %c0_15] : memref<3x4x8x32xf32, #tpu.memory_space<vmem>>, vector<1x1x8x32xf32>
    %14 = vector.shape_cast %13 : vector<1x1x8x32xf32> to vector<8x32xf32>
    %cst_16 = arith.constant dense<0.000000e+00> : vector<16x8xf32>
    %15 = tpu.matmul %0, %14, %cst_16 {dimension_numbers = #tpu.dot_dimension_numbers<[1], [1], [0], [0], [0, 0, 1, 0], [], []>} : vector<16x32xf32>, vector<8x32xf32>, vector<16x8xf32> -> vector<16x8xf32>
    %c0_17 = arith.constant 0 : index
    %c1_18 = arith.constant 1 : index
    %c0_19 = arith.constant 0 : index
    %c0_20 = arith.constant 0 : index
    %16 = vector.load %arg5[%c0_17, %c1_18, %c0_19, %c0_20] : memref<3x4x1x8xf32, #tpu.memory_space<vmem>>, vector<1x1x1x8xf32>
    %17 = vector.shape_cast %16 : vector<1x1x1x8xf32> to vector<1x8xf32>
    %18 = vector.broadcast %17 : vector<1x8xf32> to vector<16x8xf32>
    %19 = arith.addf %15, %18 : vector<16x8xf32>
    %c0_21 = arith.constant 0 : index
    %c2 = arith.constant 2 : index
    %c0_22 = arith.constant 0 : index
    %c0_23 = arith.constant 0 : index
    %20 = vector.load %arg4[%c0_21, %c2, %c0_22, %c0_23] : memref<3x4x8x32xf32, #tpu.memory_space<vmem>>, vector<1x1x8x32xf32>
    %21 = vector.shape_cast %20 : vector<1x1x8x32xf32> to vector<8x32xf32>
    %cst_24 = arith.constant dense<0.000000e+00> : vector<16x8xf32>
    %22 = tpu.matmul %0, %21, %cst_24 {dimension_numbers = #tpu.dot_dimension_numbers<[1], [1], [0], [0], [0, 0, 1, 0], [], []>} : vector<16x32xf32>, vector<8x32xf32>, vector<16x8xf32> -> vector<16x8xf32>
    %c0_25 = arith.constant 0 : index
    %c2_26 = arith.constant 2 : index
    %c0_27 = arith.constant 0 : index
    %c0_28 = arith.constant 0 : index
    %23 = vector.load %arg5[%c0_25, %c2_26, %c0_27, %c0_28] : memref<3x4x1x8xf32, #tpu.memory_space<vmem>>, vector<1x1x1x8xf32>
    %24 = vector.shape_cast %23 : vector<1x1x1x8xf32> to vector<1x8xf32>
    %25 = vector.broadcast %24 : vector<1x8xf32> to vector<16x8xf32>
    %26 = arith.addf %22, %25 : vector<16x8xf32>
    %c0_29 = arith.constant 0 : index
    %c3 = arith.constant 3 : index
    %c0_30 = arith.constant 0 : index
    %c0_31 = arith.constant 0 : index
    %27 = vector.load %arg4[%c0_29, %c3, %c0_30, %c0_31] : memref<3x4x8x32xf32, #tpu.memory_space<vmem>>, vector<1x1x8x32xf32>
    %28 = vector.shape_cast %27 : vector<1x1x8x32xf32> to vector<8x32xf32>
    %cst_32 = arith.constant dense<0.000000e+00> : vector<16x8xf32>
    %29 = tpu.matmul %0, %28, %cst_32 {dimension_numbers = #tpu.dot_dimension_numbers<[1], [1], [0], [0], [0, 0, 1, 0], [], []>} : vector<16x32xf32>, vector<8x32xf32>, vector<16x8xf32> -> vector<16x8xf32>
    %c0_33 = arith.constant 0 : index
    %c3_34 = arith.constant 3 : index
    %c0_35 = arith.constant 0 : index
    %c0_36 = arith.constant 0 : index
    %30 = vector.load %arg5[%c0_33, %c3_34, %c0_35, %c0_36] : memref<3x4x1x8xf32, #tpu.memory_space<vmem>>, vector<1x1x1x8xf32>
    %31 = vector.shape_cast %30 : vector<1x1x1x8xf32> to vector<1x8xf32>
    %32 = vector.broadcast %31 : vector<1x8xf32> to vector<16x8xf32>
    %33 = arith.addf %29, %32 : vector<16x8xf32>
    %c1_37 = arith.constant 1 : index
    %c0_38 = arith.constant 0 : index
    %c0_39 = arith.constant 0 : index
    %c0_40 = arith.constant 0 : index
    %34 = vector.load %arg4[%c1_37, %c0_38, %c0_39, %c0_40] : memref<3x4x8x32xf32, #tpu.memory_space<vmem>>, vector<1x1x8x32xf32>
    %35 = vector.shape_cast %34 : vector<1x1x8x32xf32> to vector<8x32xf32>
    %cst_41 = arith.constant dense<0.000000e+00> : vector<16x8xf32>
    %36 = tpu.matmul %1, %35, %cst_41 {dimension_numbers = #tpu.dot_dimension_numbers<[1], [1], [0], [0], [0, 0, 1, 0], [], []>} : vector<16x32xf32>, vector<8x32xf32>, vector<16x8xf32> -> vector<16x8xf32>
    %c1_42 = arith.constant 1 : index
    %c0_43 = arith.constant 0 : index
    %c0_44 = arith.constant 0 : index
    %c0_45 = arith.constant 0 : index
    %37 = vector.load %arg5[%c1_42, %c0_43, %c0_44, %c0_45] : memref<3x4x1x8xf32, #tpu.memory_space<vmem>>, vector<1x1x1x8xf32>
    %38 = vector.shape_cast %37 : vector<1x1x1x8xf32> to vector<1x8xf32>
    %39 = vector.broadcast %38 : vector<1x8xf32> to vector<16x8xf32>
    %40 = arith.addf %36, %39 : vector<16x8xf32>
    %c1_46 = arith.constant 1 : index
    %c1_47 = arith.constant 1 : index
    %c0_48 = arith.constant 0 : index
    %c0_49 = arith.constant 0 : index
    %41 = vector.load %arg4[%c1_46, %c1_47, %c0_48, %c0_49] : memref<3x4x8x32xf32, #tpu.memory_space<vmem>>, vector<1x1x8x32xf32>
    %42 = vector.shape_cast %41 : vector<1x1x8x32xf32> to vector<8x32xf32>
    %cst_50 = arith.constant dense<0.000000e+00> : vector<16x8xf32>
    %43 = tpu.matmul %1, %42, %cst_50 {dimension_numbers = #tpu.dot_dimension_numbers<[1], [1], [0], [0], [0, 0, 1, 0], [], []>} : vector<16x32xf32>, vector<8x32xf32>, vector<16x8xf32> -> vector<16x8xf32>
    %c1_51 = arith.constant 1 : index
    %c1_52 = arith.constant 1 : index
    %c0_53 = arith.constant 0 : index
    %c0_54 = arith.constant 0 : index
    %44 = vector.load %arg5[%c1_51, %c1_52, %c0_53, %c0_54] : memref<3x4x1x8xf32, #tpu.memory_space<vmem>>, vector<1x1x1x8xf32>
    %45 = vector.shape_cast %44 : vector<1x1x1x8xf32> to vector<1x8xf32>
    %46 = vector.broadcast %45 : vector<1x8xf32> to vector<16x8xf32>
    %47 = arith.addf %43, %46 : vector<16x8xf32>
    %c1_55 = arith.constant 1 : index
    %c2_56 = arith.constant 2 : index
    %c0_57 = arith.constant 0 : index
    %c0_58 = arith.constant 0 : index
    %48 = vector.load %arg4[%c1_55, %c2_56, %c0_57, %c0_58] : memref<3x4x8x32xf32, #tpu.memory_space<vmem>>, vector<1x1x8x32xf32>
    %49 = vector.shape_cast %48 : vector<1x1x8x32xf32> to vector<8x32xf32>
    %cst_59 = arith.constant dense<0.000000e+00> : vector<16x8xf32>
    %50 = tpu.matmul %1, %49, %cst_59 {dimension_numbers = #tpu.dot_dimension_numbers<[1], [1], [0], [0], [0, 0, 1, 0], [], []>} : vector<16x32xf32>, vector<8x32xf32>, vector<16x8xf32> -> vector<16x8xf32>
    %c1_60 = arith.constant 1 : index
    %c2_61 = arith.constant 2 : index
    %c0_62 = arith.constant 0 : index
    %c0_63 = arith.constant 0 : index
    %51 = vector.load %arg5[%c1_60, %c2_61, %c0_62, %c0_63] : memref<3x4x1x8xf32, #tpu.memory_space<vmem>>, vector<1x1x1x8xf32>
    %52 = vector.shape_cast %51 : vector<1x1x1x8xf32> to vector<1x8xf32>
    %53 = vector.broadcast %52 : vector<1x8xf32> to vector<16x8xf32>
    %54 = arith.addf %50, %53 : vector<16x8xf32>
    %c1_64 = arith.constant 1 : index
    %c3_65 = arith.constant 3 : index
    %c0_66 = arith.constant 0 : index
    %c0_67 = arith.constant 0 : index
    %55 = vector.load %arg4[%c1_64, %c3_65, %c0_66, %c0_67] : memref<3x4x8x32xf32, #tpu.memory_space<vmem>>, vector<1x1x8x32xf32>
    %56 = vector.shape_cast %55 : vector<1x1x8x32xf32> to vector<8x32xf32>
    %cst_68 = arith.constant dense<0.000000e+00> : vector<16x8xf32>
    %57 = tpu.matmul %1, %56, %cst_68 {dimension_numbers = #tpu.dot_dimension_numbers<[1], [1], [0], [0], [0, 0, 1, 0], [], []>} : vector<16x32xf32>, vector<8x32xf32>, vector<16x8xf32> -> vector<16x8xf32>
    %c1_69 = arith.constant 1 : index
    %c3_70 = arith.constant 3 : index
    %c0_71 = arith.constant 0 : index
    %c0_72 = arith.constant 0 : index
    %58 = vector.load %arg5[%c1_69, %c3_70, %c0_71, %c0_72] : memref<3x4x1x8xf32, #tpu.memory_space<vmem>>, vector<1x1x1x8xf32>
    %59 = vector.shape_cast %58 : vector<1x1x1x8xf32> to vector<1x8xf32>
    %60 = vector.broadcast %59 : vector<1x8xf32> to vector<16x8xf32>
    %61 = arith.addf %57, %60 : vector<16x8xf32>
    %c2_73 = arith.constant 2 : index
    %c0_74 = arith.constant 0 : index
    %c0_75 = arith.constant 0 : index
    %c0_76 = arith.constant 0 : index
    %62 = vector.load %arg4[%c2_73, %c0_74, %c0_75, %c0_76] : memref<3x4x8x32xf32, #tpu.memory_space<vmem>>, vector<1x1x8x32xf32>
    %63 = vector.shape_cast %62 : vector<1x1x8x32xf32> to vector<8x32xf32>
    %cst_77 = arith.constant dense<0.000000e+00> : vector<16x8xf32>
    %64 = tpu.matmul %2, %63, %cst_77 {dimension_numbers = #tpu.dot_dimension_numbers<[1], [1], [0], [0], [0, 0, 1, 0], [], []>} : vector<16x32xf32>, vector<8x32xf32>, vector<16x8xf32> -> vector<16x8xf32>
    %c2_78 = arith.constant 2 : index
    %c0_79 = arith.constant 0 : index
    %c0_80 = arith.constant 0 : index
    %c0_81 = arith.constant 0 : index
    %65 = vector.load %arg5[%c2_78, %c0_79, %c0_80, %c0_81] : memref<3x4x1x8xf32, #tpu.memory_space<vmem>>, vector<1x1x1x8xf32>
    %66 = vector.shape_cast %65 : vector<1x1x1x8xf32> to vector<1x8xf32>
    %67 = vector.broadcast %66 : vector<1x8xf32> to vector<16x8xf32>
    %68 = arith.addf %64, %67 : vector<16x8xf32>
    %c2_82 = arith.constant 2 : index
    %c1_83 = arith.constant 1 : index
    %c0_84 = arith.constant 0 : index
    %c0_85 = arith.constant 0 : index
    %69 = vector.load %arg4[%c2_82, %c1_83, %c0_84, %c0_85] : memref<3x4x8x32xf32, #tpu.memory_space<vmem>>, vector<1x1x8x32xf32>
    %70 = vector.shape_cast %69 : vector<1x1x8x32xf32> to vector<8x32xf32>
    %cst_86 = arith.constant dense<0.000000e+00> : vector<16x8xf32>
    %71 = tpu.matmul %2, %70, %cst_86 {dimension_numbers = #tpu.dot_dimension_numbers<[1], [1], [0], [0], [0, 0, 1, 0], [], []>} : vector<16x32xf32>, vector<8x32xf32>, vector<16x8xf32> -> vector<16x8xf32>
    %c2_87 = arith.constant 2 : index
    %c1_88 = arith.constant 1 : index
    %c0_89 = arith.constant 0 : index
    %c0_90 = arith.constant 0 : index
    %72 = vector.load %arg5[%c2_87, %c1_88, %c0_89, %c0_90] : memref<3x4x1x8xf32, #tpu.memory_space<vmem>>, vector<1x1x1x8xf32>
    %73 = vector.shape_cast %72 : vector<1x1x1x8xf32> to vector<1x8xf32>
    %74 = vector.broadcast %73 : vector<1x8xf32> to vector<16x8xf32>
    %75 = arith.addf %71, %74 : vector<16x8xf32>
    %c2_91 = arith.constant 2 : index
    %c2_92 = arith.constant 2 : index
    %c0_93 = arith.constant 0 : index
    %c0_94 = arith.constant 0 : index
    %76 = vector.load %arg4[%c2_91, %c2_92, %c0_93, %c0_94] : memref<3x4x8x32xf32, #tpu.memory_space<vmem>>, vector<1x1x8x32xf32>
    %77 = vector.shape_cast %76 : vector<1x1x8x32xf32> to vector<8x32xf32>
    %cst_95 = arith.constant dense<0.000000e+00> : vector<16x8xf32>
    %78 = tpu.matmul %2, %77, %cst_95 {dimension_numbers = #tpu.dot_dimension_numbers<[1], [1], [0], [0], [0, 0, 1, 0], [], []>} : vector<16x32xf32>, vector<8x32xf32>, vector<16x8xf32> -> vector<16x8xf32>
    %c2_96 = arith.constant 2 : index
    %c2_97 = arith.constant 2 : index
    %c0_98 = arith.constant 0 : index
    %c0_99 = arith.constant 0 : index
    %79 = vector.load %arg5[%c2_96, %c2_97, %c0_98, %c0_99] : memref<3x4x1x8xf32, #tpu.memory_space<vmem>>, vector<1x1x1x8xf32>
    %80 = vector.shape_cast %79 : vector<1x1x1x8xf32> to vector<1x8xf32>
    %81 = vector.broadcast %80 : vector<1x8xf32> to vector<16x8xf32>
    %82 = arith.addf %78, %81 : vector<16x8xf32>
    %c2_100 = arith.constant 2 : index
    %c3_101 = arith.constant 3 : index
    %c0_102 = arith.constant 0 : index
    %c0_103 = arith.constant 0 : index
    %83 = vector.load %arg4[%c2_100, %c3_101, %c0_102, %c0_103] : memref<3x4x8x32xf32, #tpu.memory_space<vmem>>, vector<1x1x8x32xf32>
    %84 = vector.shape_cast %83 : vector<1x1x8x32xf32> to vector<8x32xf32>
    %cst_104 = arith.constant dense<0.000000e+00> : vector<16x8xf32>
    %85 = tpu.matmul %2, %84, %cst_104 {dimension_numbers = #tpu.dot_dimension_numbers<[1], [1], [0], [0], [0, 0, 1, 0], [], []>} : vector<16x32xf32>, vector<8x32xf32>, vector<16x8xf32> -> vector<16x8xf32>
    %c2_105 = arith.constant 2 : index
    %c3_106 = arith.constant 3 : index
    %c0_107 = arith.constant 0 : index
    %c0_108 = arith.constant 0 : index
    %86 = vector.load %arg5[%c2_105, %c3_106, %c0_107, %c0_108] : memref<3x4x1x8xf32, #tpu.memory_space<vmem>>, vector<1x1x1x8xf32>
    %87 = vector.shape_cast %86 : vector<1x1x1x8xf32> to vector<1x8xf32>
    %88 = vector.broadcast %87 : vector<1x8xf32> to vector<16x8xf32>
    %89 = arith.addf %85, %88 : vector<16x8xf32>
    %c0_109 = arith.constant 0 : index
    %c0_110 = arith.constant 0 : index
    %90 = vector.load %arg7[%c0_109, %c0_110] : memref<1x32xf32, #tpu.memory_space<vmem>>, vector<1x32xf32>
    %cst_111 = arith.constant 0.000000e+00 : f32
    %91 = vector.broadcast %cst_111 : f32 to vector<8x32xf32>
    %92 = vector.extract_strided_slice %12 {offsets = [0, 0], sizes = [8, 8], strides = [1, 1]} : vector<16x8xf32> to vector<8x8xf32>
    %93 = vector.extract_strided_slice %40 {offsets = [0, 0], sizes = [8, 8], strides = [1, 1]} : vector<16x8xf32> to vector<8x8xf32>
    %94 = vector.extract_strided_slice %68 {offsets = [0, 0], sizes = [8, 8], strides = [1, 1]} : vector<16x8xf32> to vector<8x8xf32>
    %cst_112 = arith.constant dense<0.000000e+00> : vector<8x8xf32>
    %95 = tpu.matmul %92, %93, %cst_112 {dimension_numbers = #tpu.dot_dimension_numbers<[1], [1], [0], [0], [0, 0, 1, 0], [], []>} : vector<8x8xf32>, vector<8x8xf32>, vector<8x8xf32> -> vector<8x8xf32>
    %cst_113 = arith.constant 0.000000e+00 : f32
    %96 = vector.broadcast %cst_113 : f32 to vector<8x8xf32>
    %97 = arith.select %5, %95, %96 : vector<8x8xi1>, vector<8x8xf32>
    %cst_114 = arith.constant dense<0xFF800000> : vector<8xf32>
    %98 = vector.multi_reduction <maximumf>, %97, %cst_114 [1] : vector<8x8xf32> to vector<8xf32>
    %99 = vector.shape_cast %98 : vector<8xf32> to vector<8x1xf32>
    %100 = vector.broadcast %99 : vector<8x1xf32> to vector<8x8xf32>
    %101 = arith.subf %97, %100 : vector<8x8xf32>
    %102 = math.exp %101 : vector<8x8xf32>
    %cst_115 = arith.constant dense<0.000000e+00> : vector<8xf32>
    %103 = vector.multi_reduction <add>, %102, %cst_115 [1] : vector<8x8xf32> to vector<8xf32>
    %104 = vector.shape_cast %103 : vector<8xf32> to vector<8x1xf32>
    %105 = tpu.reciprocal %104 : vector<8x1xf32> -> vector<8x1xf32>
    %106 = vector.broadcast %105 : vector<8x1xf32> to vector<8x8xf32>
    %107 = arith.mulf %102, %106 : vector<8x8xf32>
    %cst_116 = arith.constant dense<0.000000e+00> : vector<8x8xf32>
    %108 = tpu.matmul %107, %94, %cst_116 {dimension_numbers = #tpu.dot_dimension_numbers<[1], [0], [0], [1], [0, 0, 1, 1], [], []>} : vector<8x8xf32>, vector<8x8xf32>, vector<8x8xf32> -> vector<8x8xf32>
    %c0_117 = arith.constant 0 : index
    %c0_118 = arith.constant 0 : index
    %c0_119 = arith.constant 0 : index
    %109 = vector.load %arg6[%c0_117, %c0_118, %c0_119] : memref<4x32x8xf32, #tpu.memory_space<vmem>>, vector<1x32x8xf32>
    %110 = vector.shape_cast %109 : vector<1x32x8xf32> to vector<32x8xf32>
    %cst_120 = arith.constant dense<0.000000e+00> : vector<8x32xf32>
    %111 = tpu.matmul %108, %110, %cst_120 {dimension_numbers = #tpu.dot_dimension_numbers<[1], [1], [0], [0], [0, 0, 1, 0], [], []>} : vector<8x8xf32>, vector<32x8xf32>, vector<8x32xf32> -> vector<8x32xf32>
    %112 = arith.addf %91, %111 : vector<8x32xf32>
    %113 = vector.extract_strided_slice %19 {offsets = [0, 0], sizes = [8, 8], strides = [1, 1]} : vector<16x8xf32> to vector<8x8xf32>
    %114 = vector.extract_strided_slice %47 {offsets = [0, 0], sizes = [8, 8], strides = [1, 1]} : vector<16x8xf32> to vector<8x8xf32>
    %115 = vector.extract_strided_slice %75 {offsets = [0, 0], sizes = [8, 8], strides = [1, 1]} : vector<16x8xf32> to vector<8x8xf32>
    %cst_121 = arith.constant dense<0.000000e+00> : vector<8x8xf32>
    %116 = tpu.matmul %113, %114, %cst_121 {dimension_numbers = #tpu.dot_dimension_numbers<[1], [1], [0], [0], [0, 0, 1, 0], [], []>} : vector<8x8xf32>, vector<8x8xf32>, vector<8x8xf32> -> vector<8x8xf32>
    %cst_122 = arith.constant 0.000000e+00 : f32
    %117 = vector.broadcast %cst_122 : f32 to vector<8x8xf32>
    %118 = arith.select %5, %116, %117 : vector<8x8xi1>, vector<8x8xf32>
    %cst_123 = arith.constant dense<0xFF800000> : vector<8xf32>
    %119 = vector.multi_reduction <maximumf>, %118, %cst_123 [1] : vector<8x8xf32> to vector<8xf32>
    %120 = vector.shape_cast %119 : vector<8xf32> to vector<8x1xf32>
    %121 = vector.broadcast %120 : vector<8x1xf32> to vector<8x8xf32>
    %122 = arith.subf %118, %121 : vector<8x8xf32>
    %123 = math.exp %122 : vector<8x8xf32>
    %cst_124 = arith.constant dense<0.000000e+00> : vector<8xf32>
    %124 = vector.multi_reduction <add>, %123, %cst_124 [1] : vector<8x8xf32> to vector<8xf32>
    %125 = vector.shape_cast %124 : vector<8xf32> to vector<8x1xf32>
    %126 = tpu.reciprocal %125 : vector<8x1xf32> -> vector<8x1xf32>
    %127 = vector.broadcast %126 : vector<8x1xf32> to vector<8x8xf32>
    %128 = arith.mulf %123, %127 : vector<8x8xf32>
    %cst_125 = arith.constant dense<0.000000e+00> : vector<8x8xf32>
    %129 = tpu.matmul %128, %115, %cst_125 {dimension_numbers = #tpu.dot_dimension_numbers<[1], [0], [0], [1], [0, 0, 1, 1], [], []>} : vector<8x8xf32>, vector<8x8xf32>, vector<8x8xf32> -> vector<8x8xf32>
    %c1_126 = arith.constant 1 : index
    %c0_127 = arith.constant 0 : index
    %c0_128 = arith.constant 0 : index
    %130 = vector.load %arg6[%c1_126, %c0_127, %c0_128] : memref<4x32x8xf32, #tpu.memory_space<vmem>>, vector<1x32x8xf32>
    %131 = vector.shape_cast %130 : vector<1x32x8xf32> to vector<32x8xf32>
    %cst_129 = arith.constant dense<0.000000e+00> : vector<8x32xf32>
    %132 = tpu.matmul %129, %131, %cst_129 {dimension_numbers = #tpu.dot_dimension_numbers<[1], [1], [0], [0], [0, 0, 1, 0], [], []>} : vector<8x8xf32>, vector<32x8xf32>, vector<8x32xf32> -> vector<8x32xf32>
    %133 = arith.addf %112, %132 : vector<8x32xf32>
    %134 = vector.extract_strided_slice %26 {offsets = [0, 0], sizes = [8, 8], strides = [1, 1]} : vector<16x8xf32> to vector<8x8xf32>
    %135 = vector.extract_strided_slice %54 {offsets = [0, 0], sizes = [8, 8], strides = [1, 1]} : vector<16x8xf32> to vector<8x8xf32>
    %136 = vector.extract_strided_slice %82 {offsets = [0, 0], sizes = [8, 8], strides = [1, 1]} : vector<16x8xf32> to vector<8x8xf32>
    %cst_130 = arith.constant dense<0.000000e+00> : vector<8x8xf32>
    %137 = tpu.matmul %134, %135, %cst_130 {dimension_numbers = #tpu.dot_dimension_numbers<[1], [1], [0], [0], [0, 0, 1, 0], [], []>} : vector<8x8xf32>, vector<8x8xf32>, vector<8x8xf32> -> vector<8x8xf32>
    %cst_131 = arith.constant 0.000000e+00 : f32
    %138 = vector.broadcast %cst_131 : f32 to vector<8x8xf32>
    %139 = arith.select %5, %137, %138 : vector<8x8xi1>, vector<8x8xf32>
    %cst_132 = arith.constant dense<0xFF800000> : vector<8xf32>
    %140 = vector.multi_reduction <maximumf>, %139, %cst_132 [1] : vector<8x8xf32> to vector<8xf32>
    %141 = vector.shape_cast %140 : vector<8xf32> to vector<8x1xf32>
    %142 = vector.broadcast %141 : vector<8x1xf32> to vector<8x8xf32>
    %143 = arith.subf %139, %142 : vector<8x8xf32>
    %144 = math.exp %143 : vector<8x8xf32>
    %cst_133 = arith.constant dense<0.000000e+00> : vector<8xf32>
    %145 = vector.multi_reduction <add>, %144, %cst_133 [1] : vector<8x8xf32> to vector<8xf32>
    %146 = vector.shape_cast %145 : vector<8xf32> to vector<8x1xf32>
    %147 = tpu.reciprocal %146 : vector<8x1xf32> -> vector<8x1xf32>
    %148 = vector.broadcast %147 : vector<8x1xf32> to vector<8x8xf32>
    %149 = arith.mulf %144, %148 : vector<8x8xf32>
    %cst_134 = arith.constant dense<0.000000e+00> : vector<8x8xf32>
    %150 = tpu.matmul %149, %136, %cst_134 {dimension_numbers = #tpu.dot_dimension_numbers<[1], [0], [0], [1], [0, 0, 1, 1], [], []>} : vector<8x8xf32>, vector<8x8xf32>, vector<8x8xf32> -> vector<8x8xf32>
    %c2_135 = arith.constant 2 : index
    %c0_136 = arith.constant 0 : index
    %c0_137 = arith.constant 0 : index
    %151 = vector.load %arg6[%c2_135, %c0_136, %c0_137] : memref<4x32x8xf32, #tpu.memory_space<vmem>>, vector<1x32x8xf32>
    %152 = vector.shape_cast %151 : vector<1x32x8xf32> to vector<32x8xf32>
    %cst_138 = arith.constant dense<0.000000e+00> : vector<8x32xf32>
    %153 = tpu.matmul %150, %152, %cst_138 {dimension_numbers = #tpu.dot_dimension_numbers<[1], [1], [0], [0], [0, 0, 1, 0], [], []>} : vector<8x8xf32>, vector<32x8xf32>, vector<8x32xf32> -> vector<8x32xf32>
    %154 = arith.addf %133, %153 : vector<8x32xf32>
    %155 = vector.extract_strided_slice %33 {offsets = [0, 0], sizes = [8, 8], strides = [1, 1]} : vector<16x8xf32> to vector<8x8xf32>
    %156 = vector.extract_strided_slice %61 {offsets = [0, 0], sizes = [8, 8], strides = [1, 1]} : vector<16x8xf32> to vector<8x8xf32>
    %157 = vector.extract_strided_slice %89 {offsets = [0, 0], sizes = [8, 8], strides = [1, 1]} : vector<16x8xf32> to vector<8x8xf32>
    %cst_139 = arith.constant dense<0.000000e+00> : vector<8x8xf32>
    %158 = tpu.matmul %155, %156, %cst_139 {dimension_numbers = #tpu.dot_dimension_numbers<[1], [1], [0], [0], [0, 0, 1, 0], [], []>} : vector<8x8xf32>, vector<8x8xf32>, vector<8x8xf32> -> vector<8x8xf32>
    %cst_140 = arith.constant 0.000000e+00 : f32
    %159 = vector.broadcast %cst_140 : f32 to vector<8x8xf32>
    %160 = arith.select %5, %158, %159 : vector<8x8xi1>, vector<8x8xf32>
    %cst_141 = arith.constant dense<0xFF800000> : vector<8xf32>
    %161 = vector.multi_reduction <maximumf>, %160, %cst_141 [1] : vector<8x8xf32> to vector<8xf32>
    %162 = vector.shape_cast %161 : vector<8xf32> to vector<8x1xf32>
    %163 = vector.broadcast %162 : vector<8x1xf32> to vector<8x8xf32>
    %164 = arith.subf %160, %163 : vector<8x8xf32>
    %165 = math.exp %164 : vector<8x8xf32>
    %cst_142 = arith.constant dense<0.000000e+00> : vector<8xf32>
    %166 = vector.multi_reduction <add>, %165, %cst_142 [1] : vector<8x8xf32> to vector<8xf32>
    %167 = vector.shape_cast %166 : vector<8xf32> to vector<8x1xf32>
    %168 = tpu.reciprocal %167 : vector<8x1xf32> -> vector<8x1xf32>
    %169 = vector.broadcast %168 : vector<8x1xf32> to vector<8x8xf32>
    %170 = arith.mulf %165, %169 : vector<8x8xf32>
    %cst_143 = arith.constant dense<0.000000e+00> : vector<8x8xf32>
    %171 = tpu.matmul %170, %157, %cst_143 {dimension_numbers = #tpu.dot_dimension_numbers<[1], [0], [0], [1], [0, 0, 1, 1], [], []>} : vector<8x8xf32>, vector<8x8xf32>, vector<8x8xf32> -> vector<8x8xf32>
    %c3_144 = arith.constant 3 : index
    %c0_145 = arith.constant 0 : index
    %c0_146 = arith.constant 0 : index
    %172 = vector.load %arg6[%c3_144, %c0_145, %c0_146] : memref<4x32x8xf32, #tpu.memory_space<vmem>>, vector<1x32x8xf32>
    %173 = vector.shape_cast %172 : vector<1x32x8xf32> to vector<32x8xf32>
    %cst_147 = arith.constant dense<0.000000e+00> : vector<8x32xf32>
    %174 = tpu.matmul %171, %173, %cst_147 {dimension_numbers = #tpu.dot_dimension_numbers<[1], [1], [0], [0], [0, 0, 1, 0], [], []>} : vector<8x8xf32>, vector<32x8xf32>, vector<8x32xf32> -> vector<8x32xf32>
    %175 = arith.addf %154, %174 : vector<8x32xf32>
    %176 = vector.broadcast %90 : vector<1x32xf32> to vector<8x32xf32>
    %177 = arith.addf %175, %176 : vector<8x32xf32>
    %c0_148 = arith.constant 0 : index
    %c0_149 = arith.constant 0 : index
    %178 = vector.load %arg8[%c0_148, %c0_149] : memref<16x32xf32, #tpu.memory_space<vmem>>, vector<8x32xf32>
    tpu.vector_store %arg8[%c0_148, %c0_149], %177 {strides = array<i32>} : memref<16x32xf32, #tpu.memory_space<vmem>>, vector<8x32xf32>,
    %cst_150 = arith.constant 0.000000e+00 : f32
    %179 = vector.broadcast %cst_150 : f32 to vector<8x32xf32>
    %180 = vector.extract_strided_slice %12 {offsets = [8, 0], sizes = [8, 8], strides = [1, 1]} : vector<16x8xf32> to vector<8x8xf32>
    %181 = vector.extract_strided_slice %40 {offsets = [8, 0], sizes = [8, 8], strides = [1, 1]} : vector<16x8xf32> to vector<8x8xf32>
    %182 = vector.extract_strided_slice %68 {offsets = [8, 0], sizes = [8, 8], strides = [1, 1]} : vector<16x8xf32> to vector<8x8xf32>
    %cst_151 = arith.constant dense<0.000000e+00> : vector<8x8xf32>
    %183 = tpu.matmul %180, %181, %cst_151 {dimension_numbers = #tpu.dot_dimension_numbers<[1], [1], [0], [0], [0, 0, 1, 0], [], []>} : vector<8x8xf32>, vector<8x8xf32>, vector<8x8xf32> -> vector<8x8xf32>
    %cst_152 = arith.constant 0.000000e+00 : f32
    %184 = vector.broadcast %cst_152 : f32 to vector<8x8xf32>
    %185 = arith.select %5, %183, %184 : vector<8x8xi1>, vector<8x8xf32>
    %cst_153 = arith.constant dense<0xFF800000> : vector<8xf32>
    %186 = vector.multi_reduction <maximumf>, %185, %cst_153 [1] : vector<8x8xf32> to vector<8xf32>
    %187 = vector.shape_cast %186 : vector<8xf32> to vector<8x1xf32>
    %188 = vector.broadcast %187 : vector<8x1xf32> to vector<8x8xf32>
    %189 = arith.subf %185, %188 : vector<8x8xf32>
    %190 = math.exp %189 : vector<8x8xf32>
    %cst_154 = arith.constant dense<0.000000e+00> : vector<8xf32>
    %191 = vector.multi_reduction <add>, %190, %cst_154 [1] : vector<8x8xf32> to vector<8xf32>
    %192 = vector.shape_cast %191 : vector<8xf32> to vector<8x1xf32>
    %193 = tpu.reciprocal %192 : vector<8x1xf32> -> vector<8x1xf32>
    %194 = vector.broadcast %193 : vector<8x1xf32> to vector<8x8xf32>
    %195 = arith.mulf %190, %194 : vector<8x8xf32>
    %cst_155 = arith.constant dense<0.000000e+00> : vector<8x8xf32>
    %196 = tpu.matmul %195, %182, %cst_155 {dimension_numbers = #tpu.dot_dimension_numbers<[1], [0], [0], [1], [0, 0, 1, 1], [], []>} : vector<8x8xf32>, vector<8x8xf32>, vector<8x8xf32> -> vector<8x8xf32>
    %c0_156 = arith.constant 0 : index
    %c0_157 = arith.constant 0 : index
    %c0_158 = arith.constant 0 : index
    %197 = vector.load %arg6[%c0_156, %c0_157, %c0_158] : memref<4x32x8xf32, #tpu.memory_space<vmem>>, vector<1x32x8xf32>
    %198 = vector.shape_cast %197 : vector<1x32x8xf32> to vector<32x8xf32>
    %cst_159 = arith.constant dense<0.000000e+00> : vector<8x32xf32>
    %199 = tpu.matmul %196, %198, %cst_159 {dimension_numbers = #tpu.dot_dimension_numbers<[1], [1], [0], [0], [0, 0, 1, 0], [], []>} : vector<8x8xf32>, vector<32x8xf32>, vector<8x32xf32> -> vector<8x32xf32>
    %200 = arith.addf %179, %199 : vector<8x32xf32>
    %201 = vector.extract_strided_slice %19 {offsets = [8, 0], sizes = [8, 8], strides = [1, 1]} : vector<16x8xf32> to vector<8x8xf32>
    %202 = vector.extract_strided_slice %47 {offsets = [8, 0], sizes = [8, 8], strides = [1, 1]} : vector<16x8xf32> to vector<8x8xf32>
    %203 = vector.extract_strided_slice %75 {offsets = [8, 0], sizes = [8, 8], strides = [1, 1]} : vector<16x8xf32> to vector<8x8xf32>
    %cst_160 = arith.constant dense<0.000000e+00> : vector<8x8xf32>
    %204 = tpu.matmul %201, %202, %cst_160 {dimension_numbers = #tpu.dot_dimension_numbers<[1], [1], [0], [0], [0, 0, 1, 0], [], []>} : vector<8x8xf32>, vector<8x8xf32>, vector<8x8xf32> -> vector<8x8xf32>
    %cst_161 = arith.constant 0.000000e+00 : f32
    %205 = vector.broadcast %cst_161 : f32 to vector<8x8xf32>
    %206 = arith.select %5, %204, %205 : vector<8x8xi1>, vector<8x8xf32>
    %cst_162 = arith.constant dense<0xFF800000> : vector<8xf32>
    %207 = vector.multi_reduction <maximumf>, %206, %cst_162 [1] : vector<8x8xf32> to vector<8xf32>
    %208 = vector.shape_cast %207 : vector<8xf32> to vector<8x1xf32>
    %209 = vector.broadcast %208 : vector<8x1xf32> to vector<8x8xf32>
    %210 = arith.subf %206, %209 : vector<8x8xf32>
    %211 = math.exp %210 : vector<8x8xf32>
    %cst_163 = arith.constant dense<0.000000e+00> : vector<8xf32>
    %212 = vector.multi_reduction <add>, %211, %cst_163 [1] : vector<8x8xf32> to vector<8xf32>
    %213 = vector.shape_cast %212 : vector<8xf32> to vector<8x1xf32>
    %214 = tpu.reciprocal %213 : vector<8x1xf32> -> vector<8x1xf32>
    %215 = vector.broadcast %214 : vector<8x1xf32> to vector<8x8xf32>
    %216 = arith.mulf %211, %215 : vector<8x8xf32>
    %cst_164 = arith.constant dense<0.000000e+00> : vector<8x8xf32>
    %217 = tpu.matmul %216, %203, %cst_164 {dimension_numbers = #tpu.dot_dimension_numbers<[1], [0], [0], [1], [0, 0, 1, 1], [], []>} : vector<8x8xf32>, vector<8x8xf32>, vector<8x8xf32> -> vector<8x8xf32>
    %c1_165 = arith.constant 1 : index
    %c0_166 = arith.constant 0 : index
    %c0_167 = arith.constant 0 : index
    %218 = vector.load %arg6[%c1_165, %c0_166, %c0_167] : memref<4x32x8xf32, #tpu.memory_space<vmem>>, vector<1x32x8xf32>
    %219 = vector.shape_cast %218 : vector<1x32x8xf32> to vector<32x8xf32>
    %cst_168 = arith.constant dense<0.000000e+00> : vector<8x32xf32>
    %220 = tpu.matmul %217, %219, %cst_168 {dimension_numbers = #tpu.dot_dimension_numbers<[1], [1], [0], [0], [0, 0, 1, 0], [], []>} : vector<8x8xf32>, vector<32x8xf32>, vector<8x32xf32> -> vector<8x32xf32>
    %221 = arith.addf %200, %220 : vector<8x32xf32>
    %222 = vector.extract_strided_slice %26 {offsets = [8, 0], sizes = [8, 8], strides = [1, 1]} : vector<16x8xf32> to vector<8x8xf32>
    %223 = vector.extract_strided_slice %54 {offsets = [8, 0], sizes = [8, 8], strides = [1, 1]} : vector<16x8xf32> to vector<8x8xf32>
    %224 = vector.extract_strided_slice %82 {offsets = [8, 0], sizes = [8, 8], strides = [1, 1]} : vector<16x8xf32> to vector<8x8xf32>
    %cst_169 = arith.constant dense<0.000000e+00> : vector<8x8xf32>
    %225 = tpu.matmul %222, %223, %cst_169 {dimension_numbers = #tpu.dot_dimension_numbers<[1], [1], [0], [0], [0, 0, 1, 0], [], []>} : vector<8x8xf32>, vector<8x8xf32>, vector<8x8xf32> -> vector<8x8xf32>
    %cst_170 = arith.constant 0.000000e+00 : f32
    %226 = vector.broadcast %cst_170 : f32 to vector<8x8xf32>
    %227 = arith.select %5, %225, %226 : vector<8x8xi1>, vector<8x8xf32>
    %cst_171 = arith.constant dense<0xFF800000> : vector<8xf32>
    %228 = vector.multi_reduction <maximumf>, %227, %cst_171 [1] : vector<8x8xf32> to vector<8xf32>
    %229 = vector.shape_cast %228 : vector<8xf32> to vector<8x1xf32>
    %230 = vector.broadcast %229 : vector<8x1xf32> to vector<8x8xf32>
    %231 = arith.subf %227, %230 : vector<8x8xf32>
    %232 = math.exp %231 : vector<8x8xf32>
    %cst_172 = arith.constant dense<0.000000e+00> : vector<8xf32>
    %233 = vector.multi_reduction <add>, %232, %cst_172 [1] : vector<8x8xf32> to vector<8xf32>
    %234 = vector.shape_cast %233 : vector<8xf32> to vector<8x1xf32>
    %235 = tpu.reciprocal %234 : vector<8x1xf32> -> vector<8x1xf32>
    %236 = vector.broadcast %235 : vector<8x1xf32> to vector<8x8xf32>
    %237 = arith.mulf %232, %236 : vector<8x8xf32>
    %cst_173 = arith.constant dense<0.000000e+00> : vector<8x8xf32>
    %238 = tpu.matmul %237, %224, %cst_173 {dimension_numbers = #tpu.dot_dimension_numbers<[1], [0], [0], [1], [0, 0, 1, 1], [], []>} : vector<8x8xf32>, vector<8x8xf32>, vector<8x8xf32> -> vector<8x8xf32>
    %c2_174 = arith.constant 2 : index
    %c0_175 = arith.constant 0 : index
    %c0_176 = arith.constant 0 : index
    %239 = vector.load %arg6[%c2_174, %c0_175, %c0_176] : memref<4x32x8xf32, #tpu.memory_space<vmem>>, vector<1x32x8xf32>
    %240 = vector.shape_cast %239 : vector<1x32x8xf32> to vector<32x8xf32>
    %cst_177 = arith.constant dense<0.000000e+00> : vector<8x32xf32>
    %241 = tpu.matmul %238, %240, %cst_177 {dimension_numbers = #tpu.dot_dimension_numbers<[1], [1], [0], [0], [0, 0, 1, 0], [], []>} : vector<8x8xf32>, vector<32x8xf32>, vector<8x32xf32> -> vector<8x32xf32>
    %242 = arith.addf %221, %241 : vector<8x32xf32>
    %243 = vector.extract_strided_slice %33 {offsets = [8, 0], sizes = [8, 8], strides = [1, 1]} : vector<16x8xf32> to vector<8x8xf32>
    %244 = vector.extract_strided_slice %61 {offsets = [8, 0], sizes = [8, 8], strides = [1, 1]} : vector<16x8xf32> to vector<8x8xf32>
    %245 = vector.extract_strided_slice %89 {offsets = [8, 0], sizes = [8, 8], strides = [1, 1]} : vector<16x8xf32> to vector<8x8xf32>
    %cst_178 = arith.constant dense<0.000000e+00> : vector<8x8xf32>
    %246 = tpu.matmul %243, %244, %cst_178 {dimension_numbers = #tpu.dot_dimension_numbers<[1], [1], [0], [0], [0, 0, 1, 0], [], []>} : vector<8x8xf32>, vector<8x8xf32>, vector<8x8xf32> -> vector<8x8xf32>
    %cst_179 = arith.constant 0.000000e+00 : f32
    %247 = vector.broadcast %cst_179 : f32 to vector<8x8xf32>
    %248 = arith.select %5, %246, %247 : vector<8x8xi1>, vector<8x8xf32>
    %cst_180 = arith.constant dense<0xFF800000> : vector<8xf32>
    %249 = vector.multi_reduction <maximumf>, %248, %cst_180 [1] : vector<8x8xf32> to vector<8xf32>
    %250 = vector.shape_cast %249 : vector<8xf32> to vector<8x1xf32>
    %251 = vector.broadcast %250 : vector<8x1xf32> to vector<8x8xf32>
    %252 = arith.subf %248, %251 : vector<8x8xf32>
    %253 = math.exp %252 : vector<8x8xf32>
    %cst_181 = arith.constant dense<0.000000e+00> : vector<8xf32>
    %254 = vector.multi_reduction <add>, %253, %cst_181 [1] : vector<8x8xf32> to vector<8xf32>
    %255 = vector.shape_cast %254 : vector<8xf32> to vector<8x1xf32>
    %256 = tpu.reciprocal %255 : vector<8x1xf32> -> vector<8x1xf32>
    %257 = vector.broadcast %256 : vector<8x1xf32> to vector<8x8xf32>
    %258 = arith.mulf %253, %257 : vector<8x8xf32>
    %cst_182 = arith.constant dense<0.000000e+00> : vector<8x8xf32>
    %259 = tpu.matmul %258, %245, %cst_182 {dimension_numbers = #tpu.dot_dimension_numbers<[1], [0], [0], [1], [0, 0, 1, 1], [], []>} : vector<8x8xf32>, vector<8x8xf32>, vector<8x8xf32> -> vector<8x8xf32>
    %c3_183 = arith.constant 3 : index
    %c0_184 = arith.constant 0 : index
    %c0_185 = arith.constant 0 : index
    %260 = vector.load %arg6[%c3_183, %c0_184, %c0_185] : memref<4x32x8xf32, #tpu.memory_space<vmem>>, vector<1x32x8xf32>
    %261 = vector.shape_cast %260 : vector<1x32x8xf32> to vector<32x8xf32>
    %cst_186 = arith.constant dense<0.000000e+00> : vector<8x32xf32>
    %262 = tpu.matmul %259, %261, %cst_186 {dimension_numbers = #tpu.dot_dimension_numbers<[1], [1], [0], [0], [0, 0, 1, 0], [], []>} : vector<8x8xf32>, vector<32x8xf32>, vector<8x32xf32> -> vector<8x32xf32>
    %263 = arith.addf %242, %262 : vector<8x32xf32>
    %264 = vector.broadcast %90 : vector<1x32xf32> to vector<8x32xf32>
    %265 = arith.addf %263, %264 : vector<8x32xf32>
    %c8 = arith.constant 8 : index
    %c0_187 = arith.constant 0 : index
    %266 = vector.load %arg8[%c8, %c0_187] : memref<16x32xf32, #tpu.memory_space<vmem>>, vector<8x32xf32>
    tpu.vector_store %arg8[%c8, %c0_187], %265 {strides = array<i32>} : memref<16x32xf32, #tpu.memory_space<vmem>>, vector<8x32xf32>,
    return
  }
  func.func @transform_0(%arg0: i32) -> (i32, i32) {
    %c0_i32 = arith.constant 0 : i32
    %c0_i32_0 = arith.constant 0 : i32
    return %arg0, %c0_i32 : i32, i32
  }
  func.func @transform_1(%arg0: i32) -> (i32, i32) {
    %c0_i32 = arith.constant 0 : i32
    %c0_i32_0 = arith.constant 0 : i32
    return %arg0, %c0_i32 : i32, i32
  }
  func.func @transform_2(%arg0: i32) -> (i32, i32) {
    %c0_i32 = arith.constant 0 : i32
    %c0_i32_0 = arith.constant 0 : i32
    return %arg0, %c0_i32 : i32, i32
  }
  func.func @transform_3(%arg0: i32) -> (i32, i32, i32, i32) {
    %c0_i32 = arith.constant 0 : i32
    %c0_i32_0 = arith.constant 0 : i32
    %c0_i32_1 = arith.constant 0 : i32
    %c0_i32_2 = arith.constant 0 : i32
    %c0_i32_3 = arith.constant 0 : i32
    return %c0_i32, %c0_i32_0, %c0_i32_1, %c0_i32_2 : i32, i32, i32, i32
  }
  func.func @transform_4(%arg0: i32) -> (i32, i32, i32, i32) {
    %c0_i32 = arith.constant 0 : i32
    %c0_i32_0 = arith.constant 0 : i32
    %c0_i32_1 = arith.constant 0 : i32
    %c0_i32_2 = arith.constant 0 : i32
    %c0_i32_3 = arith.constant 0 : i32
    return %c0_i32, %c0_i32_0, %c0_i32_1, %c0_i32_2 : i32, i32, i32, i32
  }
  func.func @transform_5(%arg0: i32) -> (i32, i32, i32) {
    %c0_i32 = arith.constant 0 : i32
    %c0_i32_0 = arith.constant 0 : i32
    %c0_i32_1 = arith.constant 0 : i32
    %c0_i32_2 = arith.constant 0 : i32
    return %c0_i32, %c0_i32_0, %c0_i32_1 : i32, i32, i32
  }
  func.func @transform_6(%arg0: i32) -> (i32, i32) {
    %c0_i32 = arith.constant 0 : i32
    %c0_i32_0 = arith.constant 0 : i32
    %c0_i32_1 = arith.constant 0 : i32
    return %c0_i32, %c0_i32_0 : i32, i32
  }
  func.func @transform_7(%arg0: i32) -> (i32, i32) {
    %c0_i32 = arith.constant 0 : i32
    %c0_i32_0 = arith.constant 0 : i32
    return %arg0, %c0_i32 : i32, i32
  }
}

</mosaic_0001>

<llo_original>
// kernel: tpu_custom_call.1
$region0: #{tpu_custom_call.1}
  #allocation0 [shape = 'u32[]', space=smem, size = 0x4, offset = 0x4, fixed_abs, tag = 'smem constant byte address 0x4 - core index']
  #allocation1 [shape = 'u32[144,128]{1,0:T(1,128)}', space=vmem, size = 0x12000, scoped, tag = 'internal scratch']
  %s0 = inlined_call_operand.vmem [shape: f32[16,32], index: 0, kind: input, shape index: {}]
  %s1 = inlined_call_operand.vmem [shape: f32[16,32], index: 1, kind: input, shape index: {}]
  %s2 = inlined_call_operand.vmem [shape: f32[16,32], index: 2, kind: input, shape index: {}]
  %s3 = inlined_call_operand.vmem [shape: f32[3,4,8,32], index: 3, kind: input, shape index: {}]
  %s4 = inlined_call_operand.vmem [shape: f32[3,4,1,8], index: 4, kind: input, shape index: {}]
  %s5 = inlined_call_operand.vmem [shape: f32[4,32,8], index: 5, kind: input, shape index: {}]
  %s6 = inlined_call_operand.vmem [shape: f32[1,32], index: 6, kind: input, shape index: {}]
  %s7 = inlined_call_operand.hbm [shape: f32[16,32], index: 7, kind: output, shape index: {}]
  %s8 = sld [smem:[#allocation0]]
  $region38: #{tpu_custom_call.1} parent=0
    _
  %s10 = ssub.s32 1, %s8
  %s11 = scalar_select 0, %s10, %s8
  $region1: #{tpu_custom_call.1} parent=0
    #allocation2 [shape = 'u8[8192]{0}', space=vmem, size = 0x2000, scoped, tag = 'output window, operand 0, single buffered']
    #allocation3 [shape = 's32[1]{0}', space=sflag, size = 0x4, scoped, tag = 'scoped memory for tpu_custom_call.1']
    %12 = vsyncpa [#allocation3], 0
    // Predicated region
    $region2: #{tpu_custom_call.1} parent=1 // pred_check
      _
    $region3: #{tpu_custom_call.1} parent=1 // pred_check_branch
      %14 = sbr.rel (0) target = $region5
    $region4: #{tpu_custom_call.1} parent=1 // pred_region
      _
    $region5: #{tpu_custom_call.1} parent=1 // pred_fallthru
      _
    // Predicated region
    $region6: #{tpu_custom_call.1} parent=1 // pred_check
      _
    $region7: #{tpu_custom_call.1} parent=1 // pred_check_branch
      %16 = sbr.rel (0) target = $region9
    $region8: #{tpu_custom_call.1} parent=1 // pred_region
      _
    $region9: #{tpu_custom_call.1} parent=1 // pred_fallthru
      _
    // Predicated region
    $region10: #{tpu_custom_call.1} parent=1 // pred_check
      _
    $region11: #{tpu_custom_call.1} parent=1 // pred_check_branch
      %18 = sbr.rel (0) target = $region13
    $region12: #{tpu_custom_call.1} parent=1 // pred_region
      _
    $region13: #{tpu_custom_call.1} parent=1 // pred_fallthru
      _
    // Predicated region
    $region14: #{tpu_custom_call.1} parent=1 // pred_check
      _
    $region15: #{tpu_custom_call.1} parent=1 // pred_check_branch
      %20 = sbr.rel (0) target = $region17
    $region16: #{tpu_custom_call.1} parent=1 // pred_region
      _
    $region17: #{tpu_custom_call.1} parent=1 // pred_fallthru
      _
    // Predicated region
    $region18: #{tpu_custom_call.1} parent=1 // pred_check
      _
    $region19: #{tpu_custom_call.1} parent=1 // pred_check_branch
      %22 = sbr.rel (0) target = $region21
    $region20: #{tpu_custom_call.1} parent=1 // pred_region
      _
    $region21: #{tpu_custom_call.1} parent=1 // pred_fallthru
      _
    // Predicated region
    $region22: #{tpu_custom_call.1} parent=1 // pred_check
      _
    $region23: #{tpu_custom_call.1} parent=1 // pred_check_branch
      %24 = sbr.rel (0) target = $region25
    $region24: #{tpu_custom_call.1} parent=1 // pred_region
      _
    $region25: #{tpu_custom_call.1} parent=1 // pred_fallthru
      _
    // Predicated region
    $region26: #{tpu_custom_call.1} parent=1 // pred_check
      _
    $region27: #{tpu_custom_call.1} parent=1 // pred_check_branch
      %26 = sbr.rel (0) target = $region29
    $region28: #{tpu_custom_call.1} parent=1 // pred_region
      _
    $region29: #{tpu_custom_call.1} parent=1 // pred_fallthru
      _
    %v27 = vld [vmem:[%s0] sm:$0xff]
    %v28 = vld [vmem:[%s0 + $0x8] sm:$0xff]
    %v29 = vld [vmem:[%s1] sm:$0xff]
    %v30 = vld [vmem:[%s1 + $0x8] sm:$0xff]
    %v31 = vld [vmem:[%s2] sm:$0xff]
    %v32 = vld [vmem:[%s2 + $0x8] sm:$0xff]
    %v33 = vlaneseq
    %v34 = vshrl.u32 %v33, 7
    %v35 = vlaneseq
    %v36 = vand.u32 %v35, 127
    %vm37 = vcmp.ge.s32.totalorder %v34, %v36
    %v38 = vld [vmem:[%s3] sm:$0xff]
    %v39 = vld [vmem:[%s4] sm:$0x1]
    %v41 = vlaneseq
    %v42 = vshrl.u32 %v41, 7
    %v43 = vsub.s32 0, %v42
    %v44 = vrot.slane %v39, %v43
    %vm46 = vcmask 261120
    %v48 = vsel %vm46, %v27, 0
    %v51 = vsel %vm46, %v28, 0
    %v54 = vsel %vm46, %v38, 0
    %56 = vmatprep.subr.mxu0 0.0
    %57 = vmatpush1.xpose.msra.mxu0 %v54
    %58 = vmatprep.subr.mxu0 0.0
    %59 = vmatpush1.xpose.msra.mxu0 0.0
    %60 = vmatprep.subr.mxu0 0.0
    %61 = vmatpush1.xpose.msra.mxu0 0.0
    %62 = vmatprep.subr.mxu0 0.0
    %63 = vmatpush1.xpose.msra.mxu0 0.0
    %64 = vmatprep.subr.mxu0 0.0
    %65 = vmatpush1.xpose.msra.mxu0 0.0
    %66 = vmatprep.subr.mxu0 0.0
    %67 = vmatpush1.xpose.msra.mxu0 0.0
    %68 = vmatprep.subr.mxu0 0.0
    %69 = vmatpush1.xpose.msra.mxu0 0.0
    %70 = vmatprep.subr.mxu0 0.0
    %71 = vmatpush1.xpose.msra.mxu0 0.0
    %72 = vmatprep.subr.mxu0 0.0
    %73 = vmatpush1.xpose.msra.mxu0 0.0
    %74 = vmatprep.subr.mxu0 0.0
    %75 = vmatpush1.xpose.msra.mxu0 0.0
    %76 = vmatprep.subr.mxu0 0.0
    %77 = vmatpush1.xpose.msra.mxu0 0.0
    %78 = vmatprep.subr.mxu0 0.0
    %79 = vmatpush1.xpose.msra.mxu0 0.0
    %80 = vmatprep.subr.mxu0 0.0
    %81 = vmatpush1.xpose.msra.mxu0 0.0
    %82 = vmatprep.subr.mxu0 0.0
    %83 = vmatpush1.xpose.msra.mxu0 0.0
    %84 = vmatprep.subr.mxu0 0.0
    %85 = vmatpush1.xpose.msra.mxu0 0.0
    %86 = vmatprep.subr.mxu0 0.0
    %87 = vmatpush1.xpose.msra.mxu0 0.0
    %88 = vmatprep.subr.mxu0 0.0
    %89 = vmatpush1.xpose.msra.mxu0 0.0
    %90 = vmatprep.subr.mxu0 0.0
    %91 = vmatpush1.xpose.msra.mxu0 0.0
    %92 = vmatprep.subr.mxu0 0.0
    %93 = vmatpush1.xpose.msra.mxu0 0.0
    %94 = vmatprep.subr.mxu0 0.0
    %95 = vmatpush1.xpose.msra.mxu0 0.0
    %96 = vmatprep.subr.mxu0 0.0
    %97 = vmatpush1.xpose.msra.mxu0 0.0
    %98 = vmatprep.subr.mxu0 0.0
    %99 = vmatpush1.xpose.msra.mxu0 0.0
    %100 = vmatprep.subr.mxu0 0.0
    %101 = vmatpush1.xpose.msra.mxu0 0.0
    %102 = vmatprep.subr.mxu0 0.0
    %103 = vmatpush1.xpose.msra.mxu0 0.0
    %104 = vmatprep.subr.mxu0 0.0
    %105 = vmatpush1.xpose.msra.mxu0 0.0
    %106 = vmatprep.subr.mxu0 0.0
    %107 = vmatpush1.xpose.msra.mxu0 0.0
    %108 = vmatprep.subr.mxu0 0.0
    %109 = vmatpush1.xpose.msra.mxu0 0.0
    %110 = vmatprep.subr.mxu0 0.0
    %111 = vmatpush1.xpose.msra.mxu0 0.0
    %112 = vmatprep.subr.mxu0 0.0
    %113 = vmatpush1.xpose.msra.mxu0 0.0
    %114 = vmatprep.subr.mxu0 0.0
    %115 = vmatpush1.xpose.msra.mxu0 0.0
    %116 = vmatprep.subr.mxu0 0.0
    %117 = vmatpush1.xpose.msra.mxu0 0.0
    %118 = vmatprep.subr.mxu0 0.0
    %119 = vmatpush1.xpose.msra.mxu0 0.0
    %120 = vmatprep.mubr.f32.mxu0 0.0
    %121 = vmatmul.mubr.f32.gmra.mrb[0].mxu0 %v48
    %v122 = vpop.f32.mrb[0].mxu0
    %v123 = vadd.f32 %v44, %v122
    %v124 = vpop.f32.mrb[0].mxu0
    %125 = vmatprep.mubr.f32.mxu0 0.0
    %126 = vmatmul.mubr.f32.gmra.mrb[0].mxu0 %v51
    %v127 = vpop.f32.mrb[0].mxu0
    %v128 = vadd.f32 %v44, %v127
    %v129 = vpop.f32.mrb[0].mxu0
    %130 = vdwg.mxu0
    %s131 = scalar_lea.vmem %s3, 8
    %v132 = vld [vmem:[%s131] sm:$0xff]
    %s133 = scalar_lea.vmem %s4, 1
    %v134 = vld [vmem:[%s133] sm:$0x1]
    %v136 = vlaneseq
    %v137 = vshrl.u32 %v136, 7
    %v138 = vsub.s32 0, %v137
    %v139 = vrot.slane %v134, %v138
    %v142 = vsel %vm46, %v132, 0
    %144 = vmatprep.subr.mxu0 0.0
    %145 = vmatpush1.xpose.msra.mxu0 %v142
    %146 = vmatprep.subr.mxu0 0.0
    %147 = vmatpush1.xpose.msra.mxu0 0.0
    %148 = vmatprep.subr.mxu0 0.0
    %149 = vmatpush1.xpose.msra.mxu0 0.0
    %150 = vmatprep.subr.mxu0 0.0
    %151 = vmatpush1.xpose.msra.mxu0 0.0
    %152 = vmatprep.subr.mxu0 0.0
    %153 = vmatpush1.xpose.msra.mxu0 0.0
    %154 = vmatprep.subr.mxu0 0.0
    %155 = vmatpush1.xpose.msra.mxu0 0.0
    %156 = vmatprep.subr.mxu0 0.0
    %157 = vmatpush1.xpose.msra.mxu0 0.0
    %158 = vmatprep.subr.mxu0 0.0
    %159 = vmatpush1.xpose.msra.mxu0 0.0
    %160 = vmatprep.subr.mxu0 0.0
    %161 = vmatpush1.xpose.msra.mxu0 0.0
    %162 = vmatprep.subr.mxu0 0.0
    %163 = vmatpush1.xpose.msra.mxu0 0.0
    %164 = vmatprep.subr.mxu0 0.0
    %165 = vmatpush1.xpose.msra.mxu0 0.0
    %166 = vmatprep.subr.mxu0 0.0
    %167 = vmatpush1.xpose.msra.mxu0 0.0
    %168 = vmatprep.subr.mxu0 0.0
    %169 = vmatpush1.xpose.msra.mxu0 0.0
    %170 = vmatprep.subr.mxu0 0.0
    %171 = vmatpush1.xpose.msra.mxu0 0.0
    %172 = vmatprep.subr.mxu0 0.0
    %173 = vmatpush1.xpose.msra.mxu0 0.0
    %174 = vmatprep.subr.mxu0 0.0
    %175 = vmatpush1.xpose.msra.mxu0 0.0
    %176 = vmatprep.subr.mxu0 0.0
    %177 = vmatpush1.xpose.msra.mxu0 0.0
    %178 = vmatprep.subr.mxu0 0.0
    %179 = vmatpush1.xpose.msra.mxu0 0.0
    %180 = vmatprep.subr.mxu0 0.0
    %181 = vmatpush1.xpose.msra.mxu0 0.0
    %182 = vmatprep.subr.mxu0 0.0
    %183 = vmatpush1.xpose.msra.mxu0 0.0
    %184 = vmatprep.subr.mxu0 0.0
    %185 = vmatpush1.xpose.msra.mxu0 0.0
    %186 = vmatprep.subr.mxu0 0.0
    %187 = vmatpush1.xpose.msra.mxu0 0.0
    %188 = vmatprep.subr.mxu0 0.0
    %189 = vmatpush1.xpose.msra.mxu0 0.0
    %190 = vmatprep.subr.mxu0 0.0
    %191 = vmatpush1.xpose.msra.mxu0 0.0
    %192 = vmatprep.subr.mxu0 0.0
    %193 = vmatpush1.xpose.msra.mxu0 0.0
    %194 = vmatprep.subr.mxu0 0.0
    %195 = vmatpush1.xpose.msra.mxu0 0.0
    %196 = vmatprep.subr.mxu0 0.0
    %197 = vmatpush1.xpose.msra.mxu0 0.0
    %198 = vmatprep.subr.mxu0 0.0
    %199 = vmatpush1.xpose.msra.mxu0 0.0
    %200 = vmatprep.subr.mxu0 0.0
    %201 = vmatpush1.xpose.msra.mxu0 0.0
    %202 = vmatprep.subr.mxu0 0.0
    %203 = vmatpush1.xpose.msra.mxu0 0.0
    %204 = vmatprep.subr.mxu0 0.0
    %205 = vmatpush1.xpose.msra.mxu0 0.0
    %206 = vmatprep.subr.mxu0 0.0
    %207 = vmatpush1.xpose.msra.mxu0 0.0
    %208 = vmatprep.mubr.f32.mxu0 0.0
    %209 = vmatmul.mubr.f32.gmra.mrb[0].mxu0 %v48
    %v210 = vpop.f32.mrb[0].mxu0
    %v211 = vadd.f32 %v139, %v210
    %v212 = vpop.f32.mrb[0].mxu0
    %213 = vmatprep.mubr.f32.mxu0 0.0
    %214 = vmatmul.mubr.f32.gmra.mrb[0].mxu0 %v51
    %v215 = vpop.f32.mrb[0].mxu0
    %v216 = vadd.f32 %v139, %v215
    %v217 = vpop.f32.mrb[0].mxu0
    %218 = vdwg.mxu0
    %s219 = scalar_lea.vmem %s3, 16
    %v220 = vld [vmem:[%s219] sm:$0xff]
    %s221 = scalar_lea.vmem %s4, 2
    %v222 = vld [vmem:[%s221] sm:$0x1]
    %v224 = vlaneseq
    %v225 = vshrl.u32 %v224, 7
    %v226 = vsub.s32 0, %v225
    %v227 = vrot.slane %v222, %v226
    %v230 = vsel %vm46, %v220, 0
    %232 = vmatprep.subr.mxu0 0.0
    %233 = vmatpush1.xpose.msra.mxu0 %v230
    %234 = vmatprep.subr.mxu0 0.0
    %235 = vmatpush1.xpose.msra.mxu0 0.0
    %236 = vmatprep.subr.mxu0 0.0
    %237 = vmatpush1.xpose.msra.mxu0 0.0
    %238 = vmatprep.subr.mxu0 0.0
    %239 = vmatpush1.xpose.msra.mxu0 0.0
    %240 = vmatprep.subr.mxu0 0.0
    %241 = vmatpush1.xpose.msra.mxu0 0.0
    %242 = vmatprep.subr.mxu0 0.0
    %243 = vmatpush1.xpose.msra.mxu0 0.0
    %244 = vmatprep.subr.mxu0 0.0
    %245 = vmatpush1.xpose.msra.mxu0 0.0
    %246 = vmatprep.subr.mxu0 0.0
    %247 = vmatpush1.xpose.msra.mxu0 0.0
    %248 = vmatprep.subr.mxu0 0.0
    %249 = vmatpush1.xpose.msra.mxu0 0.0
    %250 = vmatprep.subr.mxu0 0.0
    %251 = vmatpush1.xpose.msra.mxu0 0.0
    %252 = vmatprep.subr.mxu0 0.0
    %253 = vmatpush1.xpose.msra.mxu0 0.0
    %254 = vmatprep.subr.mxu0 0.0
    %255 = vmatpush1.xpose.msra.mxu0 0.0
    %256 = vmatprep.subr.mxu0 0.0
    %257 = vmatpush1.xpose.msra.mxu0 0.0
    %258 = vmatprep.subr.mxu0 0.0
    %259 = vmatpush1.xpose.msra.mxu0 0.0
    %260 = vmatprep.subr.mxu0 0.0
    %261 = vmatpush1.xpose.msra.mxu0 0.0
    %262 = vmatprep.subr.mxu0 0.0
    %263 = vmatpush1.xpose.msra.mxu0 0.0
    %264 = vmatprep.subr.mxu0 0.0
    %265 = vmatpush1.xpose.msra.mxu0 0.0
    %266 = vmatprep.subr.mxu0 0.0
    %267 = vmatpush1.xpose.msra.mxu0 0.0
    %268 = vmatprep.subr.mxu0 0.0
    %269 = vmatpush1.xpose.msra.mxu0 0.0
    %270 = vmatprep.subr.mxu0 0.0
    %271 = vmatpush1.xpose.msra.mxu0 0.0
    %272 = vmatprep.subr.mxu0 0.0
    %273 = vmatpush1.xpose.msra.mxu0 0.0
    %274 = vmatprep.subr.mxu0 0.0
    %275 = vmatpush1.xpose.msra.mxu0 0.0
    %276 = vmatprep.subr.mxu0 0.0
    %277 = vmatpush1.xpose.msra.mxu0 0.0
    %278 = vmatprep.subr.mxu0 0.0
    %279 = vmatpush1.xpose.msra.mxu0 0.0
    %280 = vmatprep.subr.mxu0 0.0
    %281 = vmatpush1.xpose.msra.mxu0 0.0
    %282 = vmatprep.subr.mxu0 0.0
    %283 = vmatpush1.xpose.msra.mxu0 0.0
    %284 = vmatprep.subr.mxu0 0.0
    %285 = vmatpush1.xpose.msra.mxu0 0.0
    %286 = vmatprep.subr.mxu0 0.0
    %287 = vmatpush1.xpose.msra.mxu0 0.0
    %288 = vmatprep.subr.mxu0 0.0
    %289 = vmatpush1.xpose.msra.mxu0 0.0
    %290 = vmatprep.subr.mxu0 0.0
    %291 = vmatpush1.xpose.msra.mxu0 0.0
    %292 = vmatprep.subr.mxu0 0.0
    %293 = vmatpush1.xpose.msra.mxu0 0.0
    %294 = vmatprep.subr.mxu0 0.0
    %295 = vmatpush1.xpose.msra.mxu0 0.0
    %296 = vmatprep.mubr.f32.mxu0 0.0
    %297 = vmatmul.mubr.f32.gmra.mrb[0].mxu0 %v48
    %v298 = vpop.f32.mrb[0].mxu0
    %v299 = vadd.f32 %v227, %v298
    %v300 = vpop.f32.mrb[0].mxu0
    %301 = vmatprep.mubr.f32.mxu0 0.0
    %302 = vmatmul.mubr.f32.gmra.mrb[0].mxu0 %v51
    %v303 = vpop.f32.mrb[0].mxu0
    %v304 = vadd.f32 %v227, %v303
    %v305 = vpop.f32.mrb[0].mxu0
    %306 = vdwg.mxu0
    %s307 = scalar_lea.vmem %s3, 24
    %v308 = vld [vmem:[%s307] sm:$0xff]
    %s309 = scalar_lea.vmem %s4, 3
    %v310 = vld [vmem:[%s309] sm:$0x1]
    %v312 = vlaneseq
    %v313 = vshrl.u32 %v312, 7
    %v314 = vsub.s32 0, %v313
    %v315 = vrot.slane %v310, %v314
    %v318 = vsel %vm46, %v308, 0
    %320 = vmatprep.subr.mxu0 0.0
    %321 = vmatpush1.xpose.msra.mxu0 %v318
    %322 = vmatprep.subr.mxu0 0.0
    %323 = vmatpush1.xpose.msra.mxu0 0.0
    %324 = vmatprep.subr.mxu0 0.0
    %325 = vmatpush1.xpose.msra.mxu0 0.0
    %326 = vmatprep.subr.mxu0 0.0
    %327 = vmatpush1.xpose.msra.mxu0 0.0
    %328 = vmatprep.subr.mxu0 0.0
    %329 = vmatpush1.xpose.msra.mxu0 0.0
    %330 = vmatprep.subr.mxu0 0.0
    %331 = vmatpush1.xpose.msra.mxu0 0.0
    %332 = vmatprep.subr.mxu0 0.0
    %333 = vmatpush1.xpose.msra.mxu0 0.0
    %334 = vmatprep.subr.mxu0 0.0
    %335 = vmatpush1.xpose.msra.mxu0 0.0
    %336 = vmatprep.subr.mxu0 0.0
    %337 = vmatpush1.xpose.msra.mxu0 0.0
    %338 = vmatprep.subr.mxu0 0.0
    %339 = vmatpush1.xpose.msra.mxu0 0.0
    %340 = vmatprep.subr.mxu0 0.0
    %341 = vmatpush1.xpose.msra.mxu0 0.0
    %342 = vmatprep.subr.mxu0 0.0
    %343 = vmatpush1.xpose.msra.mxu0 0.0
    %344 = vmatprep.subr.mxu0 0.0
    %345 = vmatpush1.xpose.msra.mxu0 0.0
    %346 = vmatprep.subr.mxu0 0.0
    %347 = vmatpush1.xpose.msra.mxu0 0.0
    %348 = vmatprep.subr.mxu0 0.0
    %349 = vmatpush1.xpose.msra.mxu0 0.0
    %350 = vmatprep.subr.mxu0 0.0
    %351 = vmatpush1.xpose.msra.mxu0 0.0
    %352 = vmatprep.subr.mxu0 0.0
    %353 = vmatpush1.xpose.msra.mxu0 0.0
    %354 = vmatprep.subr.mxu0 0.0
    %355 = vmatpush1.xpose.msra.mxu0 0.0
    %356 = vmatprep.subr.mxu0 0.0
    %357 = vmatpush1.xpose.msra.mxu0 0.0
    %358 = vmatprep.subr.mxu0 0.0
    %359 = vmatpush1.xpose.msra.mxu0 0.0
    %360 = vmatprep.subr.mxu0 0.0
    %361 = vmatpush1.xpose.msra.mxu0 0.0
    %362 = vmatprep.subr.mxu0 0.0
    %363 = vmatpush1.xpose.msra.mxu0 0.0
    %364 = vmatprep.subr.mxu0 0.0
    %365 = vmatpush1.xpose.msra.mxu0 0.0
    %366 = vmatprep.subr.mxu0 0.0
    %367 = vmatpush1.xpose.msra.mxu0 0.0
    %368 = vmatprep.subr.mxu0 0.0
    %369 = vmatpush1.xpose.msra.mxu0 0.0
    %370 = vmatprep.subr.mxu0 0.0
    %371 = vmatpush1.xpose.msra.mxu0 0.0
    %372 = vmatprep.subr.mxu0 0.0
    %373 = vmatpush1.xpose.msra.mxu0 0.0
    %374 = vmatprep.subr.mxu0 0.0
    %375 = vmatpush1.xpose.msra.mxu0 0.0
    %376 = vmatprep.subr.mxu0 0.0
    %377 = vmatpush1.xpose.msra.mxu0 0.0
    %378 = vmatprep.subr.mxu0 0.0
    %379 = vmatpush1.xpose.msra.mxu0 0.0
    %380 = vmatprep.subr.mxu0 0.0
    %381 = vmatpush1.xpose.msra.mxu0 0.0
    %382 = vmatprep.subr.mxu0 0.0
    %383 = vmatpush1.xpose.msra.mxu0 0.0
    %384 = vmatprep.mubr.f32.mxu0 0.0
    %385 = vmatmul.mubr.f32.gmra.mrb[0].mxu0 %v48
    %v386 = vpop.f32.mrb[0].mxu0
    %v387 = vadd.f32 %v315, %v386
    %v388 = vpop.f32.mrb[0].mxu0
    %389 = vmatprep.mubr.f32.mxu0 0.0
    %390 = vmatmul.mubr.f32.gmra.mrb[0].mxu0 %v51
    %v391 = vpop.f32.mrb[0].mxu0
    %v392 = vadd.f32 %v315, %v391
    %v393 = vpop.f32.mrb[0].mxu0
    %394 = vdwg.mxu0
    %s395 = scalar_lea.vmem %s3, 32
    %v396 = vld [vmem:[%s395] sm:$0xff]
    %s397 = scalar_lea.vmem %s4, 4
    %v398 = vld [vmem:[%s397] sm:$0x1]
    %v400 = vlaneseq
    %v401 = vshrl.u32 %v400, 7
    %v402 = vsub.s32 0, %v401
    %v403 = vrot.slane %v398, %v402
    %v406 = vsel %vm46, %v29, 0
    %v409 = vsel %vm46, %v30, 0
    %v412 = vsel %vm46, %v396, 0
    %414 = vmatprep.subr.mxu0 0.0
    %415 = vmatpush1.xpose.msra.mxu0 %v412
    %416 = vmatprep.subr.mxu0 0.0
    %417 = vmatpush1.xpose.msra.mxu0 0.0
    %418 = vmatprep.subr.mxu0 0.0
    %419 = vmatpush1.xpose.msra.mxu0 0.0
    %420 = vmatprep.subr.mxu0 0.0
    %421 = vmatpush1.xpose.msra.mxu0 0.0
    %422 = vmatprep.subr.mxu0 0.0
    %423 = vmatpush1.xpose.msra.mxu0 0.0
    %424 = vmatprep.subr.mxu0 0.0
    %425 = vmatpush1.xpose.msra.mxu0 0.0
    %426 = vmatprep.subr.mxu0 0.0
    %427 = vmatpush1.xpose.msra.mxu0 0.0
    %428 = vmatprep.subr.mxu0 0.0
    %429 = vmatpush1.xpose.msra.mxu0 0.0
    %430 = vmatprep.subr.mxu0 0.0
    %431 = vmatpush1.xpose.msra.mxu0 0.0
    %432 = vmatprep.subr.mxu0 0.0
    %433 = vmatpush1.xpose.msra.mxu0 0.0
    %434 = vmatprep.subr.mxu0 0.0
    %435 = vmatpush1.xpose.msra.mxu0 0.0
    %436 = vmatprep.subr.mxu0 0.0
    %437 = vmatpush1.xpose.msra.mxu0 0.0
    %438 = vmatprep.subr.mxu0 0.0
    %439 = vmatpush1.xpose.msra.mxu0 0.0
    %440 = vmatprep.subr.mxu0 0.0
    %441 = vmatpush1.xpose.msra.mxu0 0.0
    %442 = vmatprep.subr.mxu0 0.0
    %443 = vmatpush1.xpose.msra.mxu0 0.0
    %444 = vmatprep.subr.mxu0 0.0
    %445 = vmatpush1.xpose.msra.mxu0 0.0
    %446 = vmatprep.subr.mxu0 0.0
    %447 = vmatpush1.xpose.msra.mxu0 0.0
    %448 = vmatprep.subr.mxu0 0.0
    %449 = vmatpush1.xpose.msra.mxu0 0.0
    %450 = vmatprep.subr.mxu0 0.0
    %451 = vmatpush1.xpose.msra.mxu0 0.0
    %452 = vmatprep.subr.mxu0 0.0
    %453 = vmatpush1.xpose.msra.mxu0 0.0
    %454 = vmatprep.subr.mxu0 0.0
    %455 = vmatpush1.xpose.msra.mxu0 0.0
    %456 = vmatprep.subr.mxu0 0.0
    %457 = vmatpush1.xpose.msra.mxu0 0.0
    %458 = vmatprep.subr.mxu0 0.0
    %459 = vmatpush1.xpose.msra.mxu0 0.0
    %460 = vmatprep.subr.mxu0 0.0
    %461 = vmatpush1.xpose.msra.mxu0 0.0
    %462 = vmatprep.subr.mxu0 0.0
    %463 = vmatpush1.xpose.msra.mxu0 0.0
    %464 = vmatprep.subr.mxu0 0.0
    %465 = vmatpush1.xpose.msra.mxu0 0.0
    %466 = vmatprep.subr.mxu0 0.0
    %467 = vmatpush1.xpose.msra.mxu0 0.0
    %468 = vmatprep.subr.mxu0 0.0
    %469 = vmatpush1.xpose.msra.mxu0 0.0
    %470 = vmatprep.subr.mxu0 0.0
    %471 = vmatpush1.xpose.msra.mxu0 0.0
    %472 = vmatprep.subr.mxu0 0.0
    %473 = vmatpush1.xpose.msra.mxu0 0.0
    %474 = vmatprep.subr.mxu0 0.0
    %475 = vmatpush1.xpose.msra.mxu0 0.0
    %476 = vmatprep.subr.mxu0 0.0
    %477 = vmatpush1.xpose.msra.mxu0 0.0
    %478 = vmatprep.mubr.f32.mxu0 0.0
    %479 = vmatmul.mubr.f32.gmra.mrb[0].mxu0 %v406
    %v480 = vpop.f32.mrb[0].mxu0
    %v481 = vadd.f32 %v403, %v480
    %v482 = vpop.f32.mrb[0].mxu0
    %483 = vmatprep.mubr.f32.mxu0 0.0
    %484 = vmatmul.mubr.f32.gmra.mrb[0].mxu0 %v409
    %v485 = vpop.f32.mrb[0].mxu0
    %v486 = vadd.f32 %v403, %v485
    %v487 = vpop.f32.mrb[0].mxu0
    %488 = vdwg.mxu0
    %s489 = scalar_lea.vmem %s3, 40
    %v490 = vld [vmem:[%s489] sm:$0xff]
    %s491 = scalar_lea.vmem %s4, 5
    %v492 = vld [vmem:[%s491] sm:$0x1]
    %v494 = vlaneseq
    %v495 = vshrl.u32 %v494, 7
    %v496 = vsub.s32 0, %v495
    %v497 = vrot.slane %v492, %v496
    %v500 = vsel %vm46, %v490, 0
    %502 = vmatprep.subr.mxu0 0.0
    %503 = vmatpush1.xpose.msra.mxu0 %v500
    %504 = vmatprep.subr.mxu0 0.0
    %505 = vmatpush1.xpose.msra.mxu0 0.0
    %506 = vmatprep.subr.mxu0 0.0
    %507 = vmatpush1.xpose.msra.mxu0 0.0
    %508 = vmatprep.subr.mxu0 0.0
    %509 = vmatpush1.xpose.msra.mxu0 0.0
    %510 = vmatprep.subr.mxu0 0.0
    %511 = vmatpush1.xpose.msra.mxu0 0.0
    %512 = vmatprep.subr.mxu0 0.0
    %513 = vmatpush1.xpose.msra.mxu0 0.0
    %514 = vmatprep.subr.mxu0 0.0
    %515 = vmatpush1.xpose.msra.mxu0 0.0
    %516 = vmatprep.subr.mxu0 0.0
    %517 = vmatpush1.xpose.msra.mxu0 0.0
    %518 = vmatprep.subr.mxu0 0.0
    %519 = vmatpush1.xpose.msra.mxu0 0.0
    %520 = vmatprep.subr.mxu0 0.0
    %521 = vmatpush1.xpose.msra.mxu0 0.0
    %522 = vmatprep.subr.mxu0 0.0
    %523 = vmatpush1.xpose.msra.mxu0 0.0
    %524 = vmatprep.subr.mxu0 0.0
    %525 = vmatpush1.xpose.msra.mxu0 0.0
    %526 = vmatprep.subr.mxu0 0.0
    %527 = vmatpush1.xpose.msra.mxu0 0.0
    %528 = vmatprep.subr.mxu0 0.0
    %529 = vmatpush1.xpose.msra.mxu0 0.0
    %530 = vmatprep.subr.mxu0 0.0
    %531 = vmatpush1.xpose.msra.mxu0 0.0
    %532 = vmatprep.subr.mxu0 0.0
    %533 = vmatpush1.xpose.msra.mxu0 0.0
    %534 = vmatprep.subr.mxu0 0.0
    %535 = vmatpush1.xpose.msra.mxu0 0.0
    %536 = vmatprep.subr.mxu0 0.0
    %537 = vmatpush1.xpose.msra.mxu0 0.0
    %538 = vmatprep.subr.mxu0 0.0
    %539 = vmatpush1.xpose.msra.mxu0 0.0
    %540 = vmatprep.subr.mxu0 0.0
    %541 = vmatpush1.xpose.msra.mxu0 0.0
    %542 = vmatprep.subr.mxu0 0.0
    %543 = vmatpush1.xpose.msra.mxu0 0.0
    %544 = vmatprep.subr.mxu0 0.0
    %545 = vmatpush1.xpose.msra.mxu0 0.0
    %546 = vmatprep.subr.mxu0 0.0
    %547 = vmatpush1.xpose.msra.mxu0 0.0
    %548 = vmatprep.subr.mxu0 0.0
    %549 = vmatpush1.xpose.msra.mxu0 0.0
    %550 = vmatprep.subr.mxu0 0.0
    %551 = vmatpush1.xpose.msra.mxu0 0.0
    %552 = vmatprep.subr.mxu0 0.0
    %553 = vmatpush1.xpose.msra.mxu0 0.0
    %554 = vmatprep.subr.mxu0 0.0
    %555 = vmatpush1.xpose.msra.mxu0 0.0
    %556 = vmatprep.subr.mxu0 0.0
    %557 = vmatpush1.xpose.msra.mxu0 0.0
    %558 = vmatprep.subr.mxu0 0.0
    %559 = vmatpush1.xpose.msra.mxu0 0.0
    %560 = vmatprep.subr.mxu0 0.0
    %561 = vmatpush1.xpose.msra.mxu0 0.0
    %562 = vmatprep.subr.mxu0 0.0
    %563 = vmatpush1.xpose.msra.mxu0 0.0
    %564 = vmatprep.subr.mxu0 0.0
    %565 = vmatpush1.xpose.msra.mxu0 0.0
    %566 = vmatprep.mubr.f32.mxu0 0.0
    %567 = vmatmul.mubr.f32.gmra.mrb[0].mxu0 %v406
    %v568 = vpop.f32.mrb[0].mxu0
    %v569 = vadd.f32 %v497, %v568
    %v570 = vpop.f32.mrb[0].mxu0
    %571 = vmatprep.mubr.f32.mxu0 0.0
    %572 = vmatmul.mubr.f32.gmra.mrb[0].mxu0 %v409
    %v573 = vpop.f32.mrb[0].mxu0
    %v574 = vadd.f32 %v497, %v573
    %v575 = vpop.f32.mrb[0].mxu0
    %576 = vdwg.mxu0
    %s577 = scalar_lea.vmem %s3, 48
    %v578 = vld [vmem:[%s577] sm:$0xff]
    %s579 = scalar_lea.vmem %s4, 6
    %v580 = vld [vmem:[%s579] sm:$0x1]
    %v582 = vlaneseq
    %v583 = vshrl.u32 %v582, 7
    %v584 = vsub.s32 0, %v583
    %v585 = vrot.slane %v580, %v584
    %v588 = vsel %vm46, %v578, 0
    %590 = vmatprep.subr.mxu0 0.0
    %591 = vmatpush1.xpose.msra.mxu0 %v588
    %592 = vmatprep.subr.mxu0 0.0
    %593 = vmatpush1.xpose.msra.mxu0 0.0
    %594 = vmatprep.subr.mxu0 0.0
    %595 = vmatpush1.xpose.msra.mxu0 0.0
    %596 = vmatprep.subr.mxu0 0.0
    %597 = vmatpush1.xpose.msra.mxu0 0.0
    %598 = vmatprep.subr.mxu0 0.0
    %599 = vmatpush1.xpose.msra.mxu0 0.0
    %600 = vmatprep.subr.mxu0 0.0
    %601 = vmatpush1.xpose.msra.mxu0 0.0
    %602 = vmatprep.subr.mxu0 0.0
    %603 = vmatpush1.xpose.msra.mxu0 0.0
    %604 = vmatprep.subr.mxu0 0.0
    %605 = vmatpush1.xpose.msra.mxu0 0.0
    %606 = vmatprep.subr.mxu0 0.0
    %607 = vmatpush1.xpose.msra.mxu0 0.0
    %608 = vmatprep.subr.mxu0 0.0
    %609 = vmatpush1.xpose.msra.mxu0 0.0
    %610 = vmatprep.subr.mxu0 0.0
    %611 = vmatpush1.xpose.msra.mxu0 0.0
    %612 = vmatprep.subr.mxu0 0.0
    %613 = vmatpush1.xpose.msra.mxu0 0.0
    %614 = vmatprep.subr.mxu0 0.0
    %615 = vmatpush1.xpose.msra.mxu0 0.0
    %616 = vmatprep.subr.mxu0 0.0
    %617 = vmatpush1.xpose.msra.mxu0 0.0
    %618 = vmatprep.subr.mxu0 0.0
    %619 = vmatpush1.xpose.msra.mxu0 0.0
    %620 = vmatprep.subr.mxu0 0.0
    %621 = vmatpush1.xpose.msra.mxu0 0.0
    %622 = vmatprep.subr.mxu0 0.0
    %623 = vmatpush1.xpose.msra.mxu0 0.0
    %624 = vmatprep.subr.mxu0 0.0
    %625 = vmatpush1.xpose.msra.mxu0 0.0
    %626 = vmatprep.subr.mxu0 0.0
    %627 = vmatpush1.xpose.msra.mxu0 0.0
    %628 = vmatprep.subr.mxu0 0.0
    %629 = vmatpush1.xpose.msra.mxu0 0.0
    %630 = vmatprep.subr.mxu0 0.0
    %631 = vmatpush1.xpose.msra.mxu0 0.0
    %632 = vmatprep.subr.mxu0 0.0
    %633 = vmatpush1.xpose.msra.mxu0 0.0
    %634 = vmatprep.subr.mxu0 0.0
    %635 = vmatpush1.xpose.msra.mxu0 0.0
    %636 = vmatprep.subr.mxu0 0.0
    %637 = vmatpush1.xpose.msra.mxu0 0.0
    %638 = vmatprep.subr.mxu0 0.0
    %639 = vmatpush1.xpose.msra.mxu0 0.0
    %640 = vmatprep.subr.mxu0 0.0
    %641 = vmatpush1.xpose.msra.mxu0 0.0
    %642 = vmatprep.subr.mxu0 0.0
    %643 = vmatpush1.xpose.msra.mxu0 0.0
    %644 = vmatprep.subr.mxu0 0.0
    %645 = vmatpush1.xpose.msra.mxu0 0.0
    %646 = vmatprep.subr.mxu0 0.0
    %647 = vmatpush1.xpose.msra.mxu0 0.0
    %648 = vmatprep.subr.mxu0 0.0
    %649 = vmatpush1.xpose.msra.mxu0 0.0
    %650 = vmatprep.subr.mxu0 0.0
    %651 = vmatpush1.xpose.msra.mxu0 0.0
    %652 = vmatprep.subr.mxu0 0.0
    %653 = vmatpush1.xpose.msra.mxu0 0.0
    %654 = vmatprep.mubr.f32.mxu0 0.0
    %655 = vmatmul.mubr.f32.gmra.mrb[0].mxu0 %v406
    %v656 = vpop.f32.mrb[0].mxu0
    %v657 = vadd.f32 %v585, %v656
    %v658 = vpop.f32.mrb[0].mxu0
    %659 = vmatprep.mubr.f32.mxu0 0.0
    %660 = vmatmul.mubr.f32.gmra.mrb[0].mxu0 %v409
    %v661 = vpop.f32.mrb[0].mxu0
    %v662 = vadd.f32 %v585, %v661
    %v663 = vpop.f32.mrb[0].mxu0
    %664 = vdwg.mxu0
    %s665 = scalar_lea.vmem %s3, 56
    %v666 = vld [vmem:[%s665] sm:$0xff]
    %s667 = scalar_lea.vmem %s4, 7
    %v668 = vld [vmem:[%s667] sm:$0x1]
    %v670 = vlaneseq
    %v671 = vshrl.u32 %v670, 7
    %v672 = vsub.s32 0, %v671
    %v673 = vrot.slane %v668, %v672
    %v676 = vsel %vm46, %v666, 0
    %678 = vmatprep.subr.mxu0 0.0
    %679 = vmatpush1.xpose.msra.mxu0 %v676
    %680 = vmatprep.subr.mxu0 0.0
    %681 = vmatpush1.xpose.msra.mxu0 0.0
    %682 = vmatprep.subr.mxu0 0.0
    %683 = vmatpush1.xpose.msra.mxu0 0.0
    %684 = vmatprep.subr.mxu0 0.0
    %685 = vmatpush1.xpose.msra.mxu0 0.0
    %686 = vmatprep.subr.mxu0 0.0
    %687 = vmatpush1.xpose.msra.mxu0 0.0
    %688 = vmatprep.subr.mxu0 0.0
    %689 = vmatpush1.xpose.msra.mxu0 0.0
    %690 = vmatprep.subr.mxu0 0.0
    %691 = vmatpush1.xpose.msra.mxu0 0.0
    %692 = vmatprep.subr.mxu0 0.0
    %693 = vmatpush1.xpose.msra.mxu0 0.0
    %694 = vmatprep.subr.mxu0 0.0
    %695 = vmatpush1.xpose.msra.mxu0 0.0
    %696 = vmatprep.subr.mxu0 0.0
    %697 = vmatpush1.xpose.msra.mxu0 0.0
    %698 = vmatprep.subr.mxu0 0.0
    %699 = vmatpush1.xpose.msra.mxu0 0.0
    %700 = vmatprep.subr.mxu0 0.0
    %701 = vmatpush1.xpose.msra.mxu0 0.0
    %702 = vmatprep.subr.mxu0 0.0
    %703 = vmatpush1.xpose.msra.mxu0 0.0
    %704 = vmatprep.subr.mxu0 0.0
    %705 = vmatpush1.xpose.msra.mxu0 0.0
    %706 = vmatprep.subr.mxu0 0.0
    %707 = vmatpush1.xpose.msra.mxu0 0.0
    %708 = vmatprep.subr.mxu0 0.0
    %709 = vmatpush1.xpose.msra.mxu0 0.0
    %710 = vmatprep.subr.mxu0 0.0
    %711 = vmatpush1.xpose.msra.mxu0 0.0
    %712 = vmatprep.subr.mxu0 0.0
    %713 = vmatpush1.xpose.msra.mxu0 0.0
    %714 = vmatprep.subr.mxu0 0.0
    %715 = vmatpush1.xpose.msra.mxu0 0.0
    %716 = vmatprep.subr.mxu0 0.0
    %717 = vmatpush1.xpose.msra.mxu0 0.0
    %718 = vmatprep.subr.mxu0 0.0
    %719 = vmatpush1.xpose.msra.mxu0 0.0
    %720 = vmatprep.subr.mxu0 0.0
    %721 = vmatpush1.xpose.msra.mxu0 0.0
    %722 = vmatprep.subr.mxu0 0.0
    %723 = vmatpush1.xpose.msra.mxu0 0.0
    %724 = vmatprep.subr.mxu0 0.0
    %725 = vmatpush1.xpose.msra.mxu0 0.0
    %726 = vmatprep.subr.mxu0 0.0
    %727 = vmatpush1.xpose.msra.mxu0 0.0
    %728 = vmatprep.subr.mxu0 0.0
    %729 = vmatpush1.xpose.msra.mxu0 0.0
    %730 = vmatprep.subr.mxu0 0.0
    %731 = vmatpush1.xpose.msra.mxu0 0.0
    %732 = vmatprep.subr.mxu0 0.0
    %733 = vmatpush1.xpose.msra.mxu0 0.0
    %734 = vmatprep.subr.mxu0 0.0
    %735 = vmatpush1.xpose.msra.mxu0 0.0
    %736 = vmatprep.subr.mxu0 0.0
    %737 = vmatpush1.xpose.msra.mxu0 0.0
    %738 = vmatprep.subr.mxu0 0.0
    %739 = vmatpush1.xpose.msra.mxu0 0.0
    %740 = vmatprep.subr.mxu0 0.0
    %741 = vmatpush1.xpose.msra.mxu0 0.0
    %742 = vmatprep.mubr.f32.mxu0 0.0
    %743 = vmatmul.mubr.f32.gmra.mrb[0].mxu0 %v406
    %v744 = vpop.f32.mrb[0].mxu0
    %v745 = vadd.f32 %v673, %v744
    %v746 = vpop.f32.mrb[0].mxu0
    %747 = vmatprep.mubr.f32.mxu0 0.0
    %748 = vmatmul.mubr.f32.gmra.mrb[0].mxu0 %v409
    %v749 = vpop.f32.mrb[0].mxu0
    %v750 = vadd.f32 %v673, %v749
    %v751 = vpop.f32.mrb[0].mxu0
    %752 = vdwg.mxu0
    %s753 = scalar_lea.vmem %s3, 64
    %v754 = vld [vmem:[%s753] sm:$0xff]
    %s755 = scalar_lea.vmem %s4, 8
    %v756 = vld [vmem:[%s755] sm:$0x1]
    %v758 = vlaneseq
    %v759 = vshrl.u32 %v758, 7
    %v760 = vsub.s32 0, %v759
    %v761 = vrot.slane %v756, %v760
    %v764 = vsel %vm46, %v31, 0
    %v767 = vsel %vm46, %v32, 0
    %v770 = vsel %vm46, %v754, 0
    %772 = vmatprep.subr.mxu0 0.0
    %773 = vmatpush1.xpose.msra.mxu0 %v770
    %774 = vmatprep.subr.mxu0 0.0
    %775 = vmatpush1.xpose.msra.mxu0 0.0
    %776 = vmatprep.subr.mxu0 0.0
    %777 = vmatpush1.xpose.msra.mxu0 0.0
    %778 = vmatprep.subr.mxu0 0.0
    %779 = vmatpush1.xpose.msra.mxu0 0.0
    %780 = vmatprep.subr.mxu0 0.0
    %781 = vmatpush1.xpose.msra.mxu0 0.0
    %782 = vmatprep.subr.mxu0 0.0
    %783 = vmatpush1.xpose.msra.mxu0 0.0
    %784 = vmatprep.subr.mxu0 0.0
    %785 = vmatpush1.xpose.msra.mxu0 0.0
    %786 = vmatprep.subr.mxu0 0.0
    %787 = vmatpush1.xpose.msra.mxu0 0.0
    %788 = vmatprep.subr.mxu0 0.0
    %789 = vmatpush1.xpose.msra.mxu0 0.0
    %790 = vmatprep.subr.mxu0 0.0
    %791 = vmatpush1.xpose.msra.mxu0 0.0
    %792 = vmatprep.subr.mxu0 0.0
    %793 = vmatpush1.xpose.msra.mxu0 0.0
    %794 = vmatprep.subr.mxu0 0.0
    %795 = vmatpush1.xpose.msra.mxu0 0.0
    %796 = vmatprep.subr.mxu0 0.0
    %797 = vmatpush1.xpose.msra.mxu0 0.0
    %798 = vmatprep.subr.mxu0 0.0
    %799 = vmatpush1.xpose.msra.mxu0 0.0
    %800 = vmatprep.subr.mxu0 0.0
    %801 = vmatpush1.xpose.msra.mxu0 0.0
    %802 = vmatprep.subr.mxu0 0.0
    %803 = vmatpush1.xpose.msra.mxu0 0.0
    %804 = vmatprep.subr.mxu0 0.0
    %805 = vmatpush1.xpose.msra.mxu0 0.0
    %806 = vmatprep.subr.mxu0 0.0
    %807 = vmatpush1.xpose.msra.mxu0 0.0
    %808 = vmatprep.subr.mxu0 0.0
    %809 = vmatpush1.xpose.msra.mxu0 0.0
    %810 = vmatprep.subr.mxu0 0.0
    %811 = vmatpush1.xpose.msra.mxu0 0.0
    %812 = vmatprep.subr.mxu0 0.0
    %813 = vmatpush1.xpose.msra.mxu0 0.0
    %814 = vmatprep.subr.mxu0 0.0
    %815 = vmatpush1.xpose.msra.mxu0 0.0
    %816 = vmatprep.subr.mxu0 0.0
    %817 = vmatpush1.xpose.msra.mxu0 0.0
    %818 = vmatprep.subr.mxu0 0.0
    %819 = vmatpush1.xpose.msra.mxu0 0.0
    %820 = vmatprep.subr.mxu0 0.0
    %821 = vmatpush1.xpose.msra.mxu0 0.0
    %822 = vmatprep.subr.mxu0 0.0
    %823 = vmatpush1.xpose.msra.mxu0 0.0
    %824 = vmatprep.subr.mxu0 0.0
    %825 = vmatpush1.xpose.msra.mxu0 0.0
    %826 = vmatprep.subr.mxu0 0.0
    %827 = vmatpush1.xpose.msra.mxu0 0.0
    %828 = vmatprep.subr.mxu0 0.0
    %829 = vmatpush1.xpose.msra.mxu0 0.0
    %830 = vmatprep.subr.mxu0 0.0
    %831 = vmatpush1.xpose.msra.mxu0 0.0
    %832 = vmatprep.subr.mxu0 0.0
    %833 = vmatpush1.xpose.msra.mxu0 0.0
    %834 = vmatprep.subr.mxu0 0.0
    %835 = vmatpush1.xpose.msra.mxu0 0.0
    %836 = vmatprep.mubr.f32.mxu0 0.0
    %837 = vmatmul.mubr.f32.gmra.mrb[0].mxu0 %v764
    %v838 = vpop.f32.mrb[0].mxu0
    %v839 = vadd.f32 %v761, %v838
    %v840 = vpop.f32.mrb[0].mxu0
    %841 = vmatprep.mubr.f32.mxu0 0.0
    %842 = vmatmul.mubr.f32.gmra.mrb[0].mxu0 %v767
    %v843 = vpop.f32.mrb[0].mxu0
    %v844 = vadd.f32 %v761, %v843
    %v845 = vpop.f32.mrb[0].mxu0
    %846 = vdwg.mxu0
    %s847 = scalar_lea.vmem %s3, 72
    %v848 = vld [vmem:[%s847] sm:$0xff]
    %s849 = scalar_lea.vmem %s4, 9
    %v850 = vld [vmem:[%s849] sm:$0x1]
    %v852 = vlaneseq
    %v853 = vshrl.u32 %v852, 7
    %v854 = vsub.s32 0, %v853
    %v855 = vrot.slane %v850, %v854
    %v858 = vsel %vm46, %v848, 0
    %860 = vmatprep.subr.mxu0 0.0
    %861 = vmatpush1.xpose.msra.mxu0 %v858
    %862 = vmatprep.subr.mxu0 0.0
    %863 = vmatpush1.xpose.msra.mxu0 0.0
    %864 = vmatprep.subr.mxu0 0.0
    %865 = vmatpush1.xpose.msra.mxu0 0.0
    %866 = vmatprep.subr.mxu0 0.0
    %867 = vmatpush1.xpose.msra.mxu0 0.0
    %868 = vmatprep.subr.mxu0 0.0
    %869 = vmatpush1.xpose.msra.mxu0 0.0
    %870 = vmatprep.subr.mxu0 0.0
    %871 = vmatpush1.xpose.msra.mxu0 0.0
    %872 = vmatprep.subr.mxu0 0.0
    %873 = vmatpush1.xpose.msra.mxu0 0.0
    %874 = vmatprep.subr.mxu0 0.0
    %875 = vmatpush1.xpose.msra.mxu0 0.0
    %876 = vmatprep.subr.mxu0 0.0
    %877 = vmatpush1.xpose.msra.mxu0 0.0
    %878 = vmatprep.subr.mxu0 0.0
    %879 = vmatpush1.xpose.msra.mxu0 0.0
    %880 = vmatprep.subr.mxu0 0.0
    %881 = vmatpush1.xpose.msra.mxu0 0.0
    %882 = vmatprep.subr.mxu0 0.0
    %883 = vmatpush1.xpose.msra.mxu0 0.0
    %884 = vmatprep.subr.mxu0 0.0
    %885 = vmatpush1.xpose.msra.mxu0 0.0
    %886 = vmatprep.subr.mxu0 0.0
    %887 = vmatpush1.xpose.msra.mxu0 0.0
    %888 = vmatprep.subr.mxu0 0.0
    %889 = vmatpush1.xpose.msra.mxu0 0.0
    %890 = vmatprep.subr.mxu0 0.0
    %891 = vmatpush1.xpose.msra.mxu0 0.0
    %892 = vmatprep.subr.mxu0 0.0
    %893 = vmatpush1.xpose.msra.mxu0 0.0
    %894 = vmatprep.subr.mxu0 0.0
    %895 = vmatpush1.xpose.msra.mxu0 0.0
    %896 = vmatprep.subr.mxu0 0.0
    %897 = vmatpush1.xpose.msra.mxu0 0.0
    %898 = vmatprep.subr.mxu0 0.0
    %899 = vmatpush1.xpose.msra.mxu0 0.0
    %900 = vmatprep.subr.mxu0 0.0
    %901 = vmatpush1.xpose.msra.mxu0 0.0
    %902 = vmatprep.subr.mxu0 0.0
    %903 = vmatpush1.xpose.msra.mxu0 0.0
    %904 = vmatprep.subr.mxu0 0.0
    %905 = vmatpush1.xpose.msra.mxu0 0.0
    %906 = vmatprep.subr.mxu0 0.0
    %907 = vmatpush1.xpose.msra.mxu0 0.0
    %908 = vmatprep.subr.mxu0 0.0
    %909 = vmatpush1.xpose.msra.mxu0 0.0
    %910 = vmatprep.subr.mxu0 0.0
    %911 = vmatpush1.xpose.msra.mxu0 0.0
    %912 = vmatprep.subr.mxu0 0.0
    %913 = vmatpush1.xpose.msra.mxu0 0.0
    %914 = vmatprep.subr.mxu0 0.0
    %915 = vmatpush1.xpose.msra.mxu0 0.0
    %916 = vmatprep.subr.mxu0 0.0
    %917 = vmatpush1.xpose.msra.mxu0 0.0
    %918 = vmatprep.subr.mxu0 0.0
    %919 = vmatpush1.xpose.msra.mxu0 0.0
    %920 = vmatprep.subr.mxu0 0.0
    %921 = vmatpush1.xpose.msra.mxu0 0.0
    %922 = vmatprep.subr.mxu0 0.0
    %923 = vmatpush1.xpose.msra.mxu0 0.0
    %924 = vmatprep.mubr.f32.mxu0 0.0
    %925 = vmatmul.mubr.f32.gmra.mrb[0].mxu0 %v764
    %v926 = vpop.f32.mrb[0].mxu0
    %v927 = vadd.f32 %v855, %v926
    %v928 = vpop.f32.mrb[0].mxu0
    %929 = vmatprep.mubr.f32.mxu0 0.0
    %930 = vmatmul.mubr.f32.gmra.mrb[0].mxu0 %v767
    %v931 = vpop.f32.mrb[0].mxu0
    %v932 = vadd.f32 %v855, %v931
    %v933 = vpop.f32.mrb[0].mxu0
    %934 = vdwg.mxu0
    %s935 = scalar_lea.vmem %s3, 80
    %v936 = vld [vmem:[%s935] sm:$0xff]
    %s937 = scalar_lea.vmem %s4, 10
    %v938 = vld [vmem:[%s937] sm:$0x1]
    %v940 = vlaneseq
    %v941 = vshrl.u32 %v940, 7
    %v942 = vsub.s32 0, %v941
    %v943 = vrot.slane %v938, %v942
    %v946 = vsel %vm46, %v936, 0
    %948 = vmatprep.subr.mxu0 0.0
    %949 = vmatpush1.xpose.msra.mxu0 %v946
    %950 = vmatprep.subr.mxu0 0.0
    %951 = vmatpush1.xpose.msra.mxu0 0.0
    %952 = vmatprep.subr.mxu0 0.0
    %953 = vmatpush1.xpose.msra.mxu0 0.0
    %954 = vmatprep.subr.mxu0 0.0
    %955 = vmatpush1.xpose.msra.mxu0 0.0
    %956 = vmatprep.subr.mxu0 0.0
    %957 = vmatpush1.xpose.msra.mxu0 0.0
    %958 = vmatprep.subr.mxu0 0.0
    %959 = vmatpush1.xpose.msra.mxu0 0.0
    %960 = vmatprep.subr.mxu0 0.0
    %961 = vmatpush1.xpose.msra.mxu0 0.0
    %962 = vmatprep.subr.mxu0 0.0
    %963 = vmatpush1.xpose.msra.mxu0 0.0
    %964 = vmatprep.subr.mxu0 0.0
    %965 = vmatpush1.xpose.msra.mxu0 0.0
    %966 = vmatprep.subr.mxu0 0.0
    %967 = vmatpush1.xpose.msra.mxu0 0.0
    %968 = vmatprep.subr.mxu0 0.0
    %969 = vmatpush1.xpose.msra.mxu0 0.0
    %970 = vmatprep.subr.mxu0 0.0
    %971 = vmatpush1.xpose.msra.mxu0 0.0
    %972 = vmatprep.subr.mxu0 0.0
    %973 = vmatpush1.xpose.msra.mxu0 0.0
    %974 = vmatprep.subr.mxu0 0.0
    %975 = vmatpush1.xpose.msra.mxu0 0.0
    %976 = vmatprep.subr.mxu0 0.0
    %977 = vmatpush1.xpose.msra.mxu0 0.0
    %978 = vmatprep.subr.mxu0 0.0
    %979 = vmatpush1.xpose.msra.mxu0 0.0
    %980 = vmatprep.subr.mxu0 0.0
    %981 = vmatpush1.xpose.msra.mxu0 0.0
    %982 = vmatprep.subr.mxu0 0.0
    %983 = vmatpush1.xpose.msra.mxu0 0.0
    %984 = vmatprep.subr.mxu0 0.0
    %985 = vmatpush1.xpose.msra.mxu0 0.0
    %986 = vmatprep.subr.mxu0 0.0
    %987 = vmatpush1.xpose.msra.mxu0 0.0
    %988 = vmatprep.subr.mxu0 0.0
    %989 = vmatpush1.xpose.msra.mxu0 0.0
    %990 = vmatprep.subr.mxu0 0.0
    %991 = vmatpush1.xpose.msra.mxu0 0.0
    %992 = vmatprep.subr.mxu0 0.0
    %993 = vmatpush1.xpose.msra.mxu0 0.0
    %994 = vmatprep.subr.mxu0 0.0
    %995 = vmatpush1.xpose.msra.mxu0 0.0
    %996 = vmatprep.subr.mxu0 0.0
    %997 = vmatpush1.xpose.msra.mxu0 0.0
    %998 = vmatprep.subr.mxu0 0.0
    %999 = vmatpush1.xpose.msra.mxu0 0.0
    %1000 = vmatprep.subr.mxu0 0.0
    %1001 = vmatpush1.xpose.msra.mxu0 0.0
    %1002 = vmatprep.subr.mxu0 0.0
    %1003 = vmatpush1.xpose.msra.mxu0 0.0
    %1004 = vmatprep.subr.mxu0 0.0
    %1005 = vmatpush1.xpose.msra.mxu0 0.0
    %1006 = vmatprep.subr.mxu0 0.0
    %1007 = vmatpush1.xpose.msra.mxu0 0.0
    %1008 = vmatprep.subr.mxu0 0.0
    %1009 = vmatpush1.xpose.msra.mxu0 0.0
    %1010 = vmatprep.subr.mxu0 0.0
    %1011 = vmatpush1.xpose.msra.mxu0 0.0
    %1012 = vmatprep.mubr.f32.mxu0 0.0
    %1013 = vmatmul.mubr.f32.gmra.mrb[0].mxu0 %v764
    %v1014 = vpop.f32.mrb[0].mxu0
    %v1015 = vadd.f32 %v943, %v1014
    %v1016 = vpop.f32.mrb[0].mxu0
    %1017 = vmatprep.mubr.f32.mxu0 0.0
    %1018 = vmatmul.mubr.f32.gmra.mrb[0].mxu0 %v767
    %v1019 = vpop.f32.mrb[0].mxu0
    %v1020 = vadd.f32 %v943, %v1019
    %v1021 = vpop.f32.mrb[0].mxu0
    %1022 = vdwg.mxu0
    %s1023 = scalar_lea.vmem %s3, 88
    %v1024 = vld [vmem:[%s1023] sm:$0xff]
    %s1025 = scalar_lea.vmem %s4, 11
    %v1026 = vld [vmem:[%s1025] sm:$0x1]
    %v1028 = vlaneseq
    %v1029 = vshrl.u32 %v1028, 7
    %v1030 = vsub.s32 0, %v1029
    %v1031 = vrot.slane %v1026, %v1030
    %v1034 = vsel %vm46, %v1024, 0
    %1036 = vmatprep.subr.mxu0 0.0
    %1037 = vmatpush1.xpose.msra.mxu0 %v1034
    %1038 = vmatprep.subr.mxu0 0.0
    %1039 = vmatpush1.xpose.msra.mxu0 0.0
    %1040 = vmatprep.subr.mxu0 0.0
    %1041 = vmatpush1.xpose.msra.mxu0 0.0
    %1042 = vmatprep.subr.mxu0 0.0
    %1043 = vmatpush1.xpose.msra.mxu0 0.0
    %1044 = vmatprep.subr.mxu0 0.0
    %1045 = vmatpush1.xpose.msra.mxu0 0.0
    %1046 = vmatprep.subr.mxu0 0.0
    %1047 = vmatpush1.xpose.msra.mxu0 0.0
    %1048 = vmatprep.subr.mxu0 0.0
    %1049 = vmatpush1.xpose.msra.mxu0 0.0
    %1050 = vmatprep.subr.mxu0 0.0
    %1051 = vmatpush1.xpose.msra.mxu0 0.0
    %1052 = vmatprep.subr.mxu0 0.0
    %1053 = vmatpush1.xpose.msra.mxu0 0.0
    %1054 = vmatprep.subr.mxu0 0.0
    %1055 = vmatpush1.xpose.msra.mxu0 0.0
    %1056 = vmatprep.subr.mxu0 0.0
    %1057 = vmatpush1.xpose.msra.mxu0 0.0
    %1058 = vmatprep.subr.mxu0 0.0
    %1059 = vmatpush1.xpose.msra.mxu0 0.0
    %1060 = vmatprep.subr.mxu0 0.0
    %1061 = vmatpush1.xpose.msra.mxu0 0.0
    %1062 = vmatprep.subr.mxu0 0.0
    %1063 = vmatpush1.xpose.msra.mxu0 0.0
    %1064 = vmatprep.subr.mxu0 0.0
    %1065 = vmatpush1.xpose.msra.mxu0 0.0
    %1066 = vmatprep.subr.mxu0 0.0
    %1067 = vmatpush1.xpose.msra.mxu0 0.0
    %1068 = vmatprep.subr.mxu0 0.0
    %1069 = vmatpush1.xpose.msra.mxu0 0.0
    %1070 = vmatprep.subr.mxu0 0.0
    %1071 = vmatpush1.xpose.msra.mxu0 0.0
    %1072 = vmatprep.subr.mxu0 0.0
    %1073 = vmatpush1.xpose.msra.mxu0 0.0
    %1074 = vmatprep.subr.mxu0 0.0
    %1075 = vmatpush1.xpose.msra.mxu0 0.0
    %1076 = vmatprep.subr.mxu0 0.0
    %1077 = vmatpush1.xpose.msra.mxu0 0.0
    %1078 = vmatprep.subr.mxu0 0.0
    %1079 = vmatpush1.xpose.msra.mxu0 0.0
    %1080 = vmatprep.subr.mxu0 0.0
    %1081 = vmatpush1.xpose.msra.mxu0 0.0
    %1082 = vmatprep.subr.mxu0 0.0
    %1083 = vmatpush1.xpose.msra.mxu0 0.0
    %1084 = vmatprep.subr.mxu0 0.0
    %1085 = vmatpush1.xpose.msra.mxu0 0.0
    %1086 = vmatprep.subr.mxu0 0.0
    %1087 = vmatpush1.xpose.msra.mxu0 0.0
    %1088 = vmatprep.subr.mxu0 0.0
    %1089 = vmatpush1.xpose.msra.mxu0 0.0
    %1090 = vmatprep.subr.mxu0 0.0
    %1091 = vmatpush1.xpose.msra.mxu0 0.0
    %1092 = vmatprep.subr.mxu0 0.0
    %1093 = vmatpush1.xpose.msra.mxu0 0.0
    %1094 = vmatprep.subr.mxu0 0.0
    %1095 = vmatpush1.xpose.msra.mxu0 0.0
    %1096 = vmatprep.subr.mxu0 0.0
    %1097 = vmatpush1.xpose.msra.mxu0 0.0
    %1098 = vmatprep.subr.mxu0 0.0
    %1099 = vmatpush1.xpose.msra.mxu0 0.0
    %1100 = vmatprep.mubr.f32.mxu0 0.0
    %1101 = vmatmul.mubr.f32.gmra.mrb[0].mxu0 %v764
    %v1102 = vpop.f32.mrb[0].mxu0
    %v1103 = vadd.f32 %v1031, %v1102
    %v1104 = vpop.f32.mrb[0].mxu0
    %1105 = vmatprep.mubr.f32.mxu0 0.0
    %1106 = vmatmul.mubr.f32.gmra.mrb[0].mxu0 %v767
    %v1107 = vpop.f32.mrb[0].mxu0
    %v1108 = vadd.f32 %v1031, %v1107
    %v1109 = vpop.f32.mrb[0].mxu0
    %1110 = vdwg.mxu0
    %v1111 = vld [vmem:[%s6] sm:$0x1]
    %vm1112 = vcmask 64512
    %v1114 = vsel %vm1112, %v123, 0
    %v1117 = vsel %vm1112, %v481, 0
    %1119 = vmatprep.subr.mxu0 0.0
    %1120 = vmatpush1.xpose.msra.mxu0 %v1117
    %1121 = vmatprep.subr.mxu0 0.0
    %1122 = vmatpush1.xpose.msra.mxu0 0.0
    %1123 = vmatprep.subr.mxu0 0.0
    %1124 = vmatpush1.xpose.msra.mxu0 0.0
    %1125 = vmatprep.subr.mxu0 0.0
    %1126 = vmatpush1.xpose.msra.mxu0 0.0
    %1127 = vmatprep.subr.mxu0 0.0
    %1128 = vmatpush1.xpose.msra.mxu0 0.0
    %1129 = vmatprep.subr.mxu0 0.0
    %1130 = vmatpush1.xpose.msra.mxu0 0.0
    %1131 = vmatprep.subr.mxu0 0.0
    %1132 = vmatpush1.xpose.msra.mxu0 0.0
    %1133 = vmatprep.subr.mxu0 0.0
    %1134 = vmatpush1.xpose.msra.mxu0 0.0
    %1135 = vmatprep.subr.mxu0 0.0
    %1136 = vmatpush1.xpose.msra.mxu0 0.0
    %1137 = vmatprep.subr.mxu0 0.0
    %1138 = vmatpush1.xpose.msra.mxu0 0.0
    %1139 = vmatprep.subr.mxu0 0.0
    %1140 = vmatpush1.xpose.msra.mxu0 0.0
    %1141 = vmatprep.subr.mxu0 0.0
    %1142 = vmatpush1.xpose.msra.mxu0 0.0
    %1143 = vmatprep.subr.mxu0 0.0
    %1144 = vmatpush1.xpose.msra.mxu0 0.0
    %1145 = vmatprep.subr.mxu0 0.0
    %1146 = vmatpush1.xpose.msra.mxu0 0.0
    %1147 = vmatprep.subr.mxu0 0.0
    %1148 = vmatpush1.xpose.msra.mxu0 0.0
    %1149 = vmatprep.subr.mxu0 0.0
    %1150 = vmatpush1.xpose.msra.mxu0 0.0
    %1151 = vmatprep.subr.mxu0 0.0
    %1152 = vmatpush1.xpose.msra.mxu0 0.0
    %1153 = vmatprep.subr.mxu0 0.0
    %1154 = vmatpush1.xpose.msra.mxu0 0.0
    %1155 = vmatprep.subr.mxu0 0.0
    %1156 = vmatpush1.xpose.msra.mxu0 0.0
    %1157 = vmatprep.subr.mxu0 0.0
    %1158 = vmatpush1.xpose.msra.mxu0 0.0
    %1159 = vmatprep.subr.mxu0 0.0
    %1160 = vmatpush1.xpose.msra.mxu0 0.0
    %1161 = vmatprep.subr.mxu0 0.0
    %1162 = vmatpush1.xpose.msra.mxu0 0.0
    %1163 = vmatprep.subr.mxu0 0.0
    %1164 = vmatpush1.xpose.msra.mxu0 0.0
    %1165 = vmatprep.subr.mxu0 0.0
    %1166 = vmatpush1.xpose.msra.mxu0 0.0
    %1167 = vmatprep.subr.mxu0 0.0
    %1168 = vmatpush1.xpose.msra.mxu0 0.0
    %1169 = vmatprep.subr.mxu0 0.0
    %1170 = vmatpush1.xpose.msra.mxu0 0.0
    %1171 = vmatprep.subr.mxu0 0.0
    %1172 = vmatpush1.xpose.msra.mxu0 0.0
    %1173 = vmatprep.subr.mxu0 0.0
    %1174 = vmatpush1.xpose.msra.mxu0 0.0
    %1175 = vmatprep.subr.mxu0 0.0
    %1176 = vmatpush1.xpose.msra.mxu0 0.0
    %1177 = vmatprep.subr.mxu0 0.0
    %1178 = vmatpush1.xpose.msra.mxu0 0.0
    %1179 = vmatprep.subr.mxu0 0.0
    %1180 = vmatpush1.xpose.msra.mxu0 0.0
    %1181 = vmatprep.subr.mxu0 0.0
    %1182 = vmatpush1.xpose.msra.mxu0 0.0
    %1183 = vmatprep.mubr.f32.mxu0 0.0
    %1184 = vmatmul.mubr.f32.gmra.mrb[0].mxu0 %v1114
    %v1185 = vpop.f32.mrb[0].mxu0
    %v1186 = vadd.f32 0.0, %v1185
    %v1187 = vpop.f32.mrb[0].mxu0
    %1188 = vdwg.mxu0
    %v1189 = vsel %vm37, %v1186, 0.0
    %v1190 = vsel %vm1112, %v1189, -inf
    %1191 = vmax.xlane.f32.xlu0 %v1190
    %v1192 = vpop.xlane.xlu0 %1191
    %v1193 = vsub.f32 %v1189, %v1192
    %v1194 = vmul.f32 %v1193, 1.442695
    %v1195 = vpow.pop %v1194
    %v1196 = vsel %vm1112, %v1195, 0.0
    %1197 = vadd.xlane.f32.xlu0 %v1196
    %v1198 = vpop.xlane.xlu0 %1197
    %v1199 = vrcp.pop %v1198
    %v1200 = vmul.f32 %v1195, %v1199
    %v1202 = vsel %vm1112, %v1200, 0
    %1204 = vmatprep.subr.mxu0 0.0
    %1205 = vmatpush1.msra.mxu0 %v839
    %1206 = vmatprep.subr.mxu0 0.0
    %1207 = vmatpush1.msra.mxu0 0.0
    %1208 = vmatprep.subr.mxu0 0.0
    %1209 = vmatpush1.msra.mxu0 0.0
    %1210 = vmatprep.subr.mxu0 0.0
    %1211 = vmatpush1.msra.mxu0 0.0
    %1212 = vmatprep.subr.mxu0 0.0
    %1213 = vmatpush1.msra.mxu0 0.0
    %1214 = vmatprep.subr.mxu0 0.0
    %1215 = vmatpush1.msra.mxu0 0.0
    %1216 = vmatprep.subr.mxu0 0.0
    %1217 = vmatpush1.msra.mxu0 0.0
    %1218 = vmatprep.subr.mxu0 0.0
    %1219 = vmatpush1.msra.mxu0 0.0
    %1220 = vmatprep.subr.mxu0 0.0
    %1221 = vmatpush1.msra.mxu0 0.0
    %1222 = vmatprep.subr.mxu0 0.0
    %1223 = vmatpush1.msra.mxu0 0.0
    %1224 = vmatprep.subr.mxu0 0.0
    %1225 = vmatpush1.msra.mxu0 0.0
    %1226 = vmatprep.subr.mxu0 0.0
    %1227 = vmatpush1.msra.mxu0 0.0
    %1228 = vmatprep.subr.mxu0 0.0
    %1229 = vmatpush1.msra.mxu0 0.0
    %1230 = vmatprep.subr.mxu0 0.0
    %1231 = vmatpush1.msra.mxu0 0.0
    %1232 = vmatprep.subr.mxu0 0.0
    %1233 = vmatpush1.msra.mxu0 0.0
    %1234 = vmatprep.subr.mxu0 0.0
    %1235 = vmatpush1.msra.mxu0 0.0
    %1236 = vmatprep.subr.mxu0 0.0
    %1237 = vmatpush1.msra.mxu0 0.0
    %1238 = vmatprep.subr.mxu0 0.0
    %1239 = vmatpush1.msra.mxu0 0.0
    %1240 = vmatprep.subr.mxu0 0.0
    %1241 = vmatpush1.msra.mxu0 0.0
    %1242 = vmatprep.subr.mxu0 0.0
    %1243 = vmatpush1.msra.mxu0 0.0
    %1244 = vmatprep.subr.mxu0 0.0
    %1245 = vmatpush1.msra.mxu0 0.0
    %1246 = vmatprep.subr.mxu0 0.0
    %1247 = vmatpush1.msra.mxu0 0.0
    %1248 = vmatprep.subr.mxu0 0.0
    %1249 = vmatpush1.msra.mxu0 0.0
    %1250 = vmatprep.subr.mxu0 0.0
    %1251 = vmatpush1.msra.mxu0 0.0
    %1252 = vmatprep.subr.mxu0 0.0
    %1253 = vmatpush1.msra.mxu0 0.0
    %1254 = vmatprep.subr.mxu0 0.0
    %1255 = vmatpush1.msra.mxu0 0.0
    %1256 = vmatprep.subr.mxu0 0.0
    %1257 = vmatpush1.msra.mxu0 0.0
    %1258 = vmatprep.subr.mxu0 0.0
    %1259 = vmatpush1.msra.mxu0 0.0
    %1260 = vmatprep.subr.mxu0 0.0
    %1261 = vmatpush1.msra.mxu0 0.0
    %1262 = vmatprep.subr.mxu0 0.0
    %1263 = vmatpush1.msra.mxu0 0.0
    %1264 = vmatprep.subr.mxu0 0.0
    %1265 = vmatpush1.msra.mxu0 0.0
    %1266 = vmatprep.subr.mxu0 0.0
    %1267 = vmatpush1.msra.mxu0 0.0
    %1268 = vmatprep.mubr.f32.mxu0 0.0
    %1269 = vmatmul.mubr.f32.gmra.mrb[0].mxu0 %v1202
    %v1270 = vpop.f32.mrb[0].mxu0
    %v1271 = vadd.f32 0.0, %v1270
    %v1272 = vpop.f32.mrb[0].mxu0
    %1273 = vdwg.mxu0
    %v1274 = vld [vmem:[%s5] sm:$0xff]
    %v1275 = vld [vmem:[%s5 + $0x8] sm:$0xff]
    %v1276 = vld [vmem:[%s5 + $0x10] sm:$0xff]
    %v1277 = vld [vmem:[%s5 + $0x18] sm:$0xff]
    %v1279 = vsel %vm1112, %v211, 0
    %v1282 = vsel %vm1112, %v569, 0
    %1284 = vmatprep.subr.mxu0 0.0
    %1285 = vmatpush1.xpose.msra.mxu0 %v1282
    %1286 = vmatprep.subr.mxu0 0.0
    %1287 = vmatpush1.xpose.msra.mxu0 0.0
    %1288 = vmatprep.subr.mxu0 0.0
    %1289 = vmatpush1.xpose.msra.mxu0 0.0
    %1290 = vmatprep.subr.mxu0 0.0
    %1291 = vmatpush1.xpose.msra.mxu0 0.0
    %1292 = vmatprep.subr.mxu0 0.0
    %1293 = vmatpush1.xpose.msra.mxu0 0.0
    %1294 = vmatprep.subr.mxu0 0.0
    %1295 = vmatpush1.xpose.msra.mxu0 0.0
    %1296 = vmatprep.subr.mxu0 0.0
    %1297 = vmatpush1.xpose.msra.mxu0 0.0
    %1298 = vmatprep.subr.mxu0 0.0
    %1299 = vmatpush1.xpose.msra.mxu0 0.0
    %1300 = vmatprep.subr.mxu0 0.0
    %1301 = vmatpush1.xpose.msra.mxu0 0.0
    %1302 = vmatprep.subr.mxu0 0.0
    %1303 = vmatpush1.xpose.msra.mxu0 0.0
    %1304 = vmatprep.subr.mxu0 0.0
    %1305 = vmatpush1.xpose.msra.mxu0 0.0
    %1306 = vmatprep.subr.mxu0 0.0
    %1307 = vmatpush1.xpose.msra.mxu0 0.0
    %1308 = vmatprep.subr.mxu0 0.0
    %1309 = vmatpush1.xpose.msra.mxu0 0.0
    %1310 = vmatprep.subr.mxu0 0.0
    %1311 = vmatpush1.xpose.msra.mxu0 0.0
    %1312 = vmatprep.subr.mxu0 0.0
    %1313 = vmatpush1.xpose.msra.mxu0 0.0
    %1314 = vmatprep.subr.mxu0 0.0
    %1315 = vmatpush1.xpose.msra.mxu0 0.0
    %1316 = vmatprep.subr.mxu0 0.0
    %1317 = vmatpush1.xpose.msra.mxu0 0.0
    %1318 = vmatprep.subr.mxu0 0.0
    %1319 = vmatpush1.xpose.msra.mxu0 0.0
    %1320 = vmatprep.subr.mxu0 0.0
    %1321 = vmatpush1.xpose.msra.mxu0 0.0
    %1322 = vmatprep.subr.mxu0 0.0
    %1323 = vmatpush1.xpose.msra.mxu0 0.0
    %1324 = vmatprep.subr.mxu0 0.0
    %1325 = vmatpush1.xpose.msra.mxu0 0.0
    %1326 = vmatprep.subr.mxu0 0.0
    %1327 = vmatpush1.xpose.msra.mxu0 0.0
    %1328 = vmatprep.subr.mxu0 0.0
    %1329 = vmatpush1.xpose.msra.mxu0 0.0
    %1330 = vmatprep.subr.mxu0 0.0
    %1331 = vmatpush1.xpose.msra.mxu0 0.0
    %1332 = vmatprep.subr.mxu0 0.0
    %1333 = vmatpush1.xpose.msra.mxu0 0.0
    %1334 = vmatprep.subr.mxu0 0.0
    %1335 = vmatpush1.xpose.msra.mxu0 0.0
    %1336 = vmatprep.subr.mxu0 0.0
    %1337 = vmatpush1.xpose.msra.mxu0 0.0
    %1338 = vmatprep.subr.mxu0 0.0
    %1339 = vmatpush1.xpose.msra.mxu0 0.0
    %1340 = vmatprep.subr.mxu0 0.0
    %1341 = vmatpush1.xpose.msra.mxu0 0.0
    %1342 = vmatprep.subr.mxu0 0.0
    %1343 = vmatpush1.xpose.msra.mxu0 0.0
    %1344 = vmatprep.subr.mxu0 0.0
    %1345 = vmatpush1.xpose.msra.mxu0 0.0
    %1346 = vmatprep.subr.mxu0 0.0
    %1347 = vmatpush1.xpose.msra.mxu0 0.0
    %1348 = vmatprep.mubr.f32.mxu0 0.0
    %1349 = vmatmul.mubr.f32.gmra.mrb[0].mxu0 %v1279
    %v1350 = vpop.f32.mrb[0].mxu0
    %v1351 = vadd.f32 0.0, %v1350
    %v1352 = vpop.f32.mrb[0].mxu0
    %1353 = vdwg.mxu0
    %v1354 = vsel %vm37, %v1351, 0.0
    %v1355 = vsel %vm1112, %v1354, -inf
    %1356 = vmax.xlane.f32.xlu0 %v1355
    %v1357 = vpop.xlane.xlu0 %1356
    %v1358 = vsub.f32 %v1354, %v1357
    %v1359 = vmul.f32 %v1358, 1.442695
    %v1360 = vpow.pop %v1359
    %v1361 = vsel %vm1112, %v1360, 0.0
    %1362 = vadd.xlane.f32.xlu0 %v1361
    %v1363 = vpop.xlane.xlu0 %1362
    %v1364 = vrcp.pop %v1363
    %v1365 = vmul.f32 %v1360, %v1364
    %v1367 = vsel %vm1112, %v1365, 0
    %1369 = vmatprep.subr.mxu0 0.0
    %1370 = vmatpush1.msra.mxu0 %v927
    %1371 = vmatprep.subr.mxu0 0.0
    %1372 = vmatpush1.msra.mxu0 0.0
    %1373 = vmatprep.subr.mxu0 0.0
    %1374 = vmatpush1.msra.mxu0 0.0
    %1375 = vmatprep.subr.mxu0 0.0
    %1376 = vmatpush1.msra.mxu0 0.0
    %1377 = vmatprep.subr.mxu0 0.0
    %1378 = vmatpush1.msra.mxu0 0.0
    %1379 = vmatprep.subr.mxu0 0.0
    %1380 = vmatpush1.msra.mxu0 0.0
    %1381 = vmatprep.subr.mxu0 0.0
    %1382 = vmatpush1.msra.mxu0 0.0
    %1383 = vmatprep.subr.mxu0 0.0
    %1384 = vmatpush1.msra.mxu0 0.0
    %1385 = vmatprep.subr.mxu0 0.0
    %1386 = vmatpush1.msra.mxu0 0.0
    %1387 = vmatprep.subr.mxu0 0.0
    %1388 = vmatpush1.msra.mxu0 0.0
    %1389 = vmatprep.subr.mxu0 0.0
    %1390 = vmatpush1.msra.mxu0 0.0
    %1391 = vmatprep.subr.mxu0 0.0
    %1392 = vmatpush1.msra.mxu0 0.0
    %1393 = vmatprep.subr.mxu0 0.0
    %1394 = vmatpush1.msra.mxu0 0.0
    %1395 = vmatprep.subr.mxu0 0.0
    %1396 = vmatpush1.msra.mxu0 0.0
    %1397 = vmatprep.subr.mxu0 0.0
    %1398 = vmatpush1.msra.mxu0 0.0
    %1399 = vmatprep.subr.mxu0 0.0
    %1400 = vmatpush1.msra.mxu0 0.0
    %1401 = vmatprep.subr.mxu0 0.0
    %1402 = vmatpush1.msra.mxu0 0.0
    %1403 = vmatprep.subr.mxu0 0.0
    %1404 = vmatpush1.msra.mxu0 0.0
    %1405 = vmatprep.subr.mxu0 0.0
    %1406 = vmatpush1.msra.mxu0 0.0
    %1407 = vmatprep.subr.mxu0 0.0
    %1408 = vmatpush1.msra.mxu0 0.0
    %1409 = vmatprep.subr.mxu0 0.0
    %1410 = vmatpush1.msra.mxu0 0.0
    %1411 = vmatprep.subr.mxu0 0.0
    %1412 = vmatpush1.msra.mxu0 0.0
    %1413 = vmatprep.subr.mxu0 0.0
    %1414 = vmatpush1.msra.mxu0 0.0
    %1415 = vmatprep.subr.mxu0 0.0
    %1416 = vmatpush1.msra.mxu0 0.0
    %1417 = vmatprep.subr.mxu0 0.0
    %1418 = vmatpush1.msra.mxu0 0.0
    %1419 = vmatprep.subr.mxu0 0.0
    %1420 = vmatpush1.msra.mxu0 0.0
    %1421 = vmatprep.subr.mxu0 0.0
    %1422 = vmatpush1.msra.mxu0 0.0
    %1423 = vmatprep.subr.mxu0 0.0
    %1424 = vmatpush1.msra.mxu0 0.0
    %1425 = vmatprep.subr.mxu0 0.0
    %1426 = vmatpush1.msra.mxu0 0.0
    %1427 = vmatprep.subr.mxu0 0.0
    %1428 = vmatpush1.msra.mxu0 0.0
    %1429 = vmatprep.subr.mxu0 0.0
    %1430 = vmatpush1.msra.mxu0 0.0
    %1431 = vmatprep.subr.mxu0 0.0
    %1432 = vmatpush1.msra.mxu0 0.0
    %1433 = vmatprep.mubr.f32.mxu0 0.0
    %1434 = vmatmul.mubr.f32.gmra.mrb[0].mxu0 %v1367
    %v1435 = vpop.f32.mrb[0].mxu0
    %v1436 = vadd.f32 0.0, %v1435
    %v1437 = vpop.f32.mrb[0].mxu0
    %1438 = vdwg.mxu0
    %s1439 = scalar_lea.vmem %s5, 32
    %v1440 = vld [vmem:[%s1439] sm:$0xff]
    %v1441 = vld [vmem:[%s1439 + $0x8] sm:$0xff]
    %v1442 = vld [vmem:[%s1439 + $0x10] sm:$0xff]
    %v1443 = vld [vmem:[%s1439 + $0x18] sm:$0xff]
    %v1445 = vsel %vm1112, %v1436, 0
    %v1448 = vsel %vm1112, %v1440, 0
    %v1451 = vsel %vm1112, %v1441, 0
    %v1454 = vsel %vm1112, %v1442, 0
    %v1457 = vsel %vm1112, %v1443, 0
    %1459 = vmatprep.subr.mxu0 0.0
    %1460 = vmatpush1.xpose.msra.mxu0 %v1448
    %1461 = vmatprep.subr.mxu0 0.0
    %1462 = vmatpush1.xpose.msra.mxu0 %v1451
    %1463 = vmatprep.subr.mxu0 0.0
    %1464 = vmatpush1.xpose.msra.mxu0 %v1454
    %1465 = vmatprep.subr.mxu0 0.0
    %1466 = vmatpush1.xpose.msra.mxu0 %v1457
    %1467 = vmatprep.subr.mxu0 0.0
    %1468 = vmatpush1.xpose.msra.mxu0 0.0
    %1469 = vmatprep.subr.mxu0 0.0
    %1470 = vmatpush1.xpose.msra.mxu0 0.0
    %1471 = vmatprep.subr.mxu0 0.0
    %1472 = vmatpush1.xpose.msra.mxu0 0.0
    %1473 = vmatprep.subr.mxu0 0.0
    %1474 = vmatpush1.xpose.msra.mxu0 0.0
    %1475 = vmatprep.subr.mxu0 0.0
    %1476 = vmatpush1.xpose.msra.mxu0 0.0
    %1477 = vmatprep.subr.mxu0 0.0
    %1478 = vmatpush1.xpose.msra.mxu0 0.0
    %1479 = vmatprep.subr.mxu0 0.0
    %1480 = vmatpush1.xpose.msra.mxu0 0.0
    %1481 = vmatprep.subr.mxu0 0.0
    %1482 = vmatpush1.xpose.msra.mxu0 0.0
    %1483 = vmatprep.subr.mxu0 0.0
    %1484 = vmatpush1.xpose.msra.mxu0 0.0
    %1485 = vmatprep.subr.mxu0 0.0
    %1486 = vmatpush1.xpose.msra.mxu0 0.0
    %1487 = vmatprep.subr.mxu0 0.0
    %1488 = vmatpush1.xpose.msra.mxu0 0.0
    %1489 = vmatprep.subr.mxu0 0.0
    %1490 = vmatpush1.xpose.msra.mxu0 0.0
    %1491 = vmatprep.subr.mxu0 0.0
    %1492 = vmatpush1.xpose.msra.mxu0 0.0
    %1493 = vmatprep.subr.mxu0 0.0
    %1494 = vmatpush1.xpose.msra.mxu0 0.0
    %1495 = vmatprep.subr.mxu0 0.0
    %1496 = vmatpush1.xpose.msra.mxu0 0.0
    %1497 = vmatprep.subr.mxu0 0.0
    %1498 = vmatpush1.xpose.msra.mxu0 0.0
    %1499 = vmatprep.subr.mxu0 0.0
    %1500 = vmatpush1.xpose.msra.mxu0 0.0
    %1501 = vmatprep.subr.mxu0 0.0
    %1502 = vmatpush1.xpose.msra.mxu0 0.0
    %1503 = vmatprep.subr.mxu0 0.0
    %1504 = vmatpush1.xpose.msra.mxu0 0.0
    %1505 = vmatprep.subr.mxu0 0.0
    %1506 = vmatpush1.xpose.msra.mxu0 0.0
    %1507 = vmatprep.subr.mxu0 0.0
    %1508 = vmatpush1.xpose.msra.mxu0 0.0
    %1509 = vmatprep.subr.mxu0 0.0
    %1510 = vmatpush1.xpose.msra.mxu0 0.0
    %1511 = vmatprep.subr.mxu0 0.0
    %1512 = vmatpush1.xpose.msra.mxu0 0.0
    %1513 = vmatprep.subr.mxu0 0.0
    %1514 = vmatpush1.xpose.msra.mxu0 0.0
    %1515 = vmatprep.subr.mxu0 0.0
    %1516 = vmatpush1.xpose.msra.mxu0 0.0
    %1517 = vmatprep.subr.mxu0 0.0
    %1518 = vmatpush1.xpose.msra.mxu0 0.0
    %1519 = vmatprep.subr.mxu0 0.0
    %1520 = vmatpush1.xpose.msra.mxu0 0.0
    %1521 = vmatprep.subr.mxu0 0.0
    %1522 = vmatpush1.xpose.msra.mxu0 0.0
    %1523 = vmatprep.mubr.f32.mxu0 0.0
    %1524 = vmatmul.mubr.f32.gmra.mrb[0].mxu0 %v1445
    %v1525 = vpop.f32.mrb[0].mxu0
    %v1526 = vadd.f32 0.0, %v1525
    %v1527 = vpop.f32.mrb[0].mxu0
    %1528 = vdwg.mxu0
    %v1530 = vsel %vm1112, %v1271, 0
    %v1533 = vsel %vm1112, %v1274, 0
    %v1536 = vsel %vm1112, %v1275, 0
    %v1539 = vsel %vm1112, %v1276, 0
    %v1542 = vsel %vm1112, %v1277, 0
    %1544 = vmatprep.subr.mxu0 0.0
    %1545 = vmatpush1.xpose.msra.mxu0 %v1533
    %1546 = vmatprep.subr.mxu0 0.0
    %1547 = vmatpush1.xpose.msra.mxu0 %v1536
    %1548 = vmatprep.subr.mxu0 0.0
    %1549 = vmatpush1.xpose.msra.mxu0 %v1539
    %1550 = vmatprep.subr.mxu0 0.0
    %1551 = vmatpush1.xpose.msra.mxu0 %v1542
    %1552 = vmatprep.subr.mxu0 0.0
    %1553 = vmatpush1.xpose.msra.mxu0 0.0
    %1554 = vmatprep.subr.mxu0 0.0
    %1555 = vmatpush1.xpose.msra.mxu0 0.0
    %1556 = vmatprep.subr.mxu0 0.0
    %1557 = vmatpush1.xpose.msra.mxu0 0.0
    %1558 = vmatprep.subr.mxu0 0.0
    %1559 = vmatpush1.xpose.msra.mxu0 0.0
    %1560 = vmatprep.subr.mxu0 0.0
    %1561 = vmatpush1.xpose.msra.mxu0 0.0
    %1562 = vmatprep.subr.mxu0 0.0
    %1563 = vmatpush1.xpose.msra.mxu0 0.0
    %1564 = vmatprep.subr.mxu0 0.0
    %1565 = vmatpush1.xpose.msra.mxu0 0.0
    %1566 = vmatprep.subr.mxu0 0.0
    %1567 = vmatpush1.xpose.msra.mxu0 0.0
    %1568 = vmatprep.subr.mxu0 0.0
    %1569 = vmatpush1.xpose.msra.mxu0 0.0
    %1570 = vmatprep.subr.mxu0 0.0
    %1571 = vmatpush1.xpose.msra.mxu0 0.0
    %1572 = vmatprep.subr.mxu0 0.0
    %1573 = vmatpush1.xpose.msra.mxu0 0.0
    %1574 = vmatprep.subr.mxu0 0.0
    %1575 = vmatpush1.xpose.msra.mxu0 0.0
    %1576 = vmatprep.subr.mxu0 0.0
    %1577 = vmatpush1.xpose.msra.mxu0 0.0
    %1578 = vmatprep.subr.mxu0 0.0
    %1579 = vmatpush1.xpose.msra.mxu0 0.0
    %1580 = vmatprep.subr.mxu0 0.0
    %1581 = vmatpush1.xpose.msra.mxu0 0.0
    %1582 = vmatprep.subr.mxu0 0.0
    %1583 = vmatpush1.xpose.msra.mxu0 0.0
    %1584 = vmatprep.subr.mxu0 0.0
    %1585 = vmatpush1.xpose.msra.mxu0 0.0
    %1586 = vmatprep.subr.mxu0 0.0
    %1587 = vmatpush1.xpose.msra.mxu0 0.0
    %1588 = vmatprep.subr.mxu0 0.0
    %1589 = vmatpush1.xpose.msra.mxu0 0.0
    %1590 = vmatprep.subr.mxu0 0.0
    %1591 = vmatpush1.xpose.msra.mxu0 0.0
    %1592 = vmatprep.subr.mxu0 0.0
    %1593 = vmatpush1.xpose.msra.mxu0 0.0
    %1594 = vmatprep.subr.mxu0 0.0
    %1595 = vmatpush1.xpose.msra.mxu0 0.0
    %1596 = vmatprep.subr.mxu0 0.0
    %1597 = vmatpush1.xpose.msra.mxu0 0.0
    %1598 = vmatprep.subr.mxu0 0.0
    %1599 = vmatpush1.xpose.msra.mxu0 0.0
    %1600 = vmatprep.subr.mxu0 0.0
    %1601 = vmatpush1.xpose.msra.mxu0 0.0
    %1602 = vmatprep.subr.mxu0 0.0
    %1603 = vmatpush1.xpose.msra.mxu0 0.0
    %1604 = vmatprep.subr.mxu0 0.0
    %1605 = vmatpush1.xpose.msra.mxu0 0.0
    %1606 = vmatprep.subr.mxu0 0.0
    %1607 = vmatpush1.xpose.msra.mxu0 0.0
    %1608 = vmatprep.mubr.f32.mxu0 0.0
    %1609 = vmatmul.mubr.f32.gmra.mrb[0].mxu0 %v1530
    %v1610 = vpop.f32.mrb[0].mxu0
    %v1611 = vadd.f32 %v1526, %v1610
    %v1612 = vpop.f32.mrb[0].mxu0
    %1613 = vdwg.mxu0
    %v1615 = vsel %vm1112, %v299, 0
    %v1618 = vsel %vm1112, %v657, 0
    %1620 = vmatprep.subr.mxu0 0.0
    %1621 = vmatpush1.xpose.msra.mxu0 %v1618
    %1622 = vmatprep.subr.mxu0 0.0
    %1623 = vmatpush1.xpose.msra.mxu0 0.0
    %1624 = vmatprep.subr.mxu0 0.0
    %1625 = vmatpush1.xpose.msra.mxu0 0.0
    %1626 = vmatprep.subr.mxu0 0.0
    %1627 = vmatpush1.xpose.msra.mxu0 0.0
    %1628 = vmatprep.subr.mxu0 0.0
    %1629 = vmatpush1.xpose.msra.mxu0 0.0
    %1630 = vmatprep.subr.mxu0 0.0
    %1631 = vmatpush1.xpose.msra.mxu0 0.0
    %1632 = vmatprep.subr.mxu0 0.0
    %1633 = vmatpush1.xpose.msra.mxu0 0.0
    %1634 = vmatprep.subr.mxu0 0.0
    %1635 = vmatpush1.xpose.msra.mxu0 0.0
    %1636 = vmatprep.subr.mxu0 0.0
    %1637 = vmatpush1.xpose.msra.mxu0 0.0
    %1638 = vmatprep.subr.mxu0 0.0
    %1639 = vmatpush1.xpose.msra.mxu0 0.0
    %1640 = vmatprep.subr.mxu0 0.0
    %1641 = vmatpush1.xpose.msra.mxu0 0.0
    %1642 = vmatprep.subr.mxu0 0.0
    %1643 = vmatpush1.xpose.msra.mxu0 0.0
    %1644 = vmatprep.subr.mxu0 0.0
    %1645 = vmatpush1.xpose.msra.mxu0 0.0
    %1646 = vmatprep.subr.mxu0 0.0
    %1647 = vmatpush1.xpose.msra.mxu0 0.0
    %1648 = vmatprep.subr.mxu0 0.0
    %1649 = vmatpush1.xpose.msra.mxu0 0.0
    %1650 = vmatprep.subr.mxu0 0.0
    %1651 = vmatpush1.xpose.msra.mxu0 0.0
    %1652 = vmatprep.subr.mxu0 0.0
    %1653 = vmatpush1.xpose.msra.mxu0 0.0
    %1654 = vmatprep.subr.mxu0 0.0
    %1655 = vmatpush1.xpose.msra.mxu0 0.0
    %1656 = vmatprep.subr.mxu0 0.0
    %1657 = vmatpush1.xpose.msra.mxu0 0.0
    %1658 = vmatprep.subr.mxu0 0.0
    %1659 = vmatpush1.xpose.msra.mxu0 0.0
    %1660 = vmatprep.subr.mxu0 0.0
    %1661 = vmatpush1.xpose.msra.mxu0 0.0
    %1662 = vmatprep.subr.mxu0 0.0
    %1663 = vmatpush1.xpose.msra.mxu0 0.0
    %1664 = vmatprep.subr.mxu0 0.0
    %1665 = vmatpush1.xpose.msra.mxu0 0.0
    %1666 = vmatprep.subr.mxu0 0.0
    %1667 = vmatpush1.xpose.msra.mxu0 0.0
    %1668 = vmatprep.subr.mxu0 0.0
    %1669 = vmatpush1.xpose.msra.mxu0 0.0
    %1670 = vmatprep.subr.mxu0 0.0
    %1671 = vmatpush1.xpose.msra.mxu0 0.0
    %1672 = vmatprep.subr.mxu0 0.0
    %1673 = vmatpush1.xpose.msra.mxu0 0.0
    %1674 = vmatprep.subr.mxu0 0.0
    %1675 = vmatpush1.xpose.msra.mxu0 0.0
    %1676 = vmatprep.subr.mxu0 0.0
    %1677 = vmatpush1.xpose.msra.mxu0 0.0
    %1678 = vmatprep.subr.mxu0 0.0
    %1679 = vmatpush1.xpose.msra.mxu0 0.0
    %1680 = vmatprep.subr.mxu0 0.0
    %1681 = vmatpush1.xpose.msra.mxu0 0.0
    %1682 = vmatprep.subr.mxu0 0.0
    %1683 = vmatpush1.xpose.msra.mxu0 0.0
    %1684 = vmatprep.mubr.f32.mxu0 0.0
    %1685 = vmatmul.mubr.f32.gmra.mrb[0].mxu0 %v1615
    %v1686 = vpop.f32.mrb[0].mxu0
    %v1687 = vadd.f32 0.0, %v1686
    %v1688 = vpop.f32.mrb[0].mxu0
    %1689 = vdwg.mxu0
    %v1690 = vsel %vm37, %v1687, 0.0
    %v1691 = vsel %vm1112, %v1690, -inf
    %1692 = vmax.xlane.f32.xlu0 %v1691
    %v1693 = vpop.xlane.xlu0 %1692
    %v1694 = vsub.f32 %v1690, %v1693
    %v1695 = vmul.f32 %v1694, 1.442695
    %v1696 = vpow.pop %v1695
    %v1697 = vsel %vm1112, %v1696, 0.0
    %1698 = vadd.xlane.f32.xlu0 %v1697
    %v1699 = vpop.xlane.xlu0 %1698
    %v1700 = vrcp.pop %v1699
    %v1701 = vmul.f32 %v1696, %v1700
    %v1703 = vsel %vm1112, %v1701, 0
    %1705 = vmatprep.subr.mxu0 0.0
    %1706 = vmatpush1.msra.mxu0 %v1015
    %1707 = vmatprep.subr.mxu0 0.0
    %1708 = vmatpush1.msra.mxu0 0.0
    %1709 = vmatprep.subr.mxu0 0.0
    %1710 = vmatpush1.msra.mxu0 0.0
    %1711 = vmatprep.subr.mxu0 0.0
    %1712 = vmatpush1.msra.mxu0 0.0
    %1713 = vmatprep.subr.mxu0 0.0
    %1714 = vmatpush1.msra.mxu0 0.0
    %1715 = vmatprep.subr.mxu0 0.0
    %1716 = vmatpush1.msra.mxu0 0.0
    %1717 = vmatprep.subr.mxu0 0.0
    %1718 = vmatpush1.msra.mxu0 0.0
    %1719 = vmatprep.subr.mxu0 0.0
    %1720 = vmatpush1.msra.mxu0 0.0
    %1721 = vmatprep.subr.mxu0 0.0
    %1722 = vmatpush1.msra.mxu0 0.0
    %1723 = vmatprep.subr.mxu0 0.0
    %1724 = vmatpush1.msra.mxu0 0.0
    %1725 = vmatprep.subr.mxu0 0.0
    %1726 = vmatpush1.msra.mxu0 0.0
    %1727 = vmatprep.subr.mxu0 0.0
    %1728 = vmatpush1.msra.mxu0 0.0
    %1729 = vmatprep.subr.mxu0 0.0
    %1730 = vmatpush1.msra.mxu0 0.0
    %1731 = vmatprep.subr.mxu0 0.0
    %1732 = vmatpush1.msra.mxu0 0.0
    %1733 = vmatprep.subr.mxu0 0.0
    %1734 = vmatpush1.msra.mxu0 0.0
    %1735 = vmatprep.subr.mxu0 0.0
    %1736 = vmatpush1.msra.mxu0 0.0
    %1737 = vmatprep.subr.mxu0 0.0
    %1738 = vmatpush1.msra.mxu0 0.0
    %1739 = vmatprep.subr.mxu0 0.0
    %1740 = vmatpush1.msra.mxu0 0.0
    %1741 = vmatprep.subr.mxu0 0.0
    %1742 = vmatpush1.msra.mxu0 0.0
    %1743 = vmatprep.subr.mxu0 0.0
    %1744 = vmatpush1.msra.mxu0 0.0
    %1745 = vmatprep.subr.mxu0 0.0
    %1746 = vmatpush1.msra.mxu0 0.0
    %1747 = vmatprep.subr.mxu0 0.0
    %1748 = vmatpush1.msra.mxu0 0.0
    %1749 = vmatprep.subr.mxu0 0.0
    %1750 = vmatpush1.msra.mxu0 0.0
    %1751 = vmatprep.subr.mxu0 0.0
    %1752 = vmatpush1.msra.mxu0 0.0
    %1753 = vmatprep.subr.mxu0 0.0
    %1754 = vmatpush1.msra.mxu0 0.0
    %1755 = vmatprep.subr.mxu0 0.0
    %1756 = vmatpush1.msra.mxu0 0.0
    %1757 = vmatprep.subr.mxu0 0.0
    %1758 = vmatpush1.msra.mxu0 0.0
    %1759 = vmatprep.subr.mxu0 0.0
    %1760 = vmatpush1.msra.mxu0 0.0
    %1761 = vmatprep.subr.mxu0 0.0
    %1762 = vmatpush1.msra.mxu0 0.0
    %1763 = vmatprep.subr.mxu0 0.0
    %1764 = vmatpush1.msra.mxu0 0.0
    %1765 = vmatprep.subr.mxu0 0.0
    %1766 = vmatpush1.msra.mxu0 0.0
    %1767 = vmatprep.subr.mxu0 0.0
    %1768 = vmatpush1.msra.mxu0 0.0
    %1769 = vmatprep.mubr.f32.mxu0 0.0
    %1770 = vmatmul.mubr.f32.gmra.mrb[0].mxu0 %v1703
    %v1771 = vpop.f32.mrb[0].mxu0
    %v1772 = vadd.f32 0.0, %v1771
    %v1773 = vpop.f32.mrb[0].mxu0
    %1774 = vdwg.mxu0
    %s1775 = scalar_lea.vmem %s5, 64
    %v1776 = vld [vmem:[%s1775] sm:$0xff]
    %v1777 = vld [vmem:[%s1775 + $0x8] sm:$0xff]
    %v1778 = vld [vmem:[%s1775 + $0x10] sm:$0xff]
    %v1779 = vld [vmem:[%s1775 + $0x18] sm:$0xff]
    %v1781 = vsel %vm1112, %v1772, 0
    %v1784 = vsel %vm1112, %v1776, 0
    %v1787 = vsel %vm1112, %v1777, 0
    %v1790 = vsel %vm1112, %v1778, 0
    %v1793 = vsel %vm1112, %v1779, 0
    %1795 = vmatprep.subr.mxu0 0.0
    %1796 = vmatpush1.xpose.msra.mxu0 %v1784
    %1797 = vmatprep.subr.mxu0 0.0
    %1798 = vmatpush1.xpose.msra.mxu0 %v1787
    %1799 = vmatprep.subr.mxu0 0.0
    %1800 = vmatpush1.xpose.msra.mxu0 %v1790
    %1801 = vmatprep.subr.mxu0 0.0
    %1802 = vmatpush1.xpose.msra.mxu0 %v1793
    %1803 = vmatprep.subr.mxu0 0.0
    %1804 = vmatpush1.xpose.msra.mxu0 0.0
    %1805 = vmatprep.subr.mxu0 0.0
    %1806 = vmatpush1.xpose.msra.mxu0 0.0
    %1807 = vmatprep.subr.mxu0 0.0
    %1808 = vmatpush1.xpose.msra.mxu0 0.0
    %1809 = vmatprep.subr.mxu0 0.0
    %1810 = vmatpush1.xpose.msra.mxu0 0.0
    %1811 = vmatprep.subr.mxu0 0.0
    %1812 = vmatpush1.xpose.msra.mxu0 0.0
    %1813 = vmatprep.subr.mxu0 0.0
    %1814 = vmatpush1.xpose.msra.mxu0 0.0
    %1815 = vmatprep.subr.mxu0 0.0
    %1816 = vmatpush1.xpose.msra.mxu0 0.0
    %1817 = vmatprep.subr.mxu0 0.0
    %1818 = vmatpush1.xpose.msra.mxu0 0.0
    %1819 = vmatprep.subr.mxu0 0.0
    %1820 = vmatpush1.xpose.msra.mxu0 0.0
    %1821 = vmatprep.subr.mxu0 0.0
    %1822 = vmatpush1.xpose.msra.mxu0 0.0
    %1823 = vmatprep.subr.mxu0 0.0
    %1824 = vmatpush1.xpose.msra.mxu0 0.0
    %1825 = vmatprep.subr.mxu0 0.0
    %1826 = vmatpush1.xpose.msra.mxu0 0.0
    %1827 = vmatprep.subr.mxu0 0.0
    %1828 = vmatpush1.xpose.msra.mxu0 0.0
    %1829 = vmatprep.subr.mxu0 0.0
    %1830 = vmatpush1.xpose.msra.mxu0 0.0
    %1831 = vmatprep.subr.mxu0 0.0
    %1832 = vmatpush1.xpose.msra.mxu0 0.0
    %1833 = vmatprep.subr.mxu0 0.0
    %1834 = vmatpush1.xpose.msra.mxu0 0.0
    %1835 = vmatprep.subr.mxu0 0.0
    %1836 = vmatpush1.xpose.msra.mxu0 0.0
    %1837 = vmatprep.subr.mxu0 0.0
    %1838 = vmatpush1.xpose.msra.mxu0 0.0
    %1839 = vmatprep.subr.mxu0 0.0
    %1840 = vmatpush1.xpose.msra.mxu0 0.0
    %1841 = vmatprep.subr.mxu0 0.0
    %1842 = vmatpush1.xpose.msra.mxu0 0.0
    %1843 = vmatprep.subr.mxu0 0.0
    %1844 = vmatpush1.xpose.msra.mxu0 0.0
    %1845 = vmatprep.subr.mxu0 0.0
    %1846 = vmatpush1.xpose.msra.mxu0 0.0
    %1847 = vmatprep.subr.mxu0 0.0
    %1848 = vmatpush1.xpose.msra.mxu0 0.0
    %1849 = vmatprep.subr.mxu0 0.0
    %1850 = vmatpush1.xpose.msra.mxu0 0.0
    %1851 = vmatprep.subr.mxu0 0.0
    %1852 = vmatpush1.xpose.msra.mxu0 0.0
    %1853 = vmatprep.subr.mxu0 0.0
    %1854 = vmatpush1.xpose.msra.mxu0 0.0
    %1855 = vmatprep.subr.mxu0 0.0
    %1856 = vmatpush1.xpose.msra.mxu0 0.0
    %1857 = vmatprep.subr.mxu0 0.0
    %1858 = vmatpush1.xpose.msra.mxu0 0.0
    %1859 = vmatprep.mubr.f32.mxu0 0.0
    %1860 = vmatmul.mubr.f32.gmra.mrb[0].mxu0 %v1781
    %v1861 = vpop.f32.mrb[0].mxu0
    %v1862 = vadd.f32 0.0, %v1861
    %v1863 = vpop.f32.mrb[0].mxu0
    %1864 = vdwg.mxu0
    %v1865 = vadd.f32 %v1611, %v1862
    %v1867 = vsel %vm1112, %v387, 0
    %v1870 = vsel %vm1112, %v745, 0
    %1872 = vmatprep.subr.mxu0 0.0
    %1873 = vmatpush1.xpose.msra.mxu0 %v1870
    %1874 = vmatprep.subr.mxu0 0.0
    %1875 = vmatpush1.xpose.msra.mxu0 0.0
    %1876 = vmatprep.subr.mxu0 0.0
    %1877 = vmatpush1.xpose.msra.mxu0 0.0
    %1878 = vmatprep.subr.mxu0 0.0
    %1879 = vmatpush1.xpose.msra.mxu0 0.0
    %1880 = vmatprep.subr.mxu0 0.0
    %1881 = vmatpush1.xpose.msra.mxu0 0.0
    %1882 = vmatprep.subr.mxu0 0.0
    %1883 = vmatpush1.xpose.msra.mxu0 0.0
    %1884 = vmatprep.subr.mxu0 0.0
    %1885 = vmatpush1.xpose.msra.mxu0 0.0
    %1886 = vmatprep.subr.mxu0 0.0
    %1887 = vmatpush1.xpose.msra.mxu0 0.0
    %1888 = vmatprep.subr.mxu0 0.0
    %1889 = vmatpush1.xpose.msra.mxu0 0.0
    %1890 = vmatprep.subr.mxu0 0.0
    %1891 = vmatpush1.xpose.msra.mxu0 0.0
    %1892 = vmatprep.subr.mxu0 0.0
    %1893 = vmatpush1.xpose.msra.mxu0 0.0
    %1894 = vmatprep.subr.mxu0 0.0
    %1895 = vmatpush1.xpose.msra.mxu0 0.0
    %1896 = vmatprep.subr.mxu0 0.0
    %1897 = vmatpush1.xpose.msra.mxu0 0.0
    %1898 = vmatprep.subr.mxu0 0.0
    %1899 = vmatpush1.xpose.msra.mxu0 0.0
    %1900 = vmatprep.subr.mxu0 0.0
    %1901 = vmatpush1.xpose.msra.mxu0 0.0
    %1902 = vmatprep.subr.mxu0 0.0
    %1903 = vmatpush1.xpose.msra.mxu0 0.0
    %1904 = vmatprep.subr.mxu0 0.0
    %1905 = vmatpush1.xpose.msra.mxu0 0.0
    %1906 = vmatprep.subr.mxu0 0.0
    %1907 = vmatpush1.xpose.msra.mxu0 0.0
    %1908 = vmatprep.subr.mxu0 0.0
    %1909 = vmatpush1.xpose.msra.mxu0 0.0
    %1910 = vmatprep.subr.mxu0 0.0
    %1911 = vmatpush1.xpose.msra.mxu0 0.0
    %1912 = vmatprep.subr.mxu0 0.0
    %1913 = vmatpush1.xpose.msra.mxu0 0.0
    %1914 = vmatprep.subr.mxu0 0.0
    %1915 = vmatpush1.xpose.msra.mxu0 0.0
    %1916 = vmatprep.subr.mxu0 0.0
    %1917 = vmatpush1.xpose.msra.mxu0 0.0
    %1918 = vmatprep.subr.mxu0 0.0
    %1919 = vmatpush1.xpose.msra.mxu0 0.0
    %1920 = vmatprep.subr.mxu0 0.0
    %1921 = vmatpush1.xpose.msra.mxu0 0.0
    %1922 = vmatprep.subr.mxu0 0.0
    %1923 = vmatpush1.xpose.msra.mxu0 0.0
    %1924 = vmatprep.subr.mxu0 0.0
    %1925 = vmatpush1.xpose.msra.mxu0 0.0
    %1926 = vmatprep.subr.mxu0 0.0
    %1927 = vmatpush1.xpose.msra.mxu0 0.0
    %1928 = vmatprep.subr.mxu0 0.0
    %1929 = vmatpush1.xpose.msra.mxu0 0.0
    %1930 = vmatprep.subr.mxu0 0.0
    %1931 = vmatpush1.xpose.msra.mxu0 0.0
    %1932 = vmatprep.subr.mxu0 0.0
    %1933 = vmatpush1.xpose.msra.mxu0 0.0
    %1934 = vmatprep.subr.mxu0 0.0
    %1935 = vmatpush1.xpose.msra.mxu0 0.0
    %1936 = vmatprep.mubr.f32.mxu0 0.0
    %1937 = vmatmul.mubr.f32.gmra.mrb[0].mxu0 %v1867
    %v1938 = vpop.f32.mrb[0].mxu0
    %v1939 = vadd.f32 0.0, %v1938
    %v1940 = vpop.f32.mrb[0].mxu0
    %1941 = vdwg.mxu0
    %v1942 = vsel %vm37, %v1939, 0.0
    %v1943 = vsel %vm1112, %v1942, -inf
    %1944 = vmax.xlane.f32.xlu0 %v1943
    %v1945 = vpop.xlane.xlu0 %1944
    %v1946 = vsub.f32 %v1942, %v1945
    %v1947 = vmul.f32 %v1946, 1.442695
    %v1948 = vpow.pop %v1947
    %v1949 = vsel %vm1112, %v1948, 0.0
    %1950 = vadd.xlane.f32.xlu0 %v1949
    %v1951 = vpop.xlane.xlu0 %1950
    %v1952 = vrcp.pop %v1951
    %v1953 = vmul.f32 %v1948, %v1952
    %v1955 = vsel %vm1112, %v1953, 0
    %1957 = vmatprep.subr.mxu0 0.0
    %1958 = vmatpush1.msra.mxu0 %v1103
    %1959 = vmatprep.subr.mxu0 0.0
    %1960 = vmatpush1.msra.mxu0 0.0
    %1961 = vmatprep.subr.mxu0 0.0
    %1962 = vmatpush1.msra.mxu0 0.0
    %1963 = vmatprep.subr.mxu0 0.0
    %1964 = vmatpush1.msra.mxu0 0.0
    %1965 = vmatprep.subr.mxu0 0.0
    %1966 = vmatpush1.msra.mxu0 0.0
    %1967 = vmatprep.subr.mxu0 0.0
    %1968 = vmatpush1.msra.mxu0 0.0
    %1969 = vmatprep.subr.mxu0 0.0
    %1970 = vmatpush1.msra.mxu0 0.0
    %1971 = vmatprep.subr.mxu0 0.0
    %1972 = vmatpush1.msra.mxu0 0.0
    %1973 = vmatprep.subr.mxu0 0.0
    %1974 = vmatpush1.msra.mxu0 0.0
    %1975 = vmatprep.subr.mxu0 0.0
    %1976 = vmatpush1.msra.mxu0 0.0
    %1977 = vmatprep.subr.mxu0 0.0
    %1978 = vmatpush1.msra.mxu0 0.0
    %1979 = vmatprep.subr.mxu0 0.0
    %1980 = vmatpush1.msra.mxu0 0.0
    %1981 = vmatprep.subr.mxu0 0.0
    %1982 = vmatpush1.msra.mxu0 0.0
    %1983 = vmatprep.subr.mxu0 0.0
    %1984 = vmatpush1.msra.mxu0 0.0
    %1985 = vmatprep.subr.mxu0 0.0
    %1986 = vmatpush1.msra.mxu0 0.0
    %1987 = vmatprep.subr.mxu0 0.0
    %1988 = vmatpush1.msra.mxu0 0.0
    %1989 = vmatprep.subr.mxu0 0.0
    %1990 = vmatpush1.msra.mxu0 0.0
    %1991 = vmatprep.subr.mxu0 0.0
    %1992 = vmatpush1.msra.mxu0 0.0
    %1993 = vmatprep.subr.mxu0 0.0
    %1994 = vmatpush1.msra.mxu0 0.0
    %1995 = vmatprep.subr.mxu0 0.0
    %1996 = vmatpush1.msra.mxu0 0.0
    %1997 = vmatprep.subr.mxu0 0.0
    %1998 = vmatpush1.msra.mxu0 0.0
    %1999 = vmatprep.subr.mxu0 0.0
    %2000 = vmatpush1.msra.mxu0 0.0
    %2001 = vmatprep.subr.mxu0 0.0
    %2002 = vmatpush1.msra.mxu0 0.0
    %2003 = vmatprep.subr.mxu0 0.0
    %2004 = vmatpush1.msra.mxu0 0.0
    %2005 = vmatprep.subr.mxu0 0.0
    %2006 = vmatpush1.msra.mxu0 0.0
    %2007 = vmatprep.subr.mxu0 0.0
    %2008 = vmatpush1.msra.mxu0 0.0
    %2009 = vmatprep.subr.mxu0 0.0
    %2010 = vmatpush1.msra.mxu0 0.0
    %2011 = vmatprep.subr.mxu0 0.0
    %2012 = vmatpush1.msra.mxu0 0.0
    %2013 = vmatprep.subr.mxu0 0.0
    %2014 = vmatpush1.msra.mxu0 0.0
    %2015 = vmatprep.subr.mxu0 0.0
    %2016 = vmatpush1.msra.mxu0 0.0
    %2017 = vmatprep.subr.mxu0 0.0
    %2018 = vmatpush1.msra.mxu0 0.0
    %2019 = vmatprep.subr.mxu0 0.0
    %2020 = vmatpush1.msra.mxu0 0.0
    %2021 = vmatprep.mubr.f32.mxu0 0.0
    %2022 = vmatmul.mubr.f32.gmra.mrb[0].mxu0 %v1955
    %v2023 = vpop.f32.mrb[0].mxu0
    %v2024 = vadd.f32 0.0, %v2023
    %v2025 = vpop.f32.mrb[0].mxu0
    %2026 = vdwg.mxu0
    %s2027 = scalar_lea.vmem %s5, 96
    %v2028 = vld [vmem:[%s2027] sm:$0xff]
    %v2029 = vld [vmem:[%s2027 + $0x8] sm:$0xff]
    %v2030 = vld [vmem:[%s2027 + $0x10] sm:$0xff]
    %v2031 = vld [vmem:[%s2027 + $0x18] sm:$0xff]
    %v2033 = vsel %vm1112, %v2024, 0
    %v2036 = vsel %vm1112, %v2028, 0
    %v2039 = vsel %vm1112, %v2029, 0
    %v2042 = vsel %vm1112, %v2030, 0
    %v2045 = vsel %vm1112, %v2031, 0
    %2047 = vmatprep.subr.mxu0 0.0
    %2048 = vmatpush1.xpose.msra.mxu0 %v2036
    %2049 = vmatprep.subr.mxu0 0.0
    %2050 = vmatpush1.xpose.msra.mxu0 %v2039
    %2051 = vmatprep.subr.mxu0 0.0
    %2052 = vmatpush1.xpose.msra.mxu0 %v2042
    %2053 = vmatprep.subr.mxu0 0.0
    %2054 = vmatpush1.xpose.msra.mxu0 %v2045
    %2055 = vmatprep.subr.mxu0 0.0
    %2056 = vmatpush1.xpose.msra.mxu0 0.0
    %2057 = vmatprep.subr.mxu0 0.0
    %2058 = vmatpush1.xpose.msra.mxu0 0.0
    %2059 = vmatprep.subr.mxu0 0.0
    %2060 = vmatpush1.xpose.msra.mxu0 0.0
    %2061 = vmatprep.subr.mxu0 0.0
    %2062 = vmatpush1.xpose.msra.mxu0 0.0
    %2063 = vmatprep.subr.mxu0 0.0
    %2064 = vmatpush1.xpose.msra.mxu0 0.0
    %2065 = vmatprep.subr.mxu0 0.0
    %2066 = vmatpush1.xpose.msra.mxu0 0.0
    %2067 = vmatprep.subr.mxu0 0.0
    %2068 = vmatpush1.xpose.msra.mxu0 0.0
    %2069 = vmatprep.subr.mxu0 0.0
    %2070 = vmatpush1.xpose.msra.mxu0 0.0
    %2071 = vmatprep.subr.mxu0 0.0
    %2072 = vmatpush1.xpose.msra.mxu0 0.0
    %2073 = vmatprep.subr.mxu0 0.0
    %2074 = vmatpush1.xpose.msra.mxu0 0.0
    %2075 = vmatprep.subr.mxu0 0.0
    %2076 = vmatpush1.xpose.msra.mxu0 0.0
    %2077 = vmatprep.subr.mxu0 0.0
    %2078 = vmatpush1.xpose.msra.mxu0 0.0
    %2079 = vmatprep.subr.mxu0 0.0
    %2080 = vmatpush1.xpose.msra.mxu0 0.0
    %2081 = vmatprep.subr.mxu0 0.0
    %2082 = vmatpush1.xpose.msra.mxu0 0.0
    %2083 = vmatprep.subr.mxu0 0.0
    %2084 = vmatpush1.xpose.msra.mxu0 0.0
    %2085 = vmatprep.subr.mxu0 0.0
    %2086 = vmatpush1.xpose.msra.mxu0 0.0
    %2087 = vmatprep.subr.mxu0 0.0
    %2088 = vmatpush1.xpose.msra.mxu0 0.0
    %2089 = vmatprep.subr.mxu0 0.0
    %2090 = vmatpush1.xpose.msra.mxu0 0.0
    %2091 = vmatprep.subr.mxu0 0.0
    %2092 = vmatpush1.xpose.msra.mxu0 0.0
    %2093 = vmatprep.subr.mxu0 0.0
    %2094 = vmatpush1.xpose.msra.mxu0 0.0
    %2095 = vmatprep.subr.mxu0 0.0
    %2096 = vmatpush1.xpose.msra.mxu0 0.0
    %2097 = vmatprep.subr.mxu0 0.0
    %2098 = vmatpush1.xpose.msra.mxu0 0.0
    %2099 = vmatprep.subr.mxu0 0.0
    %2100 = vmatpush1.xpose.msra.mxu0 0.0
    %2101 = vmatprep.subr.mxu0 0.0
    %2102 = vmatpush1.xpose.msra.mxu0 0.0
    %2103 = vmatprep.subr.mxu0 0.0
    %2104 = vmatpush1.xpose.msra.mxu0 0.0
    %2105 = vmatprep.subr.mxu0 0.0
    %2106 = vmatpush1.xpose.msra.mxu0 0.0
    %2107 = vmatprep.subr.mxu0 0.0
    %2108 = vmatpush1.xpose.msra.mxu0 0.0
    %2109 = vmatprep.subr.mxu0 0.0
    %2110 = vmatpush1.xpose.msra.mxu0 0.0
    %2111 = vmatprep.mubr.f32.mxu0 0.0
    %2112 = vmatmul.mubr.f32.gmra.mrb[0].mxu0 %v2033
    %v2113 = vpop.f32.mrb[0].mxu0
    %v2114 = vadd.f32 0.0, %v2113
    %v2115 = vpop.f32.mrb[0].mxu0
    %2116 = vdwg.mxu0
    %v2117 = vadd.f32 %v1865, %v2114
    %v2119 = vlaneseq
    %v2120 = vshrl.u32 %v2119, 7
    %v2121 = vsub.s32 0, %v2120
    %v2122 = vrot.slane %v1111, %v2121
    %v2124 = vadd.f32 %v2117, %v2122
    %2125 = vst.msk [vmem:[#allocation2] sm:$0xff] %vm46, %v2124
    %v2127 = vsel %vm1112, %v128, 0
    %v2130 = vsel %vm1112, %v486, 0
    %2132 = vmatprep.subr.mxu0 0.0
    %2133 = vmatpush1.xpose.msra.mxu0 %v2130
    %2134 = vmatprep.subr.mxu0 0.0
    %2135 = vmatpush1.xpose.msra.mxu0 0.0
    %2136 = vmatprep.subr.mxu0 0.0
    %2137 = vmatpush1.xpose.msra.mxu0 0.0
    %2138 = vmatprep.subr.mxu0 0.0
    %2139 = vmatpush1.xpose.msra.mxu0 0.0
    %2140 = vmatprep.subr.mxu0 0.0
    %2141 = vmatpush1.xpose.msra.mxu0 0.0
    %2142 = vmatprep.subr.mxu0 0.0
    %2143 = vmatpush1.xpose.msra.mxu0 0.0
    %2144 = vmatprep.subr.mxu0 0.0
    %2145 = vmatpush1.xpose.msra.mxu0 0.0
    %2146 = vmatprep.subr.mxu0 0.0
    %2147 = vmatpush1.xpose.msra.mxu0 0.0
    %2148 = vmatprep.subr.mxu0 0.0
    %2149 = vmatpush1.xpose.msra.mxu0 0.0
    %2150 = vmatprep.subr.mxu0 0.0
    %2151 = vmatpush1.xpose.msra.mxu0 0.0
    %2152 = vmatprep.subr.mxu0 0.0
    %2153 = vmatpush1.xpose.msra.mxu0 0.0
    %2154 = vmatprep.subr.mxu0 0.0
    %2155 = vmatpush1.xpose.msra.mxu0 0.0
    %2156 = vmatprep.subr.mxu0 0.0
    %2157 = vmatpush1.xpose.msra.mxu0 0.0
    %2158 = vmatprep.subr.mxu0 0.0
    %2159 = vmatpush1.xpose.msra.mxu0 0.0
    %2160 = vmatprep.subr.mxu0 0.0
    %2161 = vmatpush1.xpose.msra.mxu0 0.0
    %2162 = vmatprep.subr.mxu0 0.0
    %2163 = vmatpush1.xpose.msra.mxu0 0.0
    %2164 = vmatprep.subr.mxu0 0.0
    %2165 = vmatpush1.xpose.msra.mxu0 0.0
    %2166 = vmatprep.subr.mxu0 0.0
    %2167 = vmatpush1.xpose.msra.mxu0 0.0
    %2168 = vmatprep.subr.mxu0 0.0
    %2169 = vmatpush1.xpose.msra.mxu0 0.0
    %2170 = vmatprep.subr.mxu0 0.0
    %2171 = vmatpush1.xpose.msra.mxu0 0.0
    %2172 = vmatprep.subr.mxu0 0.0
    %2173 = vmatpush1.xpose.msra.mxu0 0.0
    %2174 = vmatprep.subr.mxu0 0.0
    %2175 = vmatpush1.xpose.msra.mxu0 0.0
    %2176 = vmatprep.subr.mxu0 0.0
    %2177 = vmatpush1.xpose.msra.mxu0 0.0
    %2178 = vmatprep.subr.mxu0 0.0
    %2179 = vmatpush1.xpose.msra.mxu0 0.0
    %2180 = vmatprep.subr.mxu0 0.0
    %2181 = vmatpush1.xpose.msra.mxu0 0.0
    %2182 = vmatprep.subr.mxu0 0.0
    %2183 = vmatpush1.xpose.msra.mxu0 0.0
    %2184 = vmatprep.subr.mxu0 0.0
    %2185 = vmatpush1.xpose.msra.mxu0 0.0
    %2186 = vmatprep.subr.mxu0 0.0
    %2187 = vmatpush1.xpose.msra.mxu0 0.0
    %2188 = vmatprep.subr.mxu0 0.0
    %2189 = vmatpush1.xpose.msra.mxu0 0.0
    %2190 = vmatprep.subr.mxu0 0.0
    %2191 = vmatpush1.xpose.msra.mxu0 0.0
    %2192 = vmatprep.subr.mxu0 0.0
    %2193 = vmatpush1.xpose.msra.mxu0 0.0
    %2194 = vmatprep.subr.mxu0 0.0
    %2195 = vmatpush1.xpose.msra.mxu0 0.0
    %2196 = vmatprep.mubr.f32.mxu0 0.0
    %2197 = vmatmul.mubr.f32.gmra.mrb[0].mxu0 %v2127
    %v2198 = vpop.f32.mrb[0].mxu0
    %v2199 = vadd.f32 0.0, %v2198
    %v2200 = vpop.f32.mrb[0].mxu0
    %2201 = vdwg.mxu0
    %v2202 = vsel %vm37, %v2199, 0.0
    %v2203 = vsel %vm1112, %v2202, -inf
    %2204 = vmax.xlane.f32.xlu0 %v2203
    %v2205 = vpop.xlane.xlu0 %2204
    %v2206 = vsub.f32 %v2202, %v2205
    %v2207 = vmul.f32 %v2206, 1.442695
    %v2208 = vpow.pop %v2207
    %v2209 = vsel %vm1112, %v2208, 0.0
    %2210 = vadd.xlane.f32.xlu0 %v2209
    %v2211 = vpop.xlane.xlu0 %2210
    %v2212 = vrcp.pop %v2211
    %v2213 = vmul.f32 %v2208, %v2212
    %v2215 = vsel %vm1112, %v2213, 0
    %2217 = vmatprep.subr.mxu0 0.0
    %2218 = vmatpush1.msra.mxu0 %v844
    %2219 = vmatprep.subr.mxu0 0.0
    %2220 = vmatpush1.msra.mxu0 0.0
    %2221 = vmatprep.subr.mxu0 0.0
    %2222 = vmatpush1.msra.mxu0 0.0
    %2223 = vmatprep.subr.mxu0 0.0
    %2224 = vmatpush1.msra.mxu0 0.0
    %2225 = vmatprep.subr.mxu0 0.0
    %2226 = vmatpush1.msra.mxu0 0.0
    %2227 = vmatprep.subr.mxu0 0.0
    %2228 = vmatpush1.msra.mxu0 0.0
    %2229 = vmatprep.subr.mxu0 0.0
    %2230 = vmatpush1.msra.mxu0 0.0
    %2231 = vmatprep.subr.mxu0 0.0
    %2232 = vmatpush1.msra.mxu0 0.0
    %2233 = vmatprep.subr.mxu0 0.0
    %2234 = vmatpush1.msra.mxu0 0.0
    %2235 = vmatprep.subr.mxu0 0.0
    %2236 = vmatpush1.msra.mxu0 0.0
    %2237 = vmatprep.subr.mxu0 0.0
    %2238 = vmatpush1.msra.mxu0 0.0
    %2239 = vmatprep.subr.mxu0 0.0
    %2240 = vmatpush1.msra.mxu0 0.0
    %2241 = vmatprep.subr.mxu0 0.0
    %2242 = vmatpush1.msra.mxu0 0.0
    %2243 = vmatprep.subr.mxu0 0.0
    %2244 = vmatpush1.msra.mxu0 0.0
    %2245 = vmatprep.subr.mxu0 0.0
    %2246 = vmatpush1.msra.mxu0 0.0
    %2247 = vmatprep.subr.mxu0 0.0
    %2248 = vmatpush1.msra.mxu0 0.0
    %2249 = vmatprep.subr.mxu0 0.0
    %2250 = vmatpush1.msra.mxu0 0.0
    %2251 = vmatprep.subr.mxu0 0.0
    %2252 = vmatpush1.msra.mxu0 0.0
    %2253 = vmatprep.subr.mxu0 0.0
    %2254 = vmatpush1.msra.mxu0 0.0
    %2255 = vmatprep.subr.mxu0 0.0
    %2256 = vmatpush1.msra.mxu0 0.0
    %2257 = vmatprep.subr.mxu0 0.0
    %2258 = vmatpush1.msra.mxu0 0.0
    %2259 = vmatprep.subr.mxu0 0.0
    %2260 = vmatpush1.msra.mxu0 0.0
    %2261 = vmatprep.subr.mxu0 0.0
    %2262 = vmatpush1.msra.mxu0 0.0
    %2263 = vmatprep.subr.mxu0 0.0
    %2264 = vmatpush1.msra.mxu0 0.0
    %2265 = vmatprep.subr.mxu0 0.0
    %2266 = vmatpush1.msra.mxu0 0.0
    %2267 = vmatprep.subr.mxu0 0.0
    %2268 = vmatpush1.msra.mxu0 0.0
    %2269 = vmatprep.subr.mxu0 0.0
    %2270 = vmatpush1.msra.mxu0 0.0
    %2271 = vmatprep.subr.mxu0 0.0
    %2272 = vmatpush1.msra.mxu0 0.0
    %2273 = vmatprep.subr.mxu0 0.0
    %2274 = vmatpush1.msra.mxu0 0.0
    %2275 = vmatprep.subr.mxu0 0.0
    %2276 = vmatpush1.msra.mxu0 0.0
    %2277 = vmatprep.subr.mxu0 0.0
    %2278 = vmatpush1.msra.mxu0 0.0
    %2279 = vmatprep.subr.mxu0 0.0
    %2280 = vmatpush1.msra.mxu0 0.0
    %2281 = vmatprep.mubr.f32.mxu0 0.0
    %2282 = vmatmul.mubr.f32.gmra.mrb[0].mxu0 %v2215
    %v2283 = vpop.f32.mrb[0].mxu0
    %v2284 = vadd.f32 0.0, %v2283
    %v2285 = vpop.f32.mrb[0].mxu0
    %2286 = vdwg.mxu0
    %v2287 = vld [vmem:[%s5] sm:$0xff]
    %v2288 = vld [vmem:[%s5 + $0x8] sm:$0xff]
    %v2289 = vld [vmem:[%s5 + $0x10] sm:$0xff]
    %v2290 = vld [vmem:[%s5 + $0x18] sm:$0xff]
    %v2292 = vsel %vm1112, %v216, 0
    %v2295 = vsel %vm1112, %v574, 0
    %2297 = vmatprep.subr.mxu0 0.0
    %2298 = vmatpush1.xpose.msra.mxu0 %v2295
    %2299 = vmatprep.subr.mxu0 0.0
    %2300 = vmatpush1.xpose.msra.mxu0 0.0
    %2301 = vmatprep.subr.mxu0 0.0
    %2302 = vmatpush1.xpose.msra.mxu0 0.0
    %2303 = vmatprep.subr.mxu0 0.0
    %2304 = vmatpush1.xpose.msra.mxu0 0.0
    %2305 = vmatprep.subr.mxu0 0.0
    %2306 = vmatpush1.xpose.msra.mxu0 0.0
    %2307 = vmatprep.subr.mxu0 0.0
    %2308 = vmatpush1.xpose.msra.mxu0 0.0
    %2309 = vmatprep.subr.mxu0 0.0
    %2310 = vmatpush1.xpose.msra.mxu0 0.0
    %2311 = vmatprep.subr.mxu0 0.0
    %2312 = vmatpush1.xpose.msra.mxu0 0.0
    %2313 = vmatprep.subr.mxu0 0.0
    %2314 = vmatpush1.xpose.msra.mxu0 0.0
    %2315 = vmatprep.subr.mxu0 0.0
    %2316 = vmatpush1.xpose.msra.mxu0 0.0
    %2317 = vmatprep.subr.mxu0 0.0
    %2318 = vmatpush1.xpose.msra.mxu0 0.0
    %2319 = vmatprep.subr.mxu0 0.0
    %2320 = vmatpush1.xpose.msra.mxu0 0.0
    %2321 = vmatprep.subr.mxu0 0.0
    %2322 = vmatpush1.xpose.msra.mxu0 0.0
    %2323 = vmatprep.subr.mxu0 0.0
    %2324 = vmatpush1.xpose.msra.mxu0 0.0
    %2325 = vmatprep.subr.mxu0 0.0
    %2326 = vmatpush1.xpose.msra.mxu0 0.0
    %2327 = vmatprep.subr.mxu0 0.0
    %2328 = vmatpush1.xpose.msra.mxu0 0.0
    %2329 = vmatprep.subr.mxu0 0.0
    %2330 = vmatpush1.xpose.msra.mxu0 0.0
    %2331 = vmatprep.subr.mxu0 0.0
    %2332 = vmatpush1.xpose.msra.mxu0 0.0
    %2333 = vmatprep.subr.mxu0 0.0
    %2334 = vmatpush1.xpose.msra.mxu0 0.0
    %2335 = vmatprep.subr.mxu0 0.0
    %2336 = vmatpush1.xpose.msra.mxu0 0.0
    %2337 = vmatprep.subr.mxu0 0.0
    %2338 = vmatpush1.xpose.msra.mxu0 0.0
    %2339 = vmatprep.subr.mxu0 0.0
    %2340 = vmatpush1.xpose.msra.mxu0 0.0
    %2341 = vmatprep.subr.mxu0 0.0
    %2342 = vmatpush1.xpose.msra.mxu0 0.0
    %2343 = vmatprep.subr.mxu0 0.0
    %2344 = vmatpush1.xpose.msra.mxu0 0.0
    %2345 = vmatprep.subr.mxu0 0.0
    %2346 = vmatpush1.xpose.msra.mxu0 0.0
    %2347 = vmatprep.subr.mxu0 0.0
    %2348 = vmatpush1.xpose.msra.mxu0 0.0
    %2349 = vmatprep.subr.mxu0 0.0
    %2350 = vmatpush1.xpose.msra.mxu0 0.0
    %2351 = vmatprep.subr.mxu0 0.0
    %2352 = vmatpush1.xpose.msra.mxu0 0.0
    %2353 = vmatprep.subr.mxu0 0.0
    %2354 = vmatpush1.xpose.msra.mxu0 0.0
    %2355 = vmatprep.subr.mxu0 0.0
    %2356 = vmatpush1.xpose.msra.mxu0 0.0
    %2357 = vmatprep.subr.mxu0 0.0
    %2358 = vmatpush1.xpose.msra.mxu0 0.0
    %2359 = vmatprep.subr.mxu0 0.0
    %2360 = vmatpush1.xpose.msra.mxu0 0.0
    %2361 = vmatprep.mubr.f32.mxu0 0.0
    %2362 = vmatmul.mubr.f32.gmra.mrb[0].mxu0 %v2292
    %v2363 = vpop.f32.mrb[0].mxu0
    %v2364 = vadd.f32 0.0, %v2363
    %v2365 = vpop.f32.mrb[0].mxu0
    %2366 = vdwg.mxu0
    %v2367 = vsel %vm37, %v2364, 0.0
    %v2368 = vsel %vm1112, %v2367, -inf
    %2369 = vmax.xlane.f32.xlu0 %v2368
    %v2370 = vpop.xlane.xlu0 %2369
    %v2371 = vsub.f32 %v2367, %v2370
    %v2372 = vmul.f32 %v2371, 1.442695
    %v2373 = vpow.pop %v2372
    %v2374 = vsel %vm1112, %v2373, 0.0
    %2375 = vadd.xlane.f32.xlu0 %v2374
    %v2376 = vpop.xlane.xlu0 %2375
    %v2377 = vrcp.pop %v2376
    %v2378 = vmul.f32 %v2373, %v2377
    %v2380 = vsel %vm1112, %v2378, 0
    %2382 = vmatprep.subr.mxu0 0.0
    %2383 = vmatpush1.msra.mxu0 %v932
    %2384 = vmatprep.subr.mxu0 0.0
    %2385 = vmatpush1.msra.mxu0 0.0
    %2386 = vmatprep.subr.mxu0 0.0
    %2387 = vmatpush1.msra.mxu0 0.0
    %2388 = vmatprep.subr.mxu0 0.0
    %2389 = vmatpush1.msra.mxu0 0.0
    %2390 = vmatprep.subr.mxu0 0.0
    %2391 = vmatpush1.msra.mxu0 0.0
    %2392 = vmatprep.subr.mxu0 0.0
    %2393 = vmatpush1.msra.mxu0 0.0
    %2394 = vmatprep.subr.mxu0 0.0
    %2395 = vmatpush1.msra.mxu0 0.0
    %2396 = vmatprep.subr.mxu0 0.0
    %2397 = vmatpush1.msra.mxu0 0.0
    %2398 = vmatprep.subr.mxu0 0.0
    %2399 = vmatpush1.msra.mxu0 0.0
    %2400 = vmatprep.subr.mxu0 0.0
    %2401 = vmatpush1.msra.mxu0 0.0
    %2402 = vmatprep.subr.mxu0 0.0
    %2403 = vmatpush1.msra.mxu0 0.0
    %2404 = vmatprep.subr.mxu0 0.0
    %2405 = vmatpush1.msra.mxu0 0.0
    %2406 = vmatprep.subr.mxu0 0.0
    %2407 = vmatpush1.msra.mxu0 0.0
    %2408 = vmatprep.subr.mxu0 0.0
    %2409 = vmatpush1.msra.mxu0 0.0
    %2410 = vmatprep.subr.mxu0 0.0
    %2411 = vmatpush1.msra.mxu0 0.0
    %2412 = vmatprep.subr.mxu0 0.0
    %2413 = vmatpush1.msra.mxu0 0.0
    %2414 = vmatprep.subr.mxu0 0.0
    %2415 = vmatpush1.msra.mxu0 0.0
    %2416 = vmatprep.subr.mxu0 0.0
    %2417 = vmatpush1.msra.mxu0 0.0
    %2418 = vmatprep.subr.mxu0 0.0
    %2419 = vmatpush1.msra.mxu0 0.0
    %2420 = vmatprep.subr.mxu0 0.0
    %2421 = vmatpush1.msra.mxu0 0.0
    %2422 = vmatprep.subr.mxu0 0.0
    %2423 = vmatpush1.msra.mxu0 0.0
    %2424 = vmatprep.subr.mxu0 0.0
    %2425 = vmatpush1.msra.mxu0 0.0
    %2426 = vmatprep.subr.mxu0 0.0
    %2427 = vmatpush1.msra.mxu0 0.0
    %2428 = vmatprep.subr.mxu0 0.0
    %2429 = vmatpush1.msra.mxu0 0.0
    %2430 = vmatprep.subr.mxu0 0.0
    %2431 = vmatpush1.msra.mxu0 0.0
    %2432 = vmatprep.subr.mxu0 0.0
    %2433 = vmatpush1.msra.mxu0 0.0
    %2434 = vmatprep.subr.mxu0 0.0
    %2435 = vmatpush1.msra.mxu0 0.0
    %2436 = vmatprep.subr.mxu0 0.0
    %2437 = vmatpush1.msra.mxu0 0.0
    %2438 = vmatprep.subr.mxu0 0.0
    %2439 = vmatpush1.msra.mxu0 0.0
    %2440 = vmatprep.subr.mxu0 0.0
    %2441 = vmatpush1.msra.mxu0 0.0
    %2442 = vmatprep.subr.mxu0 0.0
    %2443 = vmatpush1.msra.mxu0 0.0
    %2444 = vmatprep.subr.mxu0 0.0
    %2445 = vmatpush1.msra.mxu0 0.0
    %2446 = vmatprep.mubr.f32.mxu0 0.0
    %2447 = vmatmul.mubr.f32.gmra.mrb[0].mxu0 %v2380
    %v2448 = vpop.f32.mrb[0].mxu0
    %v2449 = vadd.f32 0.0, %v2448
    %v2450 = vpop.f32.mrb[0].mxu0
    %2451 = vdwg.mxu0
    %v2452 = vld [vmem:[%s1439] sm:$0xff]
    %v2453 = vld [vmem:[%s1439 + $0x8] sm:$0xff]
    %v2454 = vld [vmem:[%s1439 + $0x10] sm:$0xff]
    %v2455 = vld [vmem:[%s1439 + $0x18] sm:$0xff]
    %v2457 = vsel %vm1112, %v2449, 0
    %v2460 = vsel %vm1112, %v2452, 0
    %v2463 = vsel %vm1112, %v2453, 0
    %v2466 = vsel %vm1112, %v2454, 0
    %v2469 = vsel %vm1112, %v2455, 0
    %2471 = vmatprep.subr.mxu0 0.0
    %2472 = vmatpush1.xpose.msra.mxu0 %v2460
    %2473 = vmatprep.subr.mxu0 0.0
    %2474 = vmatpush1.xpose.msra.mxu0 %v2463
    %2475 = vmatprep.subr.mxu0 0.0
    %2476 = vmatpush1.xpose.msra.mxu0 %v2466
    %2477 = vmatprep.subr.mxu0 0.0
    %2478 = vmatpush1.xpose.msra.mxu0 %v2469
    %2479 = vmatprep.subr.mxu0 0.0
    %2480 = vmatpush1.xpose.msra.mxu0 0.0
    %2481 = vmatprep.subr.mxu0 0.0
    %2482 = vmatpush1.xpose.msra.mxu0 0.0
    %2483 = vmatprep.subr.mxu0 0.0
    %2484 = vmatpush1.xpose.msra.mxu0 0.0
    %2485 = vmatprep.subr.mxu0 0.0
    %2486 = vmatpush1.xpose.msra.mxu0 0.0
    %2487 = vmatprep.subr.mxu0 0.0
    %2488 = vmatpush1.xpose.msra.mxu0 0.0
    %2489 = vmatprep.subr.mxu0 0.0
    %2490 = vmatpush1.xpose.msra.mxu0 0.0
    %2491 = vmatprep.subr.mxu0 0.0
    %2492 = vmatpush1.xpose.msra.mxu0 0.0
    %2493 = vmatprep.subr.mxu0 0.0
    %2494 = vmatpush1.xpose.msra.mxu0 0.0
    %2495 = vmatprep.subr.mxu0 0.0
    %2496 = vmatpush1.xpose.msra.mxu0 0.0
    %2497 = vmatprep.subr.mxu0 0.0
    %2498 = vmatpush1.xpose.msra.mxu0 0.0
    %2499 = vmatprep.subr.mxu0 0.0
    %2500 = vmatpush1.xpose.msra.mxu0 0.0
    %2501 = vmatprep.subr.mxu0 0.0
    %2502 = vmatpush1.xpose.msra.mxu0 0.0
    %2503 = vmatprep.subr.mxu0 0.0
    %2504 = vmatpush1.xpose.msra.mxu0 0.0
    %2505 = vmatprep.subr.mxu0 0.0
    %2506 = vmatpush1.xpose.msra.mxu0 0.0
    %2507 = vmatprep.subr.mxu0 0.0
    %2508 = vmatpush1.xpose.msra.mxu0 0.0
    %2509 = vmatprep.subr.mxu0 0.0
    %2510 = vmatpush1.xpose.msra.mxu0 0.0
    %2511 = vmatprep.subr.mxu0 0.0
    %2512 = vmatpush1.xpose.msra.mxu0 0.0
    %2513 = vmatprep.subr.mxu0 0.0
    %2514 = vmatpush1.xpose.msra.mxu0 0.0
    %2515 = vmatprep.subr.mxu0 0.0
    %2516 = vmatpush1.xpose.msra.mxu0 0.0
    %2517 = vmatprep.subr.mxu0 0.0
    %2518 = vmatpush1.xpose.msra.mxu0 0.0
    %2519 = vmatprep.subr.mxu0 0.0
    %2520 = vmatpush1.xpose.msra.mxu0 0.0
    %2521 = vmatprep.subr.mxu0 0.0
    %2522 = vmatpush1.xpose.msra.mxu0 0.0
    %2523 = vmatprep.subr.mxu0 0.0
    %2524 = vmatpush1.xpose.msra.mxu0 0.0
    %2525 = vmatprep.subr.mxu0 0.0
    %2526 = vmatpush1.xpose.msra.mxu0 0.0
    %2527 = vmatprep.subr.mxu0 0.0
    %2528 = vmatpush1.xpose.msra.mxu0 0.0
    %2529 = vmatprep.subr.mxu0 0.0
    %2530 = vmatpush1.xpose.msra.mxu0 0.0
    %2531 = vmatprep.subr.mxu0 0.0
    %2532 = vmatpush1.xpose.msra.mxu0 0.0
    %2533 = vmatprep.subr.mxu0 0.0
    %2534 = vmatpush1.xpose.msra.mxu0 0.0
    %2535 = vmatprep.mubr.f32.mxu0 0.0
    %2536 = vmatmul.mubr.f32.gmra.mrb[0].mxu0 %v2457
    %v2537 = vpop.f32.mrb[0].mxu0
    %v2538 = vadd.f32 0.0, %v2537
    %v2539 = vpop.f32.mrb[0].mxu0
    %2540 = vdwg.mxu0
    %v2542 = vsel %vm1112, %v2284, 0
    %v2545 = vsel %vm1112, %v2287, 0
    %v2548 = vsel %vm1112, %v2288, 0
    %v2551 = vsel %vm1112, %v2289, 0
    %v2554 = vsel %vm1112, %v2290, 0
    %2556 = vmatprep.subr.mxu0 0.0
    %2557 = vmatpush1.xpose.msra.mxu0 %v2545
    %2558 = vmatprep.subr.mxu0 0.0
    %2559 = vmatpush1.xpose.msra.mxu0 %v2548
    %2560 = vmatprep.subr.mxu0 0.0
    %2561 = vmatpush1.xpose.msra.mxu0 %v2551
    %2562 = vmatprep.subr.mxu0 0.0
    %2563 = vmatpush1.xpose.msra.mxu0 %v2554
    %2564 = vmatprep.subr.mxu0 0.0
    %2565 = vmatpush1.xpose.msra.mxu0 0.0
    %2566 = vmatprep.subr.mxu0 0.0
    %2567 = vmatpush1.xpose.msra.mxu0 0.0
    %2568 = vmatprep.subr.mxu0 0.0
    %2569 = vmatpush1.xpose.msra.mxu0 0.0
    %2570 = vmatprep.subr.mxu0 0.0
    %2571 = vmatpush1.xpose.msra.mxu0 0.0
    %2572 = vmatprep.subr.mxu0 0.0
    %2573 = vmatpush1.xpose.msra.mxu0 0.0
    %2574 = vmatprep.subr.mxu0 0.0
    %2575 = vmatpush1.xpose.msra.mxu0 0.0
    %2576 = vmatprep.subr.mxu0 0.0
    %2577 = vmatpush1.xpose.msra.mxu0 0.0
    %2578 = vmatprep.subr.mxu0 0.0
    %2579 = vmatpush1.xpose.msra.mxu0 0.0
    %2580 = vmatprep.subr.mxu0 0.0
    %2581 = vmatpush1.xpose.msra.mxu0 0.0
    %2582 = vmatprep.subr.mxu0 0.0
    %2583 = vmatpush1.xpose.msra.mxu0 0.0
    %2584 = vmatprep.subr.mxu0 0.0
    %2585 = vmatpush1.xpose.msra.mxu0 0.0
    %2586 = vmatprep.subr.mxu0 0.0
    %2587 = vmatpush1.xpose.msra.mxu0 0.0
    %2588 = vmatprep.subr.mxu0 0.0
    %2589 = vmatpush1.xpose.msra.mxu0 0.0
    %2590 = vmatprep.subr.mxu0 0.0
    %2591 = vmatpush1.xpose.msra.mxu0 0.0
    %2592 = vmatprep.subr.mxu0 0.0
    %2593 = vmatpush1.xpose.msra.mxu0 0.0
    %2594 = vmatprep.subr.mxu0 0.0
    %2595 = vmatpush1.xpose.msra.mxu0 0.0
    %2596 = vmatprep.subr.mxu0 0.0
    %2597 = vmatpush1.xpose.msra.mxu0 0.0
    %2598 = vmatprep.subr.mxu0 0.0
    %2599 = vmatpush1.xpose.msra.mxu0 0.0
    %2600 = vmatprep.subr.mxu0 0.0
    %2601 = vmatpush1.xpose.msra.mxu0 0.0
    %2602 = vmatprep.subr.mxu0 0.0
    %2603 = vmatpush1.xpose.msra.mxu0 0.0
    %2604 = vmatprep.subr.mxu0 0.0
    %2605 = vmatpush1.xpose.msra.mxu0 0.0
    %2606 = vmatprep.subr.mxu0 0.0
    %2607 = vmatpush1.xpose.msra.mxu0 0.0
    %2608 = vmatprep.subr.mxu0 0.0
    %2609 = vmatpush1.xpose.msra.mxu0 0.0
    %2610 = vmatprep.subr.mxu0 0.0
    %2611 = vmatpush1.xpose.msra.mxu0 0.0
    %2612 = vmatprep.subr.mxu0 0.0
    %2613 = vmatpush1.xpose.msra.mxu0 0.0
    %2614 = vmatprep.subr.mxu0 0.0
    %2615 = vmatpush1.xpose.msra.mxu0 0.0
    %2616 = vmatprep.subr.mxu0 0.0
    %2617 = vmatpush1.xpose.msra.mxu0 0.0
    %2618 = vmatprep.subr.mxu0 0.0
    %2619 = vmatpush1.xpose.msra.mxu0 0.0
    %2620 = vmatprep.mubr.f32.mxu0 0.0
    %2621 = vmatmul.mubr.f32.gmra.mrb[0].mxu0 %v2542
    %v2622 = vpop.f32.mrb[0].mxu0
    %v2623 = vadd.f32 %v2538, %v2622
    %v2624 = vpop.f32.mrb[0].mxu0
    %2625 = vdwg.mxu0
    %v2627 = vsel %vm1112, %v304, 0
    %v2630 = vsel %vm1112, %v662, 0
    %2632 = vmatprep.subr.mxu0 0.0
    %2633 = vmatpush1.xpose.msra.mxu0 %v2630
    %2634 = vmatprep.subr.mxu0 0.0
    %2635 = vmatpush1.xpose.msra.mxu0 0.0
    %2636 = vmatprep.subr.mxu0 0.0
    %2637 = vmatpush1.xpose.msra.mxu0 0.0
    %2638 = vmatprep.subr.mxu0 0.0
    %2639 = vmatpush1.xpose.msra.mxu0 0.0
    %2640 = vmatprep.subr.mxu0 0.0
    %2641 = vmatpush1.xpose.msra.mxu0 0.0
    %2642 = vmatprep.subr.mxu0 0.0
    %2643 = vmatpush1.xpose.msra.mxu0 0.0
    %2644 = vmatprep.subr.mxu0 0.0
    %2645 = vmatpush1.xpose.msra.mxu0 0.0
    %2646 = vmatprep.subr.mxu0 0.0
    %2647 = vmatpush1.xpose.msra.mxu0 0.0
    %2648 = vmatprep.subr.mxu0 0.0
    %2649 = vmatpush1.xpose.msra.mxu0 0.0
    %2650 = vmatprep.subr.mxu0 0.0
    %2651 = vmatpush1.xpose.msra.mxu0 0.0
    %2652 = vmatprep.subr.mxu0 0.0
    %2653 = vmatpush1.xpose.msra.mxu0 0.0
    %2654 = vmatprep.subr.mxu0 0.0
    %2655 = vmatpush1.xpose.msra.mxu0 0.0
    %2656 = vmatprep.subr.mxu0 0.0
    %2657 = vmatpush1.xpose.msra.mxu0 0.0
    %2658 = vmatprep.subr.mxu0 0.0
    %2659 = vmatpush1.xpose.msra.mxu0 0.0
    %2660 = vmatprep.subr.mxu0 0.0
    %2661 = vmatpush1.xpose.msra.mxu0 0.0
    %2662 = vmatprep.subr.mxu0 0.0
    %2663 = vmatpush1.xpose.msra.mxu0 0.0
    %2664 = vmatprep.subr.mxu0 0.0
    %2665 = vmatpush1.xpose.msra.mxu0 0.0
    %2666 = vmatprep.subr.mxu0 0.0
    %2667 = vmatpush1.xpose.msra.mxu0 0.0
    %2668 = vmatprep.subr.mxu0 0.0
    %2669 = vmatpush1.xpose.msra.mxu0 0.0
    %2670 = vmatprep.subr.mxu0 0.0
    %2671 = vmatpush1.xpose.msra.mxu0 0.0
    %2672 = vmatprep.subr.mxu0 0.0
    %2673 = vmatpush1.xpose.msra.mxu0 0.0
    %2674 = vmatprep.subr.mxu0 0.0
    %2675 = vmatpush1.xpose.msra.mxu0 0.0
    %2676 = vmatprep.subr.mxu0 0.0
    %2677 = vmatpush1.xpose.msra.mxu0 0.0
    %2678 = vmatprep.subr.mxu0 0.0
    %2679 = vmatpush1.xpose.msra.mxu0 0.0
    %2680 = vmatprep.subr.mxu0 0.0
    %2681 = vmatpush1.xpose.msra.mxu0 0.0
    %2682 = vmatprep.subr.mxu0 0.0
    %2683 = vmatpush1.xpose.msra.mxu0 0.0
    %2684 = vmatprep.subr.mxu0 0.0
    %2685 = vmatpush1.xpose.msra.mxu0 0.0
    %2686 = vmatprep.subr.mxu0 0.0
    %2687 = vmatpush1.xpose.msra.mxu0 0.0
    %2688 = vmatprep.subr.mxu0 0.0
    %2689 = vmatpush1.xpose.msra.mxu0 0.0
    %2690 = vmatprep.subr.mxu0 0.0
    %2691 = vmatpush1.xpose.msra.mxu0 0.0
    %2692 = vmatprep.subr.mxu0 0.0
    %2693 = vmatpush1.xpose.msra.mxu0 0.0
    %2694 = vmatprep.subr.mxu0 0.0
    %2695 = vmatpush1.xpose.msra.mxu0 0.0
    %2696 = vmatprep.mubr.f32.mxu0 0.0
    %2697 = vmatmul.mubr.f32.gmra.mrb[0].mxu0 %v2627
    %v2698 = vpop.f32.mrb[0].mxu0
    %v2699 = vadd.f32 0.0, %v2698
    %v2700 = vpop.f32.mrb[0].mxu0
    %2701 = vdwg.mxu0
    %v2702 = vsel %vm37, %v2699, 0.0
    %v2703 = vsel %vm1112, %v2702, -inf
    %2704 = vmax.xlane.f32.xlu0 %v2703
    %v2705 = vpop.xlane.xlu0 %2704
    %v2706 = vsub.f32 %v2702, %v2705
    %v2707 = vmul.f32 %v2706, 1.442695
    %v2708 = vpow.pop %v2707
    %v2709 = vsel %vm1112, %v2708, 0.0
    %2710 = vadd.xlane.f32.xlu0 %v2709
    %v2711 = vpop.xlane.xlu0 %2710
    %v2712 = vrcp.pop %v2711
    %v2713 = vmul.f32 %v2708, %v2712
    %v2715 = vsel %vm1112, %v2713, 0
    %2717 = vmatprep.subr.mxu0 0.0
    %2718 = vmatpush1.msra.mxu0 %v1020
    %2719 = vmatprep.subr.mxu0 0.0
    %2720 = vmatpush1.msra.mxu0 0.0
    %2721 = vmatprep.subr.mxu0 0.0
    %2722 = vmatpush1.msra.mxu0 0.0
    %2723 = vmatprep.subr.mxu0 0.0
    %2724 = vmatpush1.msra.mxu0 0.0
    %2725 = vmatprep.subr.mxu0 0.0
    %2726 = vmatpush1.msra.mxu0 0.0
    %2727 = vmatprep.subr.mxu0 0.0
    %2728 = vmatpush1.msra.mxu0 0.0
    %2729 = vmatprep.subr.mxu0 0.0
    %2730 = vmatpush1.msra.mxu0 0.0
    %2731 = vmatprep.subr.mxu0 0.0
    %2732 = vmatpush1.msra.mxu0 0.0
    %2733 = vmatprep.subr.mxu0 0.0
    %2734 = vmatpush1.msra.mxu0 0.0
    %2735 = vmatprep.subr.mxu0 0.0
    %2736 = vmatpush1.msra.mxu0 0.0
    %2737 = vmatprep.subr.mxu0 0.0
    %2738 = vmatpush1.msra.mxu0 0.0
    %2739 = vmatprep.subr.mxu0 0.0
    %2740 = vmatpush1.msra.mxu0 0.0
    %2741 = vmatprep.subr.mxu0 0.0
    %2742 = vmatpush1.msra.mxu0 0.0
    %2743 = vmatprep.subr.mxu0 0.0
    %2744 = vmatpush1.msra.mxu0 0.0
    %2745 = vmatprep.subr.mxu0 0.0
    %2746 = vmatpush1.msra.mxu0 0.0
    %2747 = vmatprep.subr.mxu0 0.0
    %2748 = vmatpush1.msra.mxu0 0.0
    %2749 = vmatprep.subr.mxu0 0.0
    %2750 = vmatpush1.msra.mxu0 0.0
    %2751 = vmatprep.subr.mxu0 0.0
    %2752 = vmatpush1.msra.mxu0 0.0
    %2753 = vmatprep.subr.mxu0 0.0
    %2754 = vmatpush1.msra.mxu0 0.0
    %2755 = vmatprep.subr.mxu0 0.0
    %2756 = vmatpush1.msra.mxu0 0.0
    %2757 = vmatprep.subr.mxu0 0.0
    %2758 = vmatpush1.msra.mxu0 0.0
    %2759 = vmatprep.subr.mxu0 0.0
    %2760 = vmatpush1.msra.mxu0 0.0
    %2761 = vmatprep.subr.mxu0 0.0
    %2762 = vmatpush1.msra.mxu0 0.0
    %2763 = vmatprep.subr.mxu0 0.0
    %2764 = vmatpush1.msra.mxu0 0.0
    %2765 = vmatprep.subr.mxu0 0.0
    %2766 = vmatpush1.msra.mxu0 0.0
    %2767 = vmatprep.subr.mxu0 0.0
    %2768 = vmatpush1.msra.mxu0 0.0
    %2769 = vmatprep.subr.mxu0 0.0
    %2770 = vmatpush1.msra.mxu0 0.0
    %2771 = vmatprep.subr.mxu0 0.0
    %2772 = vmatpush1.msra.mxu0 0.0
    %2773 = vmatprep.subr.mxu0 0.0
    %2774 = vmatpush1.msra.mxu0 0.0
    %2775 = vmatprep.subr.mxu0 0.0
    %2776 = vmatpush1.msra.mxu0 0.0
    %2777 = vmatprep.subr.mxu0 0.0
    %2778 = vmatpush1.msra.mxu0 0.0
    %2779 = vmatprep.subr.mxu0 0.0
    %2780 = vmatpush1.msra.mxu0 0.0
    %2781 = vmatprep.mubr.f32.mxu0 0.0
    %2782 = vmatmul.mubr.f32.gmra.mrb[0].mxu0 %v2715
    %v2783 = vpop.f32.mrb[0].mxu0
    %v2784 = vadd.f32 0.0, %v2783
    %v2785 = vpop.f32.mrb[0].mxu0
    %2786 = vdwg.mxu0
    %v2787 = vld [vmem:[%s1775] sm:$0xff]
    %v2788 = vld [vmem:[%s1775 + $0x8] sm:$0xff]
    %v2789 = vld [vmem:[%s1775 + $0x10] sm:$0xff]
    %v2790 = vld [vmem:[%s1775 + $0x18] sm:$0xff]
    %v2792 = vsel %vm1112, %v2784, 0
    %v2795 = vsel %vm1112, %v2787, 0
    %v2798 = vsel %vm1112, %v2788, 0
    %v2801 = vsel %vm1112, %v2789, 0
    %v2804 = vsel %vm1112, %v2790, 0
    %2806 = vmatprep.subr.mxu0 0.0
    %2807 = vmatpush1.xpose.msra.mxu0 %v2795
    %2808 = vmatprep.subr.mxu0 0.0
    %2809 = vmatpush1.xpose.msra.mxu0 %v2798
    %2810 = vmatprep.subr.mxu0 0.0
    %2811 = vmatpush1.xpose.msra.mxu0 %v2801
    %2812 = vmatprep.subr.mxu0 0.0
    %2813 = vmatpush1.xpose.msra.mxu0 %v2804
    %2814 = vmatprep.subr.mxu0 0.0
    %2815 = vmatpush1.xpose.msra.mxu0 0.0
    %2816 = vmatprep.subr.mxu0 0.0
    %2817 = vmatpush1.xpose.msra.mxu0 0.0
    %2818 = vmatprep.subr.mxu0 0.0
    %2819 = vmatpush1.xpose.msra.mxu0 0.0
    %2820 = vmatprep.subr.mxu0 0.0
    %2821 = vmatpush1.xpose.msra.mxu0 0.0
    %2822 = vmatprep.subr.mxu0 0.0
    %2823 = vmatpush1.xpose.msra.mxu0 0.0
    %2824 = vmatprep.subr.mxu0 0.0
    %2825 = vmatpush1.xpose.msra.mxu0 0.0
    %2826 = vmatprep.subr.mxu0 0.0
    %2827 = vmatpush1.xpose.msra.mxu0 0.0
    %2828 = vmatprep.subr.mxu0 0.0
    %2829 = vmatpush1.xpose.msra.mxu0 0.0
    %2830 = vmatprep.subr.mxu0 0.0
    %2831 = vmatpush1.xpose.msra.mxu0 0.0
    %2832 = vmatprep.subr.mxu0 0.0
    %2833 = vmatpush1.xpose.msra.mxu0 0.0
    %2834 = vmatprep.subr.mxu0 0.0
    %2835 = vmatpush1.xpose.msra.mxu0 0.0
    %2836 = vmatprep.subr.mxu0 0.0
    %2837 = vmatpush1.xpose.msra.mxu0 0.0
    %2838 = vmatprep.subr.mxu0 0.0
    %2839 = vmatpush1.xpose.msra.mxu0 0.0
    %2840 = vmatprep.subr.mxu0 0.0
    %2841 = vmatpush1.xpose.msra.mxu0 0.0
    %2842 = vmatprep.subr.mxu0 0.0
    %2843 = vmatpush1.xpose.msra.mxu0 0.0
    %2844 = vmatprep.subr.mxu0 0.0
    %2845 = vmatpush1.xpose.msra.mxu0 0.0
    %2846 = vmatprep.subr.mxu0 0.0
    %2847 = vmatpush1.xpose.msra.mxu0 0.0
    %2848 = vmatprep.subr.mxu0 0.0
    %2849 = vmatpush1.xpose.msra.mxu0 0.0
    %2850 = vmatprep.subr.mxu0 0.0
    %2851 = vmatpush1.xpose.msra.mxu0 0.0
    %2852 = vmatprep.subr.mxu0 0.0
    %2853 = vmatpush1.xpose.msra.mxu0 0.0
    %2854 = vmatprep.subr.mxu0 0.0
    %2855 = vmatpush1.xpose.msra.mxu0 0.0
    %2856 = vmatprep.subr.mxu0 0.0
    %2857 = vmatpush1.xpose.msra.mxu0 0.0
    %2858 = vmatprep.subr.mxu0 0.0
    %2859 = vmatpush1.xpose.msra.mxu0 0.0
    %2860 = vmatprep.subr.mxu0 0.0
    %2861 = vmatpush1.xpose.msra.mxu0 0.0
    %2862 = vmatprep.subr.mxu0 0.0
    %2863 = vmatpush1.xpose.msra.mxu0 0.0
    %2864 = vmatprep.subr.mxu0 0.0
    %2865 = vmatpush1.xpose.msra.mxu0 0.0
    %2866 = vmatprep.subr.mxu0 0.0
    %2867 = vmatpush1.xpose.msra.mxu0 0.0
    %2868 = vmatprep.subr.mxu0 0.0
    %2869 = vmatpush1.xpose.msra.mxu0 0.0
    %2870 = vmatprep.mubr.f32.mxu0 0.0
    %2871 = vmatmul.mubr.f32.gmra.mrb[0].mxu0 %v2792
    %v2872 = vpop.f32.mrb[0].mxu0
    %v2873 = vadd.f32 0.0, %v2872
    %v2874 = vpop.f32.mrb[0].mxu0
    %2875 = vdwg.mxu0
    %v2876 = vadd.f32 %v2623, %v2873
    %v2878 = vsel %vm1112, %v392, 0
    %v2881 = vsel %vm1112, %v750, 0
    %2883 = vmatprep.subr.mxu0 0.0
    %2884 = vmatpush1.xpose.msra.mxu0 %v2881
    %2885 = vmatprep.subr.mxu0 0.0
    %2886 = vmatpush1.xpose.msra.mxu0 0.0
    %2887 = vmatprep.subr.mxu0 0.0
    %2888 = vmatpush1.xpose.msra.mxu0 0.0
    %2889 = vmatprep.subr.mxu0 0.0
    %2890 = vmatpush1.xpose.msra.mxu0 0.0
    %2891 = vmatprep.subr.mxu0 0.0
    %2892 = vmatpush1.xpose.msra.mxu0 0.0
    %2893 = vmatprep.subr.mxu0 0.0
    %2894 = vmatpush1.xpose.msra.mxu0 0.0
    %2895 = vmatprep.subr.mxu0 0.0
    %2896 = vmatpush1.xpose.msra.mxu0 0.0
    %2897 = vmatprep.subr.mxu0 0.0
    %2898 = vmatpush1.xpose.msra.mxu0 0.0
    %2899 = vmatprep.subr.mxu0 0.0
    %2900 = vmatpush1.xpose.msra.mxu0 0.0
    %2901 = vmatprep.subr.mxu0 0.0
    %2902 = vmatpush1.xpose.msra.mxu0 0.0
    %2903 = vmatprep.subr.mxu0 0.0
    %2904 = vmatpush1.xpose.msra.mxu0 0.0
    %2905 = vmatprep.subr.mxu0 0.0
    %2906 = vmatpush1.xpose.msra.mxu0 0.0
    %2907 = vmatprep.subr.mxu0 0.0
    %2908 = vmatpush1.xpose.msra.mxu0 0.0
    %2909 = vmatprep.subr.mxu0 0.0
    %2910 = vmatpush1.xpose.msra.mxu0 0.0
    %2911 = vmatprep.subr.mxu0 0.0
    %2912 = vmatpush1.xpose.msra.mxu0 0.0
    %2913 = vmatprep.subr.mxu0 0.0
    %2914 = vmatpush1.xpose.msra.mxu0 0.0
    %2915 = vmatprep.subr.mxu0 0.0
    %2916 = vmatpush1.xpose.msra.mxu0 0.0
    %2917 = vmatprep.subr.mxu0 0.0
    %2918 = vmatpush1.xpose.msra.mxu0 0.0
    %2919 = vmatprep.subr.mxu0 0.0
    %2920 = vmatpush1.xpose.msra.mxu0 0.0
    %2921 = vmatprep.subr.mxu0 0.0
    %2922 = vmatpush1.xpose.msra.mxu0 0.0
    %2923 = vmatprep.subr.mxu0 0.0
    %2924 = vmatpush1.xpose.msra.mxu0 0.0
    %2925 = vmatprep.subr.mxu0 0.0
    %2926 = vmatpush1.xpose.msra.mxu0 0.0
    %2927 = vmatprep.subr.mxu0 0.0
    %2928 = vmatpush1.xpose.msra.mxu0 0.0
    %2929 = vmatprep.subr.mxu0 0.0
    %2930 = vmatpush1.xpose.msra.mxu0 0.0
    %2931 = vmatprep.subr.mxu0 0.0
    %2932 = vmatpush1.xpose.msra.mxu0 0.0
    %2933 = vmatprep.subr.mxu0 0.0
    %2934 = vmatpush1.xpose.msra.mxu0 0.0
    %2935 = vmatprep.subr.mxu0 0.0
    %2936 = vmatpush1.xpose.msra.mxu0 0.0
    %2937 = vmatprep.subr.mxu0 0.0
    %2938 = vmatpush1.xpose.msra.mxu0 0.0
    %2939 = vmatprep.subr.mxu0 0.0
    %2940 = vmatpush1.xpose.msra.mxu0 0.0
    %2941 = vmatprep.subr.mxu0 0.0
    %2942 = vmatpush1.xpose.msra.mxu0 0.0
    %2943 = vmatprep.subr.mxu0 0.0
    %2944 = vmatpush1.xpose.msra.mxu0 0.0
    %2945 = vmatprep.subr.mxu0 0.0
    %2946 = vmatpush1.xpose.msra.mxu0 0.0
    %2947 = vmatprep.mubr.f32.mxu0 0.0
    %2948 = vmatmul.mubr.f32.gmra.mrb[0].mxu0 %v2878
    %v2949 = vpop.f32.mrb[0].mxu0
    %v2950 = vadd.f32 0.0, %v2949
    %v2951 = vpop.f32.mrb[0].mxu0
    %2952 = vdwg.mxu0
    %v2953 = vsel %vm37, %v2950, 0.0
    %v2954 = vsel %vm1112, %v2953, -inf
    %2955 = vmax.xlane.f32.xlu0 %v2954
    %v2956 = vpop.xlane.xlu0 %2955
    %v2957 = vsub.f32 %v2953, %v2956
    %v2958 = vmul.f32 %v2957, 1.442695
    %v2959 = vpow.pop %v2958
    %v2960 = vsel %vm1112, %v2959, 0.0
    %2961 = vadd.xlane.f32.xlu0 %v2960
    %v2962 = vpop.xlane.xlu0 %2961
    %v2963 = vrcp.pop %v2962
    %v2964 = vmul.f32 %v2959, %v2963
    %v2966 = vsel %vm1112, %v2964, 0
    %2968 = vmatprep.subr.mxu0 0.0
    %2969 = vmatpush1.msra.mxu0 %v1108
    %2970 = vmatprep.subr.mxu0 0.0
    %2971 = vmatpush1.msra.mxu0 0.0
    %2972 = vmatprep.subr.mxu0 0.0
    %2973 = vmatpush1.msra.mxu0 0.0
    %2974 = vmatprep.subr.mxu0 0.0
    %2975 = vmatpush1.msra.mxu0 0.0
    %2976 = vmatprep.subr.mxu0 0.0
    %2977 = vmatpush1.msra.mxu0 0.0
    %2978 = vmatprep.subr.mxu0 0.0
    %2979 = vmatpush1.msra.mxu0 0.0
    %2980 = vmatprep.subr.mxu0 0.0
    %2981 = vmatpush1.msra.mxu0 0.0
    %2982 = vmatprep.subr.mxu0 0.0
    %2983 = vmatpush1.msra.mxu0 0.0
    %2984 = vmatprep.subr.mxu0 0.0
    %2985 = vmatpush1.msra.mxu0 0.0
    %2986 = vmatprep.subr.mxu0 0.0
    %2987 = vmatpush1.msra.mxu0 0.0
    %2988 = vmatprep.subr.mxu0 0.0
    %2989 = vmatpush1.msra.mxu0 0.0
    %2990 = vmatprep.subr.mxu0 0.0
    %2991 = vmatpush1.msra.mxu0 0.0
    %2992 = vmatprep.subr.mxu0 0.0
    %2993 = vmatpush1.msra.mxu0 0.0
    %2994 = vmatprep.subr.mxu0 0.0
    %2995 = vmatpush1.msra.mxu0 0.0
    %2996 = vmatprep.subr.mxu0 0.0
    %2997 = vmatpush1.msra.mxu0 0.0
    %2998 = vmatprep.subr.mxu0 0.0
    %2999 = vmatpush1.msra.mxu0 0.0
    %3000 = vmatprep.subr.mxu0 0.0
    %3001 = vmatpush1.msra.mxu0 0.0
    %3002 = vmatprep.subr.mxu0 0.0
    %3003 = vmatpush1.msra.mxu0 0.0
    %3004 = vmatprep.subr.mxu0 0.0
    %3005 = vmatpush1.msra.mxu0 0.0
    %3006 = vmatprep.subr.mxu0 0.0
    %3007 = vmatpush1.msra.mxu0 0.0
    %3008 = vmatprep.subr.mxu0 0.0
    %3009 = vmatpush1.msra.mxu0 0.0
    %3010 = vmatprep.subr.mxu0 0.0
    %3011 = vmatpush1.msra.mxu0 0.0
    %3012 = vmatprep.subr.mxu0 0.0
    %3013 = vmatpush1.msra.mxu0 0.0
    %3014 = vmatprep.subr.mxu0 0.0
    %3015 = vmatpush1.msra.mxu0 0.0
    %3016 = vmatprep.subr.mxu0 0.0
    %3017 = vmatpush1.msra.mxu0 0.0
    %3018 = vmatprep.subr.mxu0 0.0
    %3019 = vmatpush1.msra.mxu0 0.0
    %3020 = vmatprep.subr.mxu0 0.0
    %3021 = vmatpush1.msra.mxu0 0.0
    %3022 = vmatprep.subr.mxu0 0.0
    %3023 = vmatpush1.msra.mxu0 0.0
    %3024 = vmatprep.subr.mxu0 0.0
    %3025 = vmatpush1.msra.mxu0 0.0
    %3026 = vmatprep.subr.mxu0 0.0
    %3027 = vmatpush1.msra.mxu0 0.0
    %3028 = vmatprep.subr.mxu0 0.0
    %3029 = vmatpush1.msra.mxu0 0.0
    %3030 = vmatprep.subr.mxu0 0.0
    %3031 = vmatpush1.msra.mxu0 0.0
    %3032 = vmatprep.mubr.f32.mxu0 0.0
    %3033 = vmatmul.mubr.f32.gmra.mrb[0].mxu0 %v2966
    %v3034 = vpop.f32.mrb[0].mxu0
    %v3035 = vadd.f32 0.0, %v3034
    %v3036 = vpop.f32.mrb[0].mxu0
    %3037 = vdwg.mxu0
    %v3038 = vld [vmem:[%s2027] sm:$0xff]
    %v3039 = vld [vmem:[%s2027 + $0x8] sm:$0xff]
    %v3040 = vld [vmem:[%s2027 + $0x10] sm:$0xff]
    %v3041 = vld [vmem:[%s2027 + $0x18] sm:$0xff]
    %v3043 = vsel %vm1112, %v3035, 0
    %v3046 = vsel %vm1112, %v3038, 0
    %v3049 = vsel %vm1112, %v3039, 0
    %v3052 = vsel %vm1112, %v3040, 0
    %v3055 = vsel %vm1112, %v3041, 0
    %3057 = vmatprep.subr.mxu0 0.0
    %3058 = vmatpush1.xpose.msra.mxu0 %v3046
    %3059 = vmatprep.subr.mxu0 0.0
    %3060 = vmatpush1.xpose.msra.mxu0 %v3049
    %3061 = vmatprep.subr.mxu0 0.0
    %3062 = vmatpush1.xpose.msra.mxu0 %v3052
    %3063 = vmatprep.subr.mxu0 0.0
    %3064 = vmatpush1.xpose.msra.mxu0 %v3055
    %3065 = vmatprep.subr.mxu0 0.0
    %3066 = vmatpush1.xpose.msra.mxu0 0.0
    %3067 = vmatprep.subr.mxu0 0.0
    %3068 = vmatpush1.xpose.msra.mxu0 0.0
    %3069 = vmatprep.subr.mxu0 0.0
    %3070 = vmatpush1.xpose.msra.mxu0 0.0
    %3071 = vmatprep.subr.mxu0 0.0
    %3072 = vmatpush1.xpose.msra.mxu0 0.0
    %3073 = vmatprep.subr.mxu0 0.0
    %3074 = vmatpush1.xpose.msra.mxu0 0.0
    %3075 = vmatprep.subr.mxu0 0.0
    %3076 = vmatpush1.xpose.msra.mxu0 0.0
    %3077 = vmatprep.subr.mxu0 0.0
    %3078 = vmatpush1.xpose.msra.mxu0 0.0
    %3079 = vmatprep.subr.mxu0 0.0
    %3080 = vmatpush1.xpose.msra.mxu0 0.0
    %3081 = vmatprep.subr.mxu0 0.0
    %3082 = vmatpush1.xpose.msra.mxu0 0.0
    %3083 = vmatprep.subr.mxu0 0.0
    %3084 = vmatpush1.xpose.msra.mxu0 0.0
    %3085 = vmatprep.subr.mxu0 0.0
    %3086 = vmatpush1.xpose.msra.mxu0 0.0
    %3087 = vmatprep.subr.mxu0 0.0
    %3088 = vmatpush1.xpose.msra.mxu0 0.0
    %3089 = vmatprep.subr.mxu0 0.0
    %3090 = vmatpush1.xpose.msra.mxu0 0.0
    %3091 = vmatprep.subr.mxu0 0.0
    %3092 = vmatpush1.xpose.msra.mxu0 0.0
    %3093 = vmatprep.subr.mxu0 0.0
    %3094 = vmatpush1.xpose.msra.mxu0 0.0
    %3095 = vmatprep.subr.mxu0 0.0
    %3096 = vmatpush1.xpose.msra.mxu0 0.0
    %3097 = vmatprep.subr.mxu0 0.0
    %3098 = vmatpush1.xpose.msra.mxu0 0.0
    %3099 = vmatprep.subr.mxu0 0.0
    %3100 = vmatpush1.xpose.msra.mxu0 0.0
    %3101 = vmatprep.subr.mxu0 0.0
    %3102 = vmatpush1.xpose.msra.mxu0 0.0
    %3103 = vmatprep.subr.mxu0 0.0
    %3104 = vmatpush1.xpose.msra.mxu0 0.0
    %3105 = vmatprep.subr.mxu0 0.0
    %3106 = vmatpush1.xpose.msra.mxu0 0.0
    %3107 = vmatprep.subr.mxu0 0.0
    %3108 = vmatpush1.xpose.msra.mxu0 0.0
    %3109 = vmatprep.subr.mxu0 0.0
    %3110 = vmatpush1.xpose.msra.mxu0 0.0
    %3111 = vmatprep.subr.mxu0 0.0
    %3112 = vmatpush1.xpose.msra.mxu0 0.0
    %3113 = vmatprep.subr.mxu0 0.0
    %3114 = vmatpush1.xpose.msra.mxu0 0.0
    %3115 = vmatprep.subr.mxu0 0.0
    %3116 = vmatpush1.xpose.msra.mxu0 0.0
    %3117 = vmatprep.subr.mxu0 0.0
    %3118 = vmatpush1.xpose.msra.mxu0 0.0
    %3119 = vmatprep.subr.mxu0 0.0
    %3120 = vmatpush1.xpose.msra.mxu0 0.0
    %3121 = vmatprep.mubr.f32.mxu0 0.0
    %3122 = vmatmul.mubr.f32.gmra.mrb[0].mxu0 %v3043
    %v3123 = vpop.f32.mrb[0].mxu0
    %v3124 = vadd.f32 0.0, %v3123
    %v3125 = vpop.f32.mrb[0].mxu0
    %3126 = vdwg.mxu0
    %v3127 = vadd.f32 %v2876, %v3124
    %v3128 = vadd.f32 %v3127, %v2122
    %3129 = vst.msk [vmem:[#allocation2 + $0x8] sm:$0xff] %vm46, %v3128
    // Predicated region
    $region30: #{tpu_custom_call.1} parent=1 // pred_check
      _
    $region31: #{tpu_custom_call.1} parent=1 // pred_check_branch
      %3131 = sbr.rel (0) target = $region33
    $region32: #{tpu_custom_call.1} parent=1 // pred_region
      %s3133 = ssub.s32 256, 256
      %3134 = vsyncadd [#allocation3], %s3133
      %s3135 = sshll.u32 [#allocation2], 4
      %s3136 = int_to_ptr.vmem [resolvable:$true] %s3135
      %3141 = dma.vmem_to_hbm [thread:$0]  %s3136, 256, %s7, [#allocation3], 128, 128, 8
    $region33: #{tpu_custom_call.1} parent=1 // pred_fallthru
      _
    // Predicated region
    $region34: #{tpu_custom_call.1} parent=1 // pred_check
      _
    $region35: #{tpu_custom_call.1} parent=1 // pred_check_branch
      %3143 = sbr.rel (0) target = $region37
    $region36: #{tpu_custom_call.1} parent=1 // pred_region
      %3144 = dma.done [#allocation3], 256
    $region37: #{tpu_custom_call.1} parent=1 // pred_fallthru
      _
    %3145 = vsyncpa [#allocation3], 1

</llo_original>
